<compile_context>
chip_gen: v5e
topology: v5e:2x2
jax: 0.10.0
libtpu: 0.0.40
codegen_flags: <defaults>
</compile_context>

<pallas_src>
import functools

import jax
import jax.numpy as jnp
from jax.experimental import pallas as pl
from jax.experimental.pallas import tpu as pltpu

_LANE = 128


def _fused_mlp_kernel(x_ref,
                      w1_ref, b1_ref,
                      w2_ref, b2_ref,
                      w3_ref, b3_ref,
                      w4_ref, b4_ref,
                      o_ref):
    """One M-tile through the chain of 4 Linear layers, all operands in VMEM.

    Each layer computes h = cast_bf16(h) @ W  (W pre-transposed to (K, N)) on
    the MXU with fp32 accumulation, then adds the fp32 bias on the VPU.
    The fp32 -> bf16 cast of the incoming activation happens here (free VPU
    work hidden under DMA), not in the wrapper.
    """

    def layer(h, w_ref, b_ref):
        y = jnp.dot(h.astype(w_ref.dtype), w_ref[...],
                    preferred_element_type=jnp.float32)
        return y + b_ref[...]          # fp32 bias add (also fine on v5e)

    h = x_ref[...]                     # fp32 (tm, 1024)
    h = layer(h, w1_ref, b1_ref)
    h = layer(h, w2_ref, b2_ref)
    h = layer(h, w3_ref, b3_ref)
    h = layer(h, w4_ref, b4_ref)
    o_ref[...] = h.astype(o_ref.dtype)


def init_linear_params(key, in_features, out_features, dtype=jnp.float32):
    """PyTorch nn.Linear default init: U(-1/sqrt(in), 1/sqrt(in)) for W and b."""
    kw, kb = jax.random.split(key)
    bound = 1.0 / jnp.sqrt(jnp.asarray(in_features, dtype))
    w = jax.random.uniform(kw, (out_features, in_features), dtype, -bound, bound)
    b = jax.random.uniform(kb, (out_features,), dtype, -bound, bound)
    return w, b


def prepare_params(params, weight_dtype=jnp.bfloat16):
    """Convert PyTorch-convention (W[N,K], b[N]) pairs to the kernel layout.

    * W is transposed once to (K, N) -> no in-kernel XLU transpose.
    * W is cast to bf16 (halves HBM traffic, native MXU input); bias stays fp32.
    * b is reshaped to (1, N) for a lane-aligned broadcast add.
    * The last layer's N (=10) is zero-padded up to a multiple of 128 so the
      output store is lane-dense (padded columns are exactly 0, sliced later).
    """
    prepped = []
    last = len(params) - 1
    for idx, (w, b) in enumerate(params):
        n, _ = w.shape
        wt = w.T                              # (K, N)
        b2 = b.reshape(1, n)
        if idx == last and n % _LANE != 0:
            n_pad = pl.cdiv(n, _LANE) * _LANE
            wt = jnp.pad(wt, ((0, 0), (0, n_pad - n)))
            b2 = jnp.pad(b2, ((0, 0), (0, n_pad - n)))
        prepped.append((wt.astype(weight_dtype), b2.astype(jnp.float32)))
    return prepped


@functools.partial(jax.jit, static_argnames=("out_features", "tm"))
def simple_model_forward(x, prepped_params, *, out_features, tm=128):
    """Pallas equivalent of SimpleModel.forward: 4 chained Linear layers, fused.

    Grid over M-tiles ("parallel" -> both v7x TensorCores at work); weights use
    a constant index_map so they stay VMEM-resident across grid steps.
    """
    assert len(prepped_params) == 4, "kernel is specialized to 4 layers"
    m, k_in = x.shape
    n_out_padded = prepped_params[-1][0].shape[1]

    # Pad the batch to a multiple of the M tile (no-op at batch=256, tm=128).
    m_pad = pl.cdiv(m, tm) * tm
    if m_pad != m:
        x = jnp.pad(x, ((0, m_pad - m), (0, 0)))
    grid = (m_pad // tm,)

    flat_wb = []
    in_specs = [pl.BlockSpec((tm, k_in), lambda i: (i, 0))]     # x: tiled on M
    for w, b in prepped_params:
        flat_wb += [w, b]
        # Weights / biases: full blocks, constant index -> resident, no re-DMA.
        in_specs.append(pl.BlockSpec(w.shape, lambda i: (0, 0)))
        in_specs.append(pl.BlockSpec(b.shape, lambda i: (0, 0)))
    out_specs = pl.BlockSpec((tm, n_out_padded), lambda i: (i, 0))

    # Advisory cost estimate so XLA schedules neighbors around the custom call.
    flops = 2 * m_pad * sum(int(w.shape[0]) * int(w.shape[1])
                            for w, _ in prepped_params)
    bytes_accessed = (
        m_pad * k_in * x.dtype.itemsize
        + sum(int(w.size) * w.dtype.itemsize + int(b.size) * b.dtype.itemsize
              for w, b in prepped_params)
        + m_pad * n_out_padded * 4)

    out = pl.pallas_call(
        _fused_mlp_kernel,
        out_shape=jax.ShapeDtypeStruct((m_pad, n_out_padded), jnp.float32),
        grid=grid,
        in_specs=in_specs,
        out_specs=out_specs,
        compiler_params=pltpu.CompilerParams(
            dimension_semantics=("parallel",),
            vmem_limit_bytes=32 * 1024 * 1024),
        cost_estimate=pl.CostEstimate(
            flops=flops, transcendentals=0, bytes_accessed=bytes_accessed),
    )(x, *flat_wb)

    # TODO(synk): if this runs in a steady-state inference loop, keep the
    # ~1.4 MB of weights VMEM-resident across calls (P10 cross-call prefetch)
    # instead of re-streaming them from HBM each call.
    return out[:m, :out_features]


if __name__ == "__main__":
    # Scaled-down dims mirroring the 100000 -> 10000 -> 1000 -> 100 -> 10 chain.
    dims = [1024, 512, 256, 128, 10]
    batch = 256          # >= 128 and a multiple of 16 (bf16 sublane packing)

    key = jax.random.PRNGKey(0)
    key, kx = jax.random.split(key)
    x = jax.random.normal(kx, (batch, dims[0]), dtype=jnp.float32)

    params = []
    for d_in, d_out in zip(dims[:-1], dims[1:]):
        key, kp = jax.random.split(key)
        params.append(init_linear_params(kp, d_in, d_out))

    prepped = prepare_params(params)

    out = simple_model_forward(x, prepped, out_features=dims[-1])
    out = jax.block_until_ready(out)
    assert out.shape == (batch, dims[-1]), out.shape

    # Reference 1: identical numerics (bf16 weights/activations, fp32 accumulate).
    ref = x
    for wt, b in prepped:
        ref = jnp.dot(ref.astype(jnp.bfloat16), wt,
                      preferred_element_type=jnp.float32) + b
    ref = ref[:, :dims[-1]]
    assert jnp.allclose(out, ref, atol=1e-3, rtol=1e-3), "mismatch vs bf16 reference"

    # Reference 2: original fp32 torch semantics (looser tol for bf16 storage).
    ref32 = x
    for w, b in params:
        ref32 = ref32 @ w.T + b
    assert jnp.allclose(out, ref32, atol=5e-2, rtol=5e-2), "mismatch vs fp32 reference"

    print("KERNEL_OK")
</pallas_src>

<mosaic_0001>
module attributes {stable_mosaic.version = 11 : i64} {
  func.func @_fused_mlp_kernel(%arg0: i32, %arg1: memref<128x1024xf32, #tpu.memory_space<vmem>>, %arg2: memref<1024x512xbf16, #tpu.memory_space<vmem>>, %arg3: memref<1x512xf32, #tpu.memory_space<vmem>>, %arg4: memref<512x256xbf16, #tpu.memory_space<vmem>>, %arg5: memref<1x256xf32, #tpu.memory_space<vmem>>, %arg6: memref<256x128xbf16, #tpu.memory_space<vmem>>, %arg7: memref<1x128xf32, #tpu.memory_space<vmem>>, %arg8: memref<128x128xbf16, #tpu.memory_space<vmem>>, %arg9: memref<1x128xf32, #tpu.memory_space<vmem>>, %arg10: memref<128x128xf32, #tpu.memory_space<vmem>>) attributes {dimension_semantics = [#tpu.dimension_semantics<parallel>], iteration_bounds = array<i64: 2>, scalar_prefetch = 0 : i64, scratch_operands = 0 : i64, tpu.core_type = #tpu.core_type<tc>, window_params = [{transform_indices = @transform_0, window_bounds = array<i64: 128, 1024>}, {pipeline_mode = #tpu.pipeline_mode<synchronous>, transform_indices = @transform_1, window_bounds = array<i64: 1024, 512>}, {pipeline_mode = #tpu.pipeline_mode<synchronous>, transform_indices = @transform_2, window_bounds = array<i64: 1, 512>}, {pipeline_mode = #tpu.pipeline_mode<synchronous>, transform_indices = @transform_3, window_bounds = array<i64: 512, 256>}, {pipeline_mode = #tpu.pipeline_mode<synchronous>, transform_indices = @transform_4, window_bounds = array<i64: 1, 256>}, {pipeline_mode = #tpu.pipeline_mode<synchronous>, transform_indices = @transform_5, window_bounds = array<i64: 256, 128>}, {pipeline_mode = #tpu.pipeline_mode<synchronous>, transform_indices = @transform_6, window_bounds = array<i64: 1, 128>}, {pipeline_mode = #tpu.pipeline_mode<synchronous>, transform_indices = @transform_7, window_bounds = array<i64: 128, 128>}, {pipeline_mode = #tpu.pipeline_mode<synchronous>, transform_indices = @transform_8, window_bounds = array<i64: 1, 128>}, {transform_indices = @transform_9, window_bounds = array<i64: 128, 128>}]} {
    %c0 = arith.constant 0 : index
    %c0_0 = arith.constant 0 : index
    %0 = vector.load %arg1[%c0, %c0_0] : memref<128x1024xf32, #tpu.memory_space<vmem>>, vector<128x1024xf32>
    %1 = arith.truncf %0 : vector<128x1024xf32> to vector<128x1024xbf16>
    %c0_1 = arith.constant 0 : index
    %c0_2 = arith.constant 0 : index
    %2 = vector.load %arg2[%c0_1, %c0_2] : memref<1024x512xbf16, #tpu.memory_space<vmem>>, vector<1024x512xbf16>
    %cst = arith.constant dense<0.000000e+00> : vector<128x512xf32>
    %3 = tpu.matmul %1, %2, %cst {dimension_numbers = #tpu.dot_dimension_numbers<[1], [0], [0], [1], [0, 0, 1, 1], [], []>} : vector<128x1024xbf16>, vector<1024x512xbf16>, vector<128x512xf32> -> vector<128x512xf32>
    %c0_3 = arith.constant 0 : index
    %c0_4 = arith.constant 0 : index
    %4 = vector.load %arg3[%c0_3, %c0_4] : memref<1x512xf32, #tpu.memory_space<vmem>>, vector<1x512xf32>
    %5 = vector.broadcast %4 : vector<1x512xf32> to vector<128x512xf32>
    %6 = arith.addf %3, %5 : vector<128x512xf32>
    %7 = arith.truncf %6 : vector<128x512xf32> to vector<128x512xbf16>
    %c0_5 = arith.constant 0 : index
    %c0_6 = arith.constant 0 : index
    %8 = vector.load %arg4[%c0_5, %c0_6] : memref<512x256xbf16, #tpu.memory_space<vmem>>, vector<512x256xbf16>
    %cst_7 = arith.constant dense<0.000000e+00> : vector<128x256xf32>
    %9 = tpu.matmul %7, %8, %cst_7 {dimension_numbers = #tpu.dot_dimension_numbers<[1], [0], [0], [1], [0, 0, 1, 1], [], []>} : vector<128x512xbf16>, vector<512x256xbf16>, vector<128x256xf32> -> vector<128x256xf32>
    %c0_8 = arith.constant 0 : index
    %c0_9 = arith.constant 0 : index
    %10 = vector.load %arg5[%c0_8, %c0_9] : memref<1x256xf32, #tpu.memory_space<vmem>>, vector<1x256xf32>
    %11 = vector.broadcast %10 : vector<1x256xf32> to vector<128x256xf32>
    %12 = arith.addf %9, %11 : vector<128x256xf32>
    %13 = arith.truncf %12 : vector<128x256xf32> to vector<128x256xbf16>
    %c0_10 = arith.constant 0 : index
    %c0_11 = arith.constant 0 : index
    %14 = vector.load %arg6[%c0_10, %c0_11] : memref<256x128xbf16, #tpu.memory_space<vmem>>, vector<256x128xbf16>
    %cst_12 = arith.constant dense<0.000000e+00> : vector<128x128xf32>
    %15 = tpu.matmul %13, %14, %cst_12 {dimension_numbers = #tpu.dot_dimension_numbers<[1], [0], [0], [1], [0, 0, 1, 1], [], []>} : vector<128x256xbf16>, vector<256x128xbf16>, vector<128x128xf32> -> vector<128x128xf32>
    %c0_13 = arith.constant 0 : index
    %c0_14 = arith.constant 0 : index
    %16 = vector.load %arg7[%c0_13, %c0_14] : memref<1x128xf32, #tpu.memory_space<vmem>>, vector<1x128xf32>
    %17 = vector.broadcast %16 : vector<1x128xf32> to vector<128x128xf32>
    %18 = arith.addf %15, %17 : vector<128x128xf32>
    %19 = arith.truncf %18 : vector<128x128xf32> to vector<128x128xbf16>
    %c0_15 = arith.constant 0 : index
    %c0_16 = arith.constant 0 : index
    %20 = vector.load %arg8[%c0_15, %c0_16] : memref<128x128xbf16, #tpu.memory_space<vmem>>, vector<128x128xbf16>
    %cst_17 = arith.constant dense<0.000000e+00> : vector<128x128xf32>
    %21 = tpu.matmul %19, %20, %cst_17 {dimension_numbers = #tpu.dot_dimension_numbers<[1], [0], [0], [1], [0, 0, 1, 1], [], []>} : vector<128x128xbf16>, vector<128x128xbf16>, vector<128x128xf32> -> vector<128x128xf32>
    %c0_18 = arith.constant 0 : index
    %c0_19 = arith.constant 0 : index
    %22 = vector.load %arg9[%c0_18, %c0_19] : memref<1x128xf32, #tpu.memory_space<vmem>>, vector<1x128xf32>
    %23 = vector.broadcast %22 : vector<1x128xf32> to vector<128x128xf32>
    %24 = arith.addf %21, %23 : vector<128x128xf32>
    %c0_20 = arith.constant 0 : index
    %c0_21 = arith.constant 0 : index
    %25 = vector.load %arg10[%c0_20, %c0_21] : memref<128x128xf32, #tpu.memory_space<vmem>>, vector<128x128xf32>
    tpu.vector_store %arg10[%c0_20, %c0_21], %24 {strides = array<i32>} : memref<128x128xf32, #tpu.memory_space<vmem>>, vector<128x128xf32>,
    return
  }
  func.func @transform_0(%arg0: i32) -> (i32, i32) {
    %c0_i32 = arith.constant 0 : i32
    %c0_i32_0 = arith.constant 0 : i32
    return %arg0, %c0_i32 : i32, i32
  }
  func.func @transform_1(%arg0: i32) -> (i32, i32) {
    %c0_i32 = arith.constant 0 : i32
    %c0_i32_0 = arith.constant 0 : i32
    %c0_i32_1 = arith.constant 0 : i32
    return %c0_i32, %c0_i32_0 : i32, i32
  }
  func.func @transform_2(%arg0: i32) -> (i32, i32) {
    %c0_i32 = arith.constant 0 : i32
    %c0_i32_0 = arith.constant 0 : i32
    %c0_i32_1 = arith.constant 0 : i32
    return %c0_i32, %c0_i32_0 : i32, i32
  }
  func.func @transform_3(%arg0: i32) -> (i32, i32) {
    %c0_i32 = arith.constant 0 : i32
    %c0_i32_0 = arith.constant 0 : i32
    %c0_i32_1 = arith.constant 0 : i32
    return %c0_i32, %c0_i32_0 : i32, i32
  }
  func.func @transform_4(%arg0: i32) -> (i32, i32) {
    %c0_i32 = arith.constant 0 : i32
    %c0_i32_0 = arith.constant 0 : i32
    %c0_i32_1 = arith.constant 0 : i32
    return %c0_i32, %c0_i32_0 : i32, i32
  }
  func.func @transform_5(%arg0: i32) -> (i32, i32) {
    %c0_i32 = arith.constant 0 : i32
    %c0_i32_0 = arith.constant 0 : i32
    %c0_i32_1 = arith.constant 0 : i32
    return %c0_i32, %c0_i32_0 : i32, i32
  }
  func.func @transform_6(%arg0: i32) -> (i32, i32) {
    %c0_i32 = arith.constant 0 : i32
    %c0_i32_0 = arith.constant 0 : i32
    %c0_i32_1 = arith.constant 0 : i32
    return %c0_i32, %c0_i32_0 : i32, i32
  }
  func.func @transform_7(%arg0: i32) -> (i32, i32) {
    %c0_i32 = arith.constant 0 : i32
    %c0_i32_0 = arith.constant 0 : i32
    %c0_i32_1 = arith.constant 0 : i32
    return %c0_i32, %c0_i32_0 : i32, i32
  }
  func.func @transform_8(%arg0: i32) -> (i32, i32) {
    %c0_i32 = arith.constant 0 : i32
    %c0_i32_0 = arith.constant 0 : i32
    %c0_i32_1 = arith.constant 0 : i32
    return %c0_i32, %c0_i32_0 : i32, i32
  }
  func.func @transform_9(%arg0: i32) -> (i32, i32) {
    %c0_i32 = arith.constant 0 : i32
    %c0_i32_0 = arith.constant 0 : i32
    return %arg0, %c0_i32 : i32, i32
  }
}

</mosaic_0001>

<llo_original>
// kernel: simple_model_forward.1
$region0: #{simple_model_forward.1}
  #allocation0 [shape = 'u32[]', space=smem, size = 0x4, offset = 0x4, fixed_abs, tag = 'smem constant byte address 0x4 - core index']
  #allocation1 [shape = 'u32[72,128]{1,0:T(1,128)}', space=vmem, size = 0x9000, scoped, tag = 'internal scratch']
  %s0 = inlined_call_operand.hbm [shape: f32[256,1024], index: 0, kind: input, shape index: {}]
  %s1 = inlined_call_operand.hbm [shape: bf16[1024,512], index: 1, kind: input, shape index: {}]
  %s2 = inlined_call_operand.hbm [shape: f32[1,512], index: 2, kind: input, shape index: {}]
  %s3 = inlined_call_operand.hbm [shape: bf16[512,256], index: 3, kind: input, shape index: {}]
  %s4 = inlined_call_operand.vmem [shape: f32[1,256], index: 4, kind: input, shape index: {}]
  %s5 = inlined_call_operand.hbm [shape: bf16[256,128], index: 5, kind: input, shape index: {}]
  %s6 = inlined_call_operand.vmem [shape: f32[1,128], index: 6, kind: input, shape index: {}]
  %s7 = inlined_call_operand.hbm [shape: bf16[128,128], index: 7, kind: input, shape index: {}]
  %s8 = inlined_call_operand.vmem [shape: f32[1,128], index: 8, kind: input, shape index: {}]
  %s9 = inlined_call_operand.vmem [shape: f32[256,128], index: 9, kind: output, shape index: {}]
  %s10 = sld [smem:[#allocation0]]
  $region93: #{simple_model_forward.1} parent=0
    _
  %s12 = ssub.s32 1, %s10
  %s13 = scalar_select 0, %s12, %s10
  $region1: #{simple_model_forward.1} parent=0
    #allocation2 [shape = 'u8[1048576]{0}', space=vmem, size = 0x100000, scoped, tag = 'input window, operand 0']
    #allocation3 [shape = 's32[2]{0}', space=sflag, size = 0x8, scoped, tag = 'scoped memory for simple_model_forward.1']
    #allocation4 [shape = 'u8[1048576]{0}', space=vmem, size = 0x100000, scoped, tag = 'input window, operand 1, single buffered']
    #allocation5 [shape = 's32[1]{0}', space=sflag, size = 0x4, scoped, tag = 'scoped memory for simple_model_forward.1']
    #allocation6 [shape = 'u8[2048]{0}', space=vmem, size = 0x800, scoped, tag = 'input window, operand 2, single buffered']
    #allocation7 [shape = 'u8[262144]{0}', space=vmem, size = 0x40000, scoped, tag = 'input window, operand 3, single buffered']
    #allocation8 [shape = 's32[1]{0}', space=sflag, size = 0x4, scoped, tag = 'scoped memory for simple_model_forward.1']
    #allocation9 [shape = 'u8[65536]{0}', space=vmem, size = 0x10000, scoped, tag = 'input window, operand 5, single buffered']
    #allocation10 [shape = 'u8[32768]{0}', space=vmem, size = 0x8000, scoped, tag = 'input window, operand 7, single buffered']
    #allocation11 [shape = 's32[1]{0}', space=sflag, size = 0x4, scoped, tag = 'scoped memory for simple_model_forward.1']
    %14 = vsyncpa [#allocation3], 0
    %s15 = scalar_lea.sflag [#allocation3], 1
    %16 = vsyncpa %s15, 0
    %17 = vsyncpa [#allocation5], 0
    %18 = vsyncpa [#allocation8], 0
    %19 = vsyncpa [#allocation11], 0
    loop: start=0, step=1, limit=4
    $region2: #{simple_model_forward.1} parent=1 // loop_pre_header
      _
    $region3: #{simple_model_forward.1} parent=1 // loop_header
      %s21 = sphi 0, %s25
      %p22 = scmp.ge.s32.totalorder %s21, 4
      %s31 = sphi 0, %s33
      %s34 = sphi 0, %s31
      %s35 = sphi 0, %s34
      %s51 = sphi 0, %s35
      %s55 = sphi 0, %s55
      %s57 = sphi 0, %s55
      %s58 = sphi 0, %s57
      %s72 = sphi 0, %s58
      %s76 = sphi 0, %s76
      %s78 = sphi 0, %s76
      %s79 = sphi 0, %s78
      %s93 = sphi 0, %s79
      %s97 = sphi 0, %s97
      %s99 = sphi 0, %s97
      %s100 = sphi 0, %s99
      %s114 = sphi 0, %s100
      %s118 = sphi 0, %s118
      %s120 = sphi 0, %s118
      %s121 = sphi 0, %s120
      %s135 = sphi 0, %s121
      %s139 = sphi 0, %s139
      %s141 = sphi 0, %s139
      %s142 = sphi 0, %s141
      %s156 = sphi 0, %s142
      %s160 = sphi 0, %s160
      %s162 = sphi 0, %s160
      %s163 = sphi 0, %s162
      %s177 = sphi 0, %s163
      %s181 = sphi 0, %s181
      %s183 = sphi 0, %s181
      %s184 = sphi 0, %s183
      %s198 = sphi 0, %s184
      %s202 = sphi 0, %s202
      %s204 = sphi 0, %s202
      %s205 = sphi 0, %s204
      %s219 = sphi 0, %s205
      %s225 = sphi 0, %s227
      %s228 = sphi 0, %s225
      %s229 = sphi 0, %s228
      %s245 = sphi 0, %s229
    $region4: #{simple_model_forward.1} parent=1 // loop_header_branch
      %24 = sbr.rel (%p22) target = $region8
    $region5: #{simple_model_forward.1} parent=1 // loop_body
      %s26 = ssub.s32 %s21, 1
      %s27 = ssub.s32 %s21, 2
      %s28 = sadd.s32 %s21, 1
      %s29 = ssub.s32 %s21, %s28
      %p30 = scmp.eq.s32.totalorder %s29, 0
      %s32 = sadd.s32 %s31, 1
      %s33 = scalar_select %p30, %s31, %s32
      %p36 = pneg %p30
      %p37 = scmp.eq.s32.totalorder %s21, 1
      %p38 = por %p36, %p37
      %p39 = scmp.ne.s32.totalorder %s31, %s34
      %p40 = scmp.eq.s32.totalorder %s21, 0
      %p41 = por %p39, %p40
      %p42 = scmp.ne.s32.totalorder %s31, %s34
      %p43 = scmp.eq.s32.totalorder %s26, 1
      %p44 = por %p42, %p43
      %p45 = scmp.ne.s32.totalorder %s34, %s35
      %p46 = scmp.eq.s32.totalorder %s26, 0
      %p47 = por %p45, %p46
      %p48 = scmp.ne.s32.totalorder %s34, %s35
      %p49 = scmp.eq.s32.totalorder %s27, 1
      %p50 = por %p48, %p49
      %p52 = scmp.ne.s32.totalorder %s35, %s51
      %p53 = scmp.eq.s32.totalorder %s27, 0
      %p54 = por %p52, %p53
      %s56 = sadd.s32 %s55, 1
      %p59 = scmp.eq.s32.totalorder %s21, 1
      %p60 = scmp.ne.s32.totalorder %s55, %s57
      %p61 = scmp.eq.s32.totalorder %s21, 0
      %p62 = por %p60, %p61
      %p63 = scmp.ne.s32.totalorder %s55, %s57
      %p64 = scmp.eq.s32.totalorder %s26, 1
      %p65 = por %p63, %p64
      %p66 = scmp.ne.s32.totalorder %s57, %s58
      %p67 = scmp.eq.s32.totalorder %s26, 0
      %p68 = por %p66, %p67
      %p69 = scmp.ne.s32.totalorder %s57, %s58
      %p70 = scmp.eq.s32.totalorder %s27, 1
      %p71 = por %p69, %p70
      %p73 = scmp.ne.s32.totalorder %s58, %s72
      %p74 = scmp.eq.s32.totalorder %s27, 0
      %p75 = por %p73, %p74
      %s77 = sadd.s32 %s76, 1
      %p80 = scmp.eq.s32.totalorder %s21, 1
      %p81 = scmp.ne.s32.totalorder %s76, %s78
      %p82 = scmp.eq.s32.totalorder %s21, 0
      %p83 = por %p81, %p82
      %p84 = scmp.ne.s32.totalorder %s76, %s78
      %p85 = scmp.eq.s32.totalorder %s26, 1
      %p86 = por %p84, %p85
      %p87 = scmp.ne.s32.totalorder %s78, %s79
      %p88 = scmp.eq.s32.totalorder %s26, 0
      %p89 = por %p87, %p88
      %p90 = scmp.ne.s32.totalorder %s78, %s79
      %p91 = scmp.eq.s32.totalorder %s27, 1
      %p92 = por %p90, %p91
      %p94 = scmp.ne.s32.totalorder %s79, %s93
      %p95 = scmp.eq.s32.totalorder %s27, 0
      %p96 = por %p94, %p95
      %s98 = sadd.s32 %s97, 1
      %p101 = scmp.eq.s32.totalorder %s21, 1
      %p102 = scmp.ne.s32.totalorder %s97, %s99
      %p103 = scmp.eq.s32.totalorder %s21, 0
      %p104 = por %p102, %p103
      %p105 = scmp.ne.s32.totalorder %s97, %s99
      %p106 = scmp.eq.s32.totalorder %s26, 1
      %p107 = por %p105, %p106
      %p108 = scmp.ne.s32.totalorder %s99, %s100
      %p109 = scmp.eq.s32.totalorder %s26, 0
      %p110 = por %p108, %p109
      %p111 = scmp.ne.s32.totalorder %s99, %s100
      %p112 = scmp.eq.s32.totalorder %s27, 1
      %p113 = por %p111, %p112
      %p115 = scmp.ne.s32.totalorder %s100, %s114
      %p116 = scmp.eq.s32.totalorder %s27, 0
      %p117 = por %p115, %p116
      %s119 = sadd.s32 %s118, 1
      %p122 = scmp.eq.s32.totalorder %s21, 1
      %p123 = scmp.ne.s32.totalorder %s118, %s120
      %p124 = scmp.eq.s32.totalorder %s21, 0
      %p125 = por %p123, %p124
      %p126 = scmp.ne.s32.totalorder %s118, %s120
      %p127 = scmp.eq.s32.totalorder %s26, 1
      %p128 = por %p126, %p127
      %p129 = scmp.ne.s32.totalorder %s120, %s121
      %p130 = scmp.eq.s32.totalorder %s26, 0
      %p131 = por %p129, %p130
      %p132 = scmp.ne.s32.totalorder %s120, %s121
      %p133 = scmp.eq.s32.totalorder %s27, 1
      %p134 = por %p132, %p133
      %p136 = scmp.ne.s32.totalorder %s121, %s135
      %p137 = scmp.eq.s32.totalorder %s27, 0
      %p138 = por %p136, %p137
      %s140 = sadd.s32 %s139, 1
      %p143 = scmp.eq.s32.totalorder %s21, 1
      %p144 = scmp.ne.s32.totalorder %s139, %s141
      %p145 = scmp.eq.s32.totalorder %s21, 0
      %p146 = por %p144, %p145
      %p147 = scmp.ne.s32.totalorder %s139, %s141
      %p148 = scmp.eq.s32.totalorder %s26, 1
      %p149 = por %p147, %p148
      %p150 = scmp.ne.s32.totalorder %s141, %s142
      %p151 = scmp.eq.s32.totalorder %s26, 0
      %p152 = por %p150, %p151
      %p153 = scmp.ne.s32.totalorder %s141, %s142
      %p154 = scmp.eq.s32.totalorder %s27, 1
      %p155 = por %p153, %p154
      %p157 = scmp.ne.s32.totalorder %s142, %s156
      %p158 = scmp.eq.s32.totalorder %s27, 0
      %p159 = por %p157, %p158
      %s161 = sadd.s32 %s160, 1
      %p164 = scmp.eq.s32.totalorder %s21, 1
      %p165 = scmp.ne.s32.totalorder %s160, %s162
      %p166 = scmp.eq.s32.totalorder %s21, 0
      %p167 = por %p165, %p166
      %p168 = scmp.ne.s32.totalorder %s160, %s162
      %p169 = scmp.eq.s32.totalorder %s26, 1
      %p170 = por %p168, %p169
      %p171 = scmp.ne.s32.totalorder %s162, %s163
      %p172 = scmp.eq.s32.totalorder %s26, 0
      %p173 = por %p171, %p172
      %p174 = scmp.ne.s32.totalorder %s162, %s163
      %p175 = scmp.eq.s32.totalorder %s27, 1
      %p176 = por %p174, %p175
      %p178 = scmp.ne.s32.totalorder %s163, %s177
      %p179 = scmp.eq.s32.totalorder %s27, 0
      %p180 = por %p178, %p179
      %s182 = sadd.s32 %s181, 1
      %p185 = scmp.eq.s32.totalorder %s21, 1
      %p186 = scmp.ne.s32.totalorder %s181, %s183
      %p187 = scmp.eq.s32.totalorder %s21, 0
      %p188 = por %p186, %p187
      %p189 = scmp.ne.s32.totalorder %s181, %s183
      %p190 = scmp.eq.s32.totalorder %s26, 1
      %p191 = por %p189, %p190
      %p192 = scmp.ne.s32.totalorder %s183, %s184
      %p193 = scmp.eq.s32.totalorder %s26, 0
      %p194 = por %p192, %p193
      %p195 = scmp.ne.s32.totalorder %s183, %s184
      %p196 = scmp.eq.s32.totalorder %s27, 1
      %p197 = por %p195, %p196
      %p199 = scmp.ne.s32.totalorder %s184, %s198
      %p200 = scmp.eq.s32.totalorder %s27, 0
      %p201 = por %p199, %p200
      %s203 = sadd.s32 %s202, 1
      %p206 = scmp.eq.s32.totalorder %s21, 1
      %p207 = scmp.ne.s32.totalorder %s202, %s204
      %p208 = scmp.eq.s32.totalorder %s21, 0
      %p209 = por %p207, %p208
      %p210 = scmp.ne.s32.totalorder %s202, %s204
      %p211 = scmp.eq.s32.totalorder %s26, 1
      %p212 = por %p210, %p211
      %p213 = scmp.ne.s32.totalorder %s204, %s205
      %p214 = scmp.eq.s32.totalorder %s26, 0
      %p215 = por %p213, %p214
      %p216 = scmp.ne.s32.totalorder %s204, %s205
      %p217 = scmp.eq.s32.totalorder %s27, 1
      %p218 = por %p216, %p217
      %p220 = scmp.ne.s32.totalorder %s205, %s219
      %p221 = scmp.eq.s32.totalorder %s27, 0
      %p222 = por %p220, %p221
      %s223 = ssub.s32 %s21, %s28
      %p224 = scmp.eq.s32.totalorder %s223, 0
      %s226 = sadd.s32 %s225, 1
      %s227 = scalar_select %p224, %s225, %s226
      %p230 = pneg %p224
      %p231 = scmp.eq.s32.totalorder %s21, 1
      %p232 = por %p230, %p231
      %p233 = scmp.ne.s32.totalorder %s225, %s228
      %p234 = scmp.eq.s32.totalorder %s21, 0
      %p235 = por %p233, %p234
      %p236 = scmp.ne.s32.totalorder %s225, %s228
      %p237 = scmp.eq.s32.totalorder %s26, 1
      %p238 = por %p236, %p237
      %p239 = scmp.ne.s32.totalorder %s228, %s229
      %p240 = scmp.eq.s32.totalorder %s26, 0
      %p241 = por %p239, %p240
      %p242 = scmp.ne.s32.totalorder %s228, %s229
      %p243 = scmp.eq.s32.totalorder %s27, 1
      %p244 = por %p242, %p243
      %p246 = scmp.ne.s32.totalorder %s229, %s245
      %p247 = scmp.eq.s32.totalorder %s27, 0
      %p248 = por %p246, %p247
      %p249 = scmp.le.s32.totalorder 1, %s21
      %p250 = scmp.lt.s32.totalorder %s21, 3
      %p251 = pnand %p249, %p250
      %p252 = pneg %p251
      // Predicated region
      $region9: #{simple_model_forward.1} parent=5 // pred_check
        _
      $region10: #{simple_model_forward.1} parent=5 // pred_check_branch
        %254 = sbr.rel (%p251) target = $region12
      $region11: #{simple_model_forward.1} parent=5 // pred_region
        %s255 = ssub.s32 %s21, 1
        // Predicated region
        $region13: #{simple_model_forward.1} parent=11 // pred_check
          %p256 = pneg %p68
        $region14: #{simple_model_forward.1} parent=11 // pred_check_branch
          %258 = sbr.rel (%p256) target = $region16
        $region15: #{simple_model_forward.1} parent=11 // pred_region
          %260 = vsyncadd [#allocation5], 0
          %s261 = sshll.u32 %s1, 4
          %s262 = int_to_ptr.hbm [resolvable:$true] %s261
          %s263 = sshll.u32 [#allocation4], 4
          %s264 = int_to_ptr.vmem [resolvable:$true] %s263
          %269 = dma.hbm_to_vmem [thread:$0]  %s262, 32768, %s264, [#allocation5], 256, 256, 16
        $region16: #{simple_model_forward.1} parent=11 // pred_fallthru
          _
        // Predicated region
        $region17: #{simple_model_forward.1} parent=11 // pred_check
          %p270 = pneg %p89
        $region18: #{simple_model_forward.1} parent=11 // pred_check_branch
          %272 = sbr.rel (%p270) target = $region20
        $region19: #{simple_model_forward.1} parent=11 // pred_region
          %274 = vsyncadd [#allocation5], 0
          %s276 = sshll.u32 %s2, 4
          %s277 = int_to_ptr.hbm [resolvable:$true] %s276
          %s278 = sshll.u32 [#allocation6], 4
          %s279 = int_to_ptr.vmem [resolvable:$true] %s278
          %281 = dma.hbm_to_vmem [thread:$0]  %s277, 64, %s279, [#allocation5]
        $region20: #{simple_model_forward.1} parent=11 // pred_fallthru
          _
        // Predicated region
        $region21: #{simple_model_forward.1} parent=11 // pred_check
          %p282 = pneg %p110
        $region22: #{simple_model_forward.1} parent=11 // pred_check_branch
          %284 = sbr.rel (%p282) target = $region24
        $region23: #{simple_model_forward.1} parent=11 // pred_region
          %286 = vsyncadd [#allocation8], 0
          %s287 = sshll.u32 %s3, 4
          %s288 = int_to_ptr.hbm [resolvable:$true] %s287
          %s289 = sshll.u32 [#allocation7], 4
          %s290 = int_to_ptr.vmem [resolvable:$true] %s289
          %295 = dma.hbm_to_vmem [thread:$0]  %s288, 8192, %s290, [#allocation8], 128, 128, 8
        $region24: #{simple_model_forward.1} parent=11 // pred_fallthru
          _
        // Predicated region
        $region25: #{simple_model_forward.1} parent=11 // pred_check
          %p296 = pneg %p131
        $region26: #{simple_model_forward.1} parent=11 // pred_check_branch
          %298 = sbr.rel (%p296) target = $region28
        $region27: #{simple_model_forward.1} parent=11 // pred_region
          _
        $region28: #{simple_model_forward.1} parent=11 // pred_fallthru
          _
        // Predicated region
        $region29: #{simple_model_forward.1} parent=11 // pred_check
          %p299 = pneg %p152
        $region30: #{simple_model_forward.1} parent=11 // pred_check_branch
          %301 = sbr.rel (%p299) target = $region32
        $region31: #{simple_model_forward.1} parent=11 // pred_region
          %303 = vsyncadd [#allocation8], 0
          %s304 = sshll.u32 %s5, 4
          %s305 = int_to_ptr.hbm [resolvable:$true] %s304
          %s306 = sshll.u32 [#allocation9], 4
          %s307 = int_to_ptr.vmem [resolvable:$true] %s306
          %312 = dma.hbm_to_vmem [thread:$0]  %s305, 2048, %s307, [#allocation8], 64, 64, 4
        $region32: #{simple_model_forward.1} parent=11 // pred_fallthru
          _
        // Predicated region
        $region33: #{simple_model_forward.1} parent=11 // pred_check
          %p313 = pneg %p173
        $region34: #{simple_model_forward.1} parent=11 // pred_check_branch
          %315 = sbr.rel (%p313) target = $region36
        $region35: #{simple_model_forward.1} parent=11 // pred_region
          _
        $region36: #{simple_model_forward.1} parent=11 // pred_fallthru
          _
        // Predicated region
        $region37: #{simple_model_forward.1} parent=11 // pred_check
          %p316 = pneg %p194
        $region38: #{simple_model_forward.1} parent=11 // pred_check_branch
          %318 = sbr.rel (%p316) target = $region40
        $region39: #{simple_model_forward.1} parent=11 // pred_region
          %320 = vsyncadd [#allocation11], 0
          %s321 = sshll.u32 %s7, 4
          %s322 = int_to_ptr.hbm [resolvable:$true] %s321
          %s323 = sshll.u32 [#allocation10], 4
          %s324 = int_to_ptr.vmem [resolvable:$true] %s323
          %329 = dma.hbm_to_vmem [thread:$0]  %s322, 1024, %s324, [#allocation11], 64, 64, 4
        $region40: #{simple_model_forward.1} parent=11 // pred_fallthru
          _
        // Predicated region
        $region41: #{simple_model_forward.1} parent=11 // pred_check
          %p330 = pneg %p215
        $region42: #{simple_model_forward.1} parent=11 // pred_check_branch
          %332 = sbr.rel (%p330) target = $region44
        $region43: #{simple_model_forward.1} parent=11 // pred_region
          _
        $region44: #{simple_model_forward.1} parent=11 // pred_fallthru
          _
      $region12: #{simple_model_forward.1} parent=5 // pred_fallthru
        _
      %p333 = scmp.lt.s32.totalorder %s21, 2
      // Predicated region
      $region45: #{simple_model_forward.1} parent=5 // pred_check
        %p334 = pneg %p333
      $region46: #{simple_model_forward.1} parent=5 // pred_check_branch
        %336 = sbr.rel (%p334) target = $region48
      $region47: #{simple_model_forward.1} parent=5 // pred_region
        // Predicated region
        $region49: #{simple_model_forward.1} parent=47 // pred_check
          %p337 = pneg %p41
        $region50: #{simple_model_forward.1} parent=47 // pred_check_branch
          %339 = sbr.rel (%p337) target = $region52
        $region51: #{simple_model_forward.1} parent=47 // pred_region
          %s340 = sand.u32 %s31, 1
          %s341 = scalar_lea.sflag [#allocation3], %s340
          %s342 = sand.u32 %s31, 1
          %s343 = smul.addr %s342, 1024
          %s344 = scalar_lea.vmem [#allocation2], %s343
          %s345 = smul.u32 16, %s21
          %347 = vsyncadd %s341, 0
          %s348 = smul.addr %s345, 8
          %s349 = smul.addr %s348, 8
          %s350 = scalar_lea.hbm %s0, %s349
          %s351 = sshll.u32 %s350, 4
          %s352 = int_to_ptr.hbm [resolvable:$true] %s351
          %s353 = sshll.u32 %s344, 4
          %s354 = int_to_ptr.vmem [resolvable:$true] %s353
          %359 = dma.hbm_to_vmem [thread:$0]  %s352, 16384, %s354, %s341, 1024, 1024, 64
        $region52: #{simple_model_forward.1} parent=47 // pred_fallthru
          _
      $region48: #{simple_model_forward.1} parent=5 // pred_fallthru
        _
      %p360 = scmp.le.s32.totalorder 1, %s21
      %p361 = scmp.lt.s32.totalorder %s21, 3
      %p362 = pnand %p360, %p361
      %p363 = pneg %p362
      // Predicated region
      $region53: #{simple_model_forward.1} parent=5 // pred_check
        _
      $region54: #{simple_model_forward.1} parent=5 // pred_check_branch
        %365 = sbr.rel (%p362) target = $region56
      $region55: #{simple_model_forward.1} parent=5 // pred_region
        %s366 = ssub.s32 %s21, 1
        %s367 = sand.u32 %s34, 1
        %s368 = scalar_lea.sflag [#allocation3], %s367
        %s369 = sand.u32 %s34, 1
        %s370 = smul.addr %s369, 1024
        %s371 = scalar_lea.vmem [#allocation2], %s370
        // Predicated region
        $region57: #{simple_model_forward.1} parent=55 // pred_check
          %p372 = pneg %p47
        $region58: #{simple_model_forward.1} parent=55 // pred_check_branch
          %374 = sbr.rel (%p372) target = $region60
        $region59: #{simple_model_forward.1} parent=55 // pred_region
          %376 = dma.done %s368, 16384
        $region60: #{simple_model_forward.1} parent=55 // pred_fallthru
          _
        // Predicated region
        $region61: #{simple_model_forward.1} parent=55 // pred_check
          %p377 = pneg %p68
        $region62: #{simple_model_forward.1} parent=55 // pred_check_branch
          %379 = sbr.rel (%p377) target = $region64
        $region63: #{simple_model_forward.1} parent=55 // pred_region
          %381 = dma.done [#allocation5], 32768
        $region64: #{simple_model_forward.1} parent=55 // pred_fallthru
          _
        // Predicated region
        $region65: #{simple_model_forward.1} parent=55 // pred_check
          %p382 = pneg %p89
        $region66: #{simple_model_forward.1} parent=55 // pred_check_branch
          %384 = sbr.rel (%p382) target = $region68
        $region67: #{simple_model_forward.1} parent=55 // pred_region
          %386 = dma.done [#allocation5], 64
        $region68: #{simple_model_forward.1} parent=55 // pred_fallthru
          _
        // Predicated region
        $region69: #{simple_model_forward.1} parent=55 // pred_check
          %p387 = pneg %p110
        $region70: #{simple_model_forward.1} parent=55 // pred_check_branch
          %389 = sbr.rel (%p387) target = $region72
        $region71: #{simple_model_forward.1} parent=55 // pred_region
          %391 = dma.done [#allocation8], 8192
        $region72: #{simple_model_forward.1} parent=55 // pred_fallthru
          _
        // Predicated region
        $region73: #{simple_model_forward.1} parent=55 // pred_check
          %p392 = pneg %p152
        $region74: #{simple_model_forward.1} parent=55 // pred_check_branch
          %394 = sbr.rel (%p392) target = $region76
        $region75: #{simple_model_forward.1} parent=55 // pred_region
          %396 = dma.done [#allocation8], 2048
        $region76: #{simple_model_forward.1} parent=55 // pred_fallthru
          _
        // Predicated region
        $region77: #{simple_model_forward.1} parent=55 // pred_check
          %p397 = pneg %p194
        $region78: #{simple_model_forward.1} parent=55 // pred_check_branch
          %399 = sbr.rel (%p397) target = $region80
        $region79: #{simple_model_forward.1} parent=55 // pred_region
          %401 = dma.done [#allocation11], 1024
        $region80: #{simple_model_forward.1} parent=55 // pred_fallthru
          _
        %s402 = sand.u32 %s34, 1
        %s403 = scalar_lea.sflag [#allocation3], %s402
        %s404 = sand.u32 %s34, 1
        %s405 = smul.addr %s404, 1024
        %s406 = scalar_lea.vmem [#allocation2], %s405
        %p407 = pneg %p47
        %p408 = pneg %p44
        %p409 = pneg %p68
        %p410 = pneg %p65
        %p411 = pneg %p89
        %p412 = pneg %p86
        %p413 = pneg %p110
        %p414 = pneg %p107
        %p415 = pneg %p131
        %p416 = pneg %p128
        %p417 = pneg %p152
        %p418 = pneg %p149
        %p419 = pneg %p173
        %p420 = pneg %p170
        %p421 = pneg %p194
        %p422 = pneg %p191
        %p423 = pneg %p215
        %p424 = pneg %p212
        %p425 = pneg %p241
        %p426 = pneg %p238
        %s427 = smul.u32 16, %s26
        %p428 = scmp.lt.s32.totalorder %s427, 31
        %s429 = scalar_select %p428, %s427, 31
        %s430 = smul.addr %s429, 8
        %s431 = scalar_lea.vmem %s9, %s430
        %s432 = smul.u32 16, %s26
        %s433 = smul.u32 16, %s26
        %p434 = scmp.lt.s32.totalorder %s433, 31
        %s435 = scalar_select %p434, %s433, 31
        %s436 = smul.addr %s435, 8
        %s437 = scalar_lea.vmem %s9, %s436
        %s438 = smul.u32 16, %s26
        %v439 = vld [vmem:[%s371] sm:$0xff]
        %v440 = vld [vmem:[%s371 + $0x8] sm:$0xff]
        %v441 = vld [vmem:[%s371 + $0x10] sm:$0xff]
        %v442 = vld [vmem:[%s371 + $0x18] sm:$0xff]
        %v443 = vld [vmem:[%s371 + $0x20] sm:$0xff]
        %v444 = vld [vmem:[%s371 + $0x28] sm:$0xff]
        %v445 = vld [vmem:[%s371 + $0x30] sm:$0xff]
        %v446 = vld [vmem:[%s371 + $0x38] sm:$0xff]
        %v447 = vld [vmem:[%s371 + $0x40] sm:$0xff]
        %v448 = vld [vmem:[%s371 + $0x48] sm:$0xff]
        %v449 = vld [vmem:[%s371 + $0x50] sm:$0xff]
        %v450 = vld [vmem:[%s371 + $0x58] sm:$0xff]
        %v451 = vld [vmem:[%s371 + $0x60] sm:$0xff]
        %v452 = vld [vmem:[%s371 + $0x68] sm:$0xff]
        %v453 = vld [vmem:[%s371 + $0x70] sm:$0xff]
        %v454 = vld [vmem:[%s371 + $0x78] sm:$0xff]
        %v455 = vld [vmem:[%s371 + $0x80] sm:$0xff]
        %v456 = vld [vmem:[%s371 + $0x88] sm:$0xff]
        %v457 = vld [vmem:[%s371 + $0x90] sm:$0xff]
        %v458 = vld [vmem:[%s371 + $0x98] sm:$0xff]
        %v459 = vld [vmem:[%s371 + $0xa0] sm:$0xff]
        %v460 = vld [vmem:[%s371 + $0xa8] sm:$0xff]
        %v461 = vld [vmem:[%s371 + $0xb0] sm:$0xff]
        %v462 = vld [vmem:[%s371 + $0xb8] sm:$0xff]
        %v463 = vld [vmem:[%s371 + $0xc0] sm:$0xff]
        %v464 = vld [vmem:[%s371 + $0xc8] sm:$0xff]
        %v465 = vld [vmem:[%s371 + $0xd0] sm:$0xff]
        %v466 = vld [vmem:[%s371 + $0xd8] sm:$0xff]
        %v467 = vld [vmem:[%s371 + $0xe0] sm:$0xff]
        %v468 = vld [vmem:[%s371 + $0xe8] sm:$0xff]
        %v469 = vld [vmem:[%s371 + $0xf0] sm:$0xff]
        %v470 = vld [vmem:[%s371 + $0xf8] sm:$0xff]
        %v471 = vld [vmem:[%s371 + $0x100] sm:$0xff]
        %v472 = vld [vmem:[%s371 + $0x108] sm:$0xff]
        %v473 = vld [vmem:[%s371 + $0x110] sm:$0xff]
        %v474 = vld [vmem:[%s371 + $0x118] sm:$0xff]
        %v475 = vld [vmem:[%s371 + $0x120] sm:$0xff]
        %v476 = vld [vmem:[%s371 + $0x128] sm:$0xff]
        %v477 = vld [vmem:[%s371 + $0x130] sm:$0xff]
        %v478 = vld [vmem:[%s371 + $0x138] sm:$0xff]
        %v479 = vld [vmem:[%s371 + $0x140] sm:$0xff]
        %v480 = vld [vmem:[%s371 + $0x148] sm:$0xff]
        %v481 = vld [vmem:[%s371 + $0x150] sm:$0xff]
        %v482 = vld [vmem:[%s371 + $0x158] sm:$0xff]
        %v483 = vld [vmem:[%s371 + $0x160] sm:$0xff]
        %v484 = vld [vmem:[%s371 + $0x168] sm:$0xff]
        %v485 = vld [vmem:[%s371 + $0x170] sm:$0xff]
        %v486 = vld [vmem:[%s371 + $0x178] sm:$0xff]
        %v487 = vld [vmem:[%s371 + $0x180] sm:$0xff]
        %v488 = vld [vmem:[%s371 + $0x188] sm:$0xff]
        %v489 = vld [vmem:[%s371 + $0x190] sm:$0xff]
        %v490 = vld [vmem:[%s371 + $0x198] sm:$0xff]
        %v491 = vld [vmem:[%s371 + $0x1a0] sm:$0xff]
        %v492 = vld [vmem:[%s371 + $0x1a8] sm:$0xff]
        %v493 = vld [vmem:[%s371 + $0x1b0] sm:$0xff]
        %v494 = vld [vmem:[%s371 + $0x1b8] sm:$0xff]
        %v495 = vld [vmem:[%s371 + $0x1c0] sm:$0xff]
        %v496 = vld [vmem:[%s371 + $0x1c8] sm:$0xff]
        %v497 = vld [vmem:[%s371 + $0x1d0] sm:$0xff]
        %v498 = vld [vmem:[%s371 + $0x1d8] sm:$0xff]
        %v499 = vld [vmem:[%s371 + $0x1e0] sm:$0xff]
        %v500 = vld [vmem:[%s371 + $0x1e8] sm:$0xff]
        %v501 = vld [vmem:[%s371 + $0x1f0] sm:$0xff]
        %v502 = vld [vmem:[%s371 + $0x1f8] sm:$0xff]
        %v503 = vld [vmem:[%s371 + $0x200] sm:$0xff]
        %v504 = vld [vmem:[%s371 + $0x208] sm:$0xff]
        %v505 = vld [vmem:[%s371 + $0x210] sm:$0xff]
        %v506 = vld [vmem:[%s371 + $0x218] sm:$0xff]
        %v507 = vld [vmem:[%s371 + $0x220] sm:$0xff]
        %v508 = vld [vmem:[%s371 + $0x228] sm:$0xff]
        %v509 = vld [vmem:[%s371 + $0x230] sm:$0xff]
        %v510 = vld [vmem:[%s371 + $0x238] sm:$0xff]
        %v511 = vld [vmem:[%s371 + $0x240] sm:$0xff]
        %v512 = vld [vmem:[%s371 + $0x248] sm:$0xff]
        %v513 = vld [vmem:[%s371 + $0x250] sm:$0xff]
        %v514 = vld [vmem:[%s371 + $0x258] sm:$0xff]
        %v515 = vld [vmem:[%s371 + $0x260] sm:$0xff]
        %v516 = vld [vmem:[%s371 + $0x268] sm:$0xff]
        %v517 = vld [vmem:[%s371 + $0x270] sm:$0xff]
        %v518 = vld [vmem:[%s371 + $0x278] sm:$0xff]
        %v519 = vld [vmem:[%s371 + $0x280] sm:$0xff]
        %v520 = vld [vmem:[%s371 + $0x288] sm:$0xff]
        %v521 = vld [vmem:[%s371 + $0x290] sm:$0xff]
        %v522 = vld [vmem:[%s371 + $0x298] sm:$0xff]
        %v523 = vld [vmem:[%s371 + $0x2a0] sm:$0xff]
        %v524 = vld [vmem:[%s371 + $0x2a8] sm:$0xff]
        %v525 = vld [vmem:[%s371 + $0x2b0] sm:$0xff]
        %v526 = vld [vmem:[%s371 + $0x2b8] sm:$0xff]
        %v527 = vld [vmem:[%s371 + $0x2c0] sm:$0xff]
        %v528 = vld [vmem:[%s371 + $0x2c8] sm:$0xff]
        %v529 = vld [vmem:[%s371 + $0x2d0] sm:$0xff]
        %v530 = vld [vmem:[%s371 + $0x2d8] sm:$0xff]
        %v531 = vld [vmem:[%s371 + $0x2e0] sm:$0xff]
        %v532 = vld [vmem:[%s371 + $0x2e8] sm:$0xff]
        %v533 = vld [vmem:[%s371 + $0x2f0] sm:$0xff]
        %v534 = vld [vmem:[%s371 + $0x2f8] sm:$0xff]
        %v535 = vld [vmem:[%s371 + $0x300] sm:$0xff]
        %v536 = vld [vmem:[%s371 + $0x308] sm:$0xff]
        %v537 = vld [vmem:[%s371 + $0x310] sm:$0xff]
        %v538 = vld [vmem:[%s371 + $0x318] sm:$0xff]
        %v539 = vld [vmem:[%s371 + $0x320] sm:$0xff]
        %v540 = vld [vmem:[%s371 + $0x328] sm:$0xff]
        %v541 = vld [vmem:[%s371 + $0x330] sm:$0xff]
        %v542 = vld [vmem:[%s371 + $0x338] sm:$0xff]
        %v543 = vld [vmem:[%s371 + $0x340] sm:$0xff]
        %v544 = vld [vmem:[%s371 + $0x348] sm:$0xff]
        %v545 = vld [vmem:[%s371 + $0x350] sm:$0xff]
        %v546 = vld [vmem:[%s371 + $0x358] sm:$0xff]
        %v547 = vld [vmem:[%s371 + $0x360] sm:$0xff]
        %v548 = vld [vmem:[%s371 + $0x368] sm:$0xff]
        %v549 = vld [vmem:[%s371 + $0x370] sm:$0xff]
        %v550 = vld [vmem:[%s371 + $0x378] sm:$0xff]
        %v551 = vld [vmem:[%s371 + $0x380] sm:$0xff]
        %v552 = vld [vmem:[%s371 + $0x388] sm:$0xff]
        %v553 = vld [vmem:[%s371 + $0x390] sm:$0xff]
        %v554 = vld [vmem:[%s371 + $0x398] sm:$0xff]
        %v555 = vld [vmem:[%s371 + $0x3a0] sm:$0xff]
        %v556 = vld [vmem:[%s371 + $0x3a8] sm:$0xff]
        %v557 = vld [vmem:[%s371 + $0x3b0] sm:$0xff]
        %v558 = vld [vmem:[%s371 + $0x3b8] sm:$0xff]
        %v559 = vld [vmem:[%s371 + $0x3c0] sm:$0xff]
        %v560 = vld [vmem:[%s371 + $0x3c8] sm:$0xff]
        %v561 = vld [vmem:[%s371 + $0x3d0] sm:$0xff]
        %v562 = vld [vmem:[%s371 + $0x3d8] sm:$0xff]
        %v563 = vld [vmem:[%s371 + $0x3e0] sm:$0xff]
        %v564 = vld [vmem:[%s371 + $0x3e8] sm:$0xff]
        %v565 = vld [vmem:[%s371 + $0x3f0] sm:$0xff]
        %v566 = vld [vmem:[%s371 + $0x3f8] sm:$0xff]
        %v567 = vpack.c.bf16 %v447, %v439
        %v568 = vpack.c.bf16 %v448, %v440
        %v569 = vpack.c.bf16 %v449, %v441
        %v570 = vpack.c.bf16 %v450, %v442
        %v571 = vpack.c.bf16 %v451, %v443
        %v572 = vpack.c.bf16 %v452, %v444
        %v573 = vpack.c.bf16 %v453, %v445
        %v574 = vpack.c.bf16 %v454, %v446
        %v575 = vpack.c.bf16 %v463, %v455
        %v576 = vpack.c.bf16 %v464, %v456
        %v577 = vpack.c.bf16 %v465, %v457
        %v578 = vpack.c.bf16 %v466, %v458
        %v579 = vpack.c.bf16 %v467, %v459
        %v580 = vpack.c.bf16 %v468, %v460
        %v581 = vpack.c.bf16 %v469, %v461
        %v582 = vpack.c.bf16 %v470, %v462
        %v583 = vpack.c.bf16 %v479, %v471
        %v584 = vpack.c.bf16 %v480, %v472
        %v585 = vpack.c.bf16 %v481, %v473
        %v586 = vpack.c.bf16 %v482, %v474
        %v587 = vpack.c.bf16 %v483, %v475
        %v588 = vpack.c.bf16 %v484, %v476
        %v589 = vpack.c.bf16 %v485, %v477
        %v590 = vpack.c.bf16 %v486, %v478
        %v591 = vpack.c.bf16 %v495, %v487
        %v592 = vpack.c.bf16 %v496, %v488
        %v593 = vpack.c.bf16 %v497, %v489
        %v594 = vpack.c.bf16 %v498, %v490
        %v595 = vpack.c.bf16 %v499, %v491
        %v596 = vpack.c.bf16 %v500, %v492
        %v597 = vpack.c.bf16 %v501, %v493
        %v598 = vpack.c.bf16 %v502, %v494
        %v599 = vpack.c.bf16 %v511, %v503
        %v600 = vpack.c.bf16 %v512, %v504
        %v601 = vpack.c.bf16 %v513, %v505
        %v602 = vpack.c.bf16 %v514, %v506
        %v603 = vpack.c.bf16 %v515, %v507
        %v604 = vpack.c.bf16 %v516, %v508
        %v605 = vpack.c.bf16 %v517, %v509
        %v606 = vpack.c.bf16 %v518, %v510
        %v607 = vpack.c.bf16 %v527, %v519
        %v608 = vpack.c.bf16 %v528, %v520
        %v609 = vpack.c.bf16 %v529, %v521
        %v610 = vpack.c.bf16 %v530, %v522
        %v611 = vpack.c.bf16 %v531, %v523
        %v612 = vpack.c.bf16 %v532, %v524
        %v613 = vpack.c.bf16 %v533, %v525
        %v614 = vpack.c.bf16 %v534, %v526
        %v615 = vpack.c.bf16 %v543, %v535
        %v616 = vpack.c.bf16 %v544, %v536
        %v617 = vpack.c.bf16 %v545, %v537
        %v618 = vpack.c.bf16 %v546, %v538
        %v619 = vpack.c.bf16 %v547, %v539
        %v620 = vpack.c.bf16 %v548, %v540
        %v621 = vpack.c.bf16 %v549, %v541
        %v622 = vpack.c.bf16 %v550, %v542
        %v623 = vpack.c.bf16 %v559, %v551
        %v624 = vpack.c.bf16 %v560, %v552
        %v625 = vpack.c.bf16 %v561, %v553
        %v626 = vpack.c.bf16 %v562, %v554
        %v627 = vpack.c.bf16 %v563, %v555
        %v628 = vpack.c.bf16 %v564, %v556
        %v629 = vpack.c.bf16 %v565, %v557
        %v630 = vpack.c.bf16 %v566, %v558
        %v631 = vld [vmem:[#allocation4] sm:$0xff]
        %v632 = vld [vmem:[#allocation4 + $0x8] sm:$0xff]
        %v633 = vld [vmem:[#allocation4 + $0x10] sm:$0xff]
        %v634 = vld [vmem:[#allocation4 + $0x18] sm:$0xff]
        %v635 = vld [vmem:[#allocation4 + $0x20] sm:$0xff]
        %v636 = vld [vmem:[#allocation4 + $0x28] sm:$0xff]
        %v637 = vld [vmem:[#allocation4 + $0x30] sm:$0xff]
        %v638 = vld [vmem:[#allocation4 + $0x38] sm:$0xff]
        %v639 = vld [vmem:[#allocation4 + $0x40] sm:$0xff]
        %v640 = vld [vmem:[#allocation4 + $0x48] sm:$0xff]
        %v641 = vld [vmem:[#allocation4 + $0x50] sm:$0xff]
        %v642 = vld [vmem:[#allocation4 + $0x58] sm:$0xff]
        %v643 = vld [vmem:[#allocation4 + $0x60] sm:$0xff]
        %v644 = vld [vmem:[#allocation4 + $0x68] sm:$0xff]
        %v645 = vld [vmem:[#allocation4 + $0x70] sm:$0xff]
        %v646 = vld [vmem:[#allocation4 + $0x78] sm:$0xff]
        %v647 = vld [vmem:[#allocation4 + $0x80] sm:$0xff]
        %v648 = vld [vmem:[#allocation4 + $0x88] sm:$0xff]
        %v649 = vld [vmem:[#allocation4 + $0x90] sm:$0xff]
        %v650 = vld [vmem:[#allocation4 + $0x98] sm:$0xff]
        %v651 = vld [vmem:[#allocation4 + $0xa0] sm:$0xff]
        %v652 = vld [vmem:[#allocation4 + $0xa8] sm:$0xff]
        %v653 = vld [vmem:[#allocation4 + $0xb0] sm:$0xff]
        %v654 = vld [vmem:[#allocation4 + $0xb8] sm:$0xff]
        %v655 = vld [vmem:[#allocation4 + $0xc0] sm:$0xff]
        %v656 = vld [vmem:[#allocation4 + $0xc8] sm:$0xff]
        %v657 = vld [vmem:[#allocation4 + $0xd0] sm:$0xff]
        %v658 = vld [vmem:[#allocation4 + $0xd8] sm:$0xff]
        %v659 = vld [vmem:[#allocation4 + $0xe0] sm:$0xff]
        %v660 = vld [vmem:[#allocation4 + $0xe8] sm:$0xff]
        %v661 = vld [vmem:[#allocation4 + $0xf0] sm:$0xff]
        %v662 = vld [vmem:[#allocation4 + $0xf8] sm:$0xff]
        %v663 = vld [vmem:[#allocation4 + $0x100] sm:$0xff]
        %v664 = vld [vmem:[#allocation4 + $0x108] sm:$0xff]
        %v665 = vld [vmem:[#allocation4 + $0x110] sm:$0xff]
        %v666 = vld [vmem:[#allocation4 + $0x118] sm:$0xff]
        %v667 = vld [vmem:[#allocation4 + $0x120] sm:$0xff]
        %v668 = vld [vmem:[#allocation4 + $0x128] sm:$0xff]
        %v669 = vld [vmem:[#allocation4 + $0x130] sm:$0xff]
        %v670 = vld [vmem:[#allocation4 + $0x138] sm:$0xff]
        %v671 = vld [vmem:[#allocation4 + $0x140] sm:$0xff]
        %v672 = vld [vmem:[#allocation4 + $0x148] sm:$0xff]
        %v673 = vld [vmem:[#allocation4 + $0x150] sm:$0xff]
        %v674 = vld [vmem:[#allocation4 + $0x158] sm:$0xff]
        %v675 = vld [vmem:[#allocation4 + $0x160] sm:$0xff]
        %v676 = vld [vmem:[#allocation4 + $0x168] sm:$0xff]
        %v677 = vld [vmem:[#allocation4 + $0x170] sm:$0xff]
        %v678 = vld [vmem:[#allocation4 + $0x178] sm:$0xff]
        %v679 = vld [vmem:[#allocation4 + $0x180] sm:$0xff]
        %v680 = vld [vmem:[#allocation4 + $0x188] sm:$0xff]
        %v681 = vld [vmem:[#allocation4 + $0x190] sm:$0xff]
        %v682 = vld [vmem:[#allocation4 + $0x198] sm:$0xff]
        %v683 = vld [vmem:[#allocation4 + $0x1a0] sm:$0xff]
        %v684 = vld [vmem:[#allocation4 + $0x1a8] sm:$0xff]
        %v685 = vld [vmem:[#allocation4 + $0x1b0] sm:$0xff]
        %v686 = vld [vmem:[#allocation4 + $0x1b8] sm:$0xff]
        %v687 = vld [vmem:[#allocation4 + $0x1c0] sm:$0xff]
        %v688 = vld [vmem:[#allocation4 + $0x1c8] sm:$0xff]
        %v689 = vld [vmem:[#allocation4 + $0x1d0] sm:$0xff]
        %v690 = vld [vmem:[#allocation4 + $0x1d8] sm:$0xff]
        %v691 = vld [vmem:[#allocation4 + $0x1e0] sm:$0xff]
        %v692 = vld [vmem:[#allocation4 + $0x1e8] sm:$0xff]
        %v693 = vld [vmem:[#allocation4 + $0x1f0] sm:$0xff]
        %v694 = vld [vmem:[#allocation4 + $0x1f8] sm:$0xff]
        %v695 = vld [vmem:[#allocation4 + $0x200] sm:$0xff]
        %v696 = vld [vmem:[#allocation4 + $0x208] sm:$0xff]
        %v697 = vld [vmem:[#allocation4 + $0x210] sm:$0xff]
        %v698 = vld [vmem:[#allocation4 + $0x218] sm:$0xff]
        %v699 = vld [vmem:[#allocation4 + $0x220] sm:$0xff]
        %v700 = vld [vmem:[#allocation4 + $0x228] sm:$0xff]
        %v701 = vld [vmem:[#allocation4 + $0x230] sm:$0xff]
        %v702 = vld [vmem:[#allocation4 + $0x238] sm:$0xff]
        %v703 = vld [vmem:[#allocation4 + $0x240] sm:$0xff]
        %v704 = vld [vmem:[#allocation4 + $0x248] sm:$0xff]
        %v705 = vld [vmem:[#allocation4 + $0x250] sm:$0xff]
        %v706 = vld [vmem:[#allocation4 + $0x258] sm:$0xff]
        %v707 = vld [vmem:[#allocation4 + $0x260] sm:$0xff]
        %v708 = vld [vmem:[#allocation4 + $0x268] sm:$0xff]
        %v709 = vld [vmem:[#allocation4 + $0x270] sm:$0xff]
        %v710 = vld [vmem:[#allocation4 + $0x278] sm:$0xff]
        %v711 = vld [vmem:[#allocation4 + $0x280] sm:$0xff]
        %v712 = vld [vmem:[#allocation4 + $0x288] sm:$0xff]
        %v713 = vld [vmem:[#allocation4 + $0x290] sm:$0xff]
        %v714 = vld [vmem:[#allocation4 + $0x298] sm:$0xff]
        %v715 = vld [vmem:[#allocation4 + $0x2a0] sm:$0xff]
        %v716 = vld [vmem:[#allocation4 + $0x2a8] sm:$0xff]
        %v717 = vld [vmem:[#allocation4 + $0x2b0] sm:$0xff]
        %v718 = vld [vmem:[#allocation4 + $0x2b8] sm:$0xff]
        %v719 = vld [vmem:[#allocation4 + $0x2c0] sm:$0xff]
        %v720 = vld [vmem:[#allocation4 + $0x2c8] sm:$0xff]
        %v721 = vld [vmem:[#allocation4 + $0x2d0] sm:$0xff]
        %v722 = vld [vmem:[#allocation4 + $0x2d8] sm:$0xff]
        %v723 = vld [vmem:[#allocation4 + $0x2e0] sm:$0xff]
        %v724 = vld [vmem:[#allocation4 + $0x2e8] sm:$0xff]
        %v725 = vld [vmem:[#allocation4 + $0x2f0] sm:$0xff]
        %v726 = vld [vmem:[#allocation4 + $0x2f8] sm:$0xff]
        %v727 = vld [vmem:[#allocation4 + $0x300] sm:$0xff]
        %v728 = vld [vmem:[#allocation4 + $0x308] sm:$0xff]
        %v729 = vld [vmem:[#allocation4 + $0x310] sm:$0xff]
        %v730 = vld [vmem:[#allocation4 + $0x318] sm:$0xff]
        %v731 = vld [vmem:[#allocation4 + $0x320] sm:$0xff]
        %v732 = vld [vmem:[#allocation4 + $0x328] sm:$0xff]
        %v733 = vld [vmem:[#allocation4 + $0x330] sm:$0xff]
        %v734 = vld [vmem:[#allocation4 + $0x338] sm:$0xff]
        %v735 = vld [vmem:[#allocation4 + $0x340] sm:$0xff]
        %v736 = vld [vmem:[#allocation4 + $0x348] sm:$0xff]
        %v737 = vld [vmem:[#allocation4 + $0x350] sm:$0xff]
        %v738 = vld [vmem:[#allocation4 + $0x358] sm:$0xff]
        %v739 = vld [vmem:[#allocation4 + $0x360] sm:$0xff]
        %v740 = vld [vmem:[#allocation4 + $0x368] sm:$0xff]
        %v741 = vld [vmem:[#allocation4 + $0x370] sm:$0xff]
        %v742 = vld [vmem:[#allocation4 + $0x378] sm:$0xff]
        %v743 = vld [vmem:[#allocation4 + $0x380] sm:$0xff]
        %v744 = vld [vmem:[#allocation4 + $0x388] sm:$0xff]
        %v745 = vld [vmem:[#allocation4 + $0x390] sm:$0xff]
        %v746 = vld [vmem:[#allocation4 + $0x398] sm:$0xff]
        %v747 = vld [vmem:[#allocation4 + $0x3a0] sm:$0xff]
        %v748 = vld [vmem:[#allocation4 + $0x3a8] sm:$0xff]
        %v749 = vld [vmem:[#allocation4 + $0x3b0] sm:$0xff]
        %v750 = vld [vmem:[#allocation4 + $0x3b8] sm:$0xff]
        %v751 = vld [vmem:[#allocation4 + $0x3c0] sm:$0xff]
        %v752 = vld [vmem:[#allocation4 + $0x3c8] sm:$0xff]
        %v753 = vld [vmem:[#allocation4 + $0x3d0] sm:$0xff]
        %v754 = vld [vmem:[#allocation4 + $0x3d8] sm:$0xff]
        %v755 = vld [vmem:[#allocation4 + $0x3e0] sm:$0xff]
        %v756 = vld [vmem:[#allocation4 + $0x3e8] sm:$0xff]
        %v757 = vld [vmem:[#allocation4 + $0x3f0] sm:$0xff]
        %v758 = vld [vmem:[#allocation4 + $0x3f8] sm:$0xff]
        %v759 = vld [vmem:[#allocation4 + $0x400] sm:$0xff]
        %v760 = vld [vmem:[#allocation4 + $0x408] sm:$0xff]
        %v761 = vld [vmem:[#allocation4 + $0x410] sm:$0xff]
        %v762 = vld [vmem:[#allocation4 + $0x418] sm:$0xff]
        %v763 = vld [vmem:[#allocation4 + $0x420] sm:$0xff]
        %v764 = vld [vmem:[#allocation4 + $0x428] sm:$0xff]
        %v765 = vld [vmem:[#allocation4 + $0x430] sm:$0xff]
        %v766 = vld [vmem:[#allocation4 + $0x438] sm:$0xff]
        %v767 = vld [vmem:[#allocation4 + $0x440] sm:$0xff]
        %v768 = vld [vmem:[#allocation4 + $0x448] sm:$0xff]
        %v769 = vld [vmem:[#allocation4 + $0x450] sm:$0xff]
        %v770 = vld [vmem:[#allocation4 + $0x458] sm:$0xff]
        %v771 = vld [vmem:[#allocation4 + $0x460] sm:$0xff]
        %v772 = vld [vmem:[#allocation4 + $0x468] sm:$0xff]
        %v773 = vld [vmem:[#allocation4 + $0x470] sm:$0xff]
        %v774 = vld [vmem:[#allocation4 + $0x478] sm:$0xff]
        %v775 = vld [vmem:[#allocation4 + $0x480] sm:$0xff]
        %v776 = vld [vmem:[#allocation4 + $0x488] sm:$0xff]
        %v777 = vld [vmem:[#allocation4 + $0x490] sm:$0xff]
        %v778 = vld [vmem:[#allocation4 + $0x498] sm:$0xff]
        %v779 = vld [vmem:[#allocation4 + $0x4a0] sm:$0xff]
        %v780 = vld [vmem:[#allocation4 + $0x4a8] sm:$0xff]
        %v781 = vld [vmem:[#allocation4 + $0x4b0] sm:$0xff]
        %v782 = vld [vmem:[#allocation4 + $0x4b8] sm:$0xff]
        %v783 = vld [vmem:[#allocation4 + $0x4c0] sm:$0xff]
        %v784 = vld [vmem:[#allocation4 + $0x4c8] sm:$0xff]
        %v785 = vld [vmem:[#allocation4 + $0x4d0] sm:$0xff]
        %v786 = vld [vmem:[#allocation4 + $0x4d8] sm:$0xff]
        %v787 = vld [vmem:[#allocation4 + $0x4e0] sm:$0xff]
        %v788 = vld [vmem:[#allocation4 + $0x4e8] sm:$0xff]
        %v789 = vld [vmem:[#allocation4 + $0x4f0] sm:$0xff]
        %v790 = vld [vmem:[#allocation4 + $0x4f8] sm:$0xff]
        %v791 = vld [vmem:[#allocation4 + $0x500] sm:$0xff]
        %v792 = vld [vmem:[#allocation4 + $0x508] sm:$0xff]
        %v793 = vld [vmem:[#allocation4 + $0x510] sm:$0xff]
        %v794 = vld [vmem:[#allocation4 + $0x518] sm:$0xff]
        %v795 = vld [vmem:[#allocation4 + $0x520] sm:$0xff]
        %v796 = vld [vmem:[#allocation4 + $0x528] sm:$0xff]
        %v797 = vld [vmem:[#allocation4 + $0x530] sm:$0xff]
        %v798 = vld [vmem:[#allocation4 + $0x538] sm:$0xff]
        %v799 = vld [vmem:[#allocation4 + $0x540] sm:$0xff]
        %v800 = vld [vmem:[#allocation4 + $0x548] sm:$0xff]
        %v801 = vld [vmem:[#allocation4 + $0x550] sm:$0xff]
        %v802 = vld [vmem:[#allocation4 + $0x558] sm:$0xff]
        %v803 = vld [vmem:[#allocation4 + $0x560] sm:$0xff]
        %v804 = vld [vmem:[#allocation4 + $0x568] sm:$0xff]
        %v805 = vld [vmem:[#allocation4 + $0x570] sm:$0xff]
        %v806 = vld [vmem:[#allocation4 + $0x578] sm:$0xff]
        %v807 = vld [vmem:[#allocation4 + $0x580] sm:$0xff]
        %v808 = vld [vmem:[#allocation4 + $0x588] sm:$0xff]
        %v809 = vld [vmem:[#allocation4 + $0x590] sm:$0xff]
        %v810 = vld [vmem:[#allocation4 + $0x598] sm:$0xff]
        %v811 = vld [vmem:[#allocation4 + $0x5a0] sm:$0xff]
        %v812 = vld [vmem:[#allocation4 + $0x5a8] sm:$0xff]
        %v813 = vld [vmem:[#allocation4 + $0x5b0] sm:$0xff]
        %v814 = vld [vmem:[#allocation4 + $0x5b8] sm:$0xff]
        %v815 = vld [vmem:[#allocation4 + $0x5c0] sm:$0xff]
        %v816 = vld [vmem:[#allocation4 + $0x5c8] sm:$0xff]
        %v817 = vld [vmem:[#allocation4 + $0x5d0] sm:$0xff]
        %v818 = vld [vmem:[#allocation4 + $0x5d8] sm:$0xff]
        %v819 = vld [vmem:[#allocation4 + $0x5e0] sm:$0xff]
        %v820 = vld [vmem:[#allocation4 + $0x5e8] sm:$0xff]
        %v821 = vld [vmem:[#allocation4 + $0x5f0] sm:$0xff]
        %v822 = vld [vmem:[#allocation4 + $0x5f8] sm:$0xff]
        %v823 = vld [vmem:[#allocation4 + $0x600] sm:$0xff]
        %v824 = vld [vmem:[#allocation4 + $0x608] sm:$0xff]
        %v825 = vld [vmem:[#allocation4 + $0x610] sm:$0xff]
        %v826 = vld [vmem:[#allocation4 + $0x618] sm:$0xff]
        %v827 = vld [vmem:[#allocation4 + $0x620] sm:$0xff]
        %v828 = vld [vmem:[#allocation4 + $0x628] sm:$0xff]
        %v829 = vld [vmem:[#allocation4 + $0x630] sm:$0xff]
        %v830 = vld [vmem:[#allocation4 + $0x638] sm:$0xff]
        %v831 = vld [vmem:[#allocation4 + $0x640] sm:$0xff]
        %v832 = vld [vmem:[#allocation4 + $0x648] sm:$0xff]
        %v833 = vld [vmem:[#allocation4 + $0x650] sm:$0xff]
        %v834 = vld [vmem:[#allocation4 + $0x658] sm:$0xff]
        %v835 = vld [vmem:[#allocation4 + $0x660] sm:$0xff]
        %v836 = vld [vmem:[#allocation4 + $0x668] sm:$0xff]
        %v837 = vld [vmem:[#allocation4 + $0x670] sm:$0xff]
        %v838 = vld [vmem:[#allocation4 + $0x678] sm:$0xff]
        %v839 = vld [vmem:[#allocation4 + $0x680] sm:$0xff]
        %v840 = vld [vmem:[#allocation4 + $0x688] sm:$0xff]
        %v841 = vld [vmem:[#allocation4 + $0x690] sm:$0xff]
        %v842 = vld [vmem:[#allocation4 + $0x698] sm:$0xff]
        %v843 = vld [vmem:[#allocation4 + $0x6a0] sm:$0xff]
        %v844 = vld [vmem:[#allocation4 + $0x6a8] sm:$0xff]
        %v845 = vld [vmem:[#allocation4 + $0x6b0] sm:$0xff]
        %v846 = vld [vmem:[#allocation4 + $0x6b8] sm:$0xff]
        %v847 = vld [vmem:[#allocation4 + $0x6c0] sm:$0xff]
        %v848 = vld [vmem:[#allocation4 + $0x6c8] sm:$0xff]
        %v849 = vld [vmem:[#allocation4 + $0x6d0] sm:$0xff]
        %v850 = vld [vmem:[#allocation4 + $0x6d8] sm:$0xff]
        %v851 = vld [vmem:[#allocation4 + $0x6e0] sm:$0xff]
        %v852 = vld [vmem:[#allocation4 + $0x6e8] sm:$0xff]
        %v853 = vld [vmem:[#allocation4 + $0x6f0] sm:$0xff]
        %v854 = vld [vmem:[#allocation4 + $0x6f8] sm:$0xff]
        %v855 = vld [vmem:[#allocation4 + $0x700] sm:$0xff]
        %v856 = vld [vmem:[#allocation4 + $0x708] sm:$0xff]
        %v857 = vld [vmem:[#allocation4 + $0x710] sm:$0xff]
        %v858 = vld [vmem:[#allocation4 + $0x718] sm:$0xff]
        %v859 = vld [vmem:[#allocation4 + $0x720] sm:$0xff]
        %v860 = vld [vmem:[#allocation4 + $0x728] sm:$0xff]
        %v861 = vld [vmem:[#allocation4 + $0x730] sm:$0xff]
        %v862 = vld [vmem:[#allocation4 + $0x738] sm:$0xff]
        %v863 = vld [vmem:[#allocation4 + $0x740] sm:$0xff]
        %v864 = vld [vmem:[#allocation4 + $0x748] sm:$0xff]
        %v865 = vld [vmem:[#allocation4 + $0x750] sm:$0xff]
        %v866 = vld [vmem:[#allocation4 + $0x758] sm:$0xff]
        %v867 = vld [vmem:[#allocation4 + $0x760] sm:$0xff]
        %v868 = vld [vmem:[#allocation4 + $0x768] sm:$0xff]
        %v869 = vld [vmem:[#allocation4 + $0x770] sm:$0xff]
        %v870 = vld [vmem:[#allocation4 + $0x778] sm:$0xff]
        %v871 = vld [vmem:[#allocation4 + $0x780] sm:$0xff]
        %v872 = vld [vmem:[#allocation4 + $0x788] sm:$0xff]
        %v873 = vld [vmem:[#allocation4 + $0x790] sm:$0xff]
        %v874 = vld [vmem:[#allocation4 + $0x798] sm:$0xff]
        %v875 = vld [vmem:[#allocation4 + $0x7a0] sm:$0xff]
        %v876 = vld [vmem:[#allocation4 + $0x7a8] sm:$0xff]
        %v877 = vld [vmem:[#allocation4 + $0x7b0] sm:$0xff]
        %v878 = vld [vmem:[#allocation4 + $0x7b8] sm:$0xff]
        %v879 = vld [vmem:[#allocation4 + $0x7c0] sm:$0xff]
        %v880 = vld [vmem:[#allocation4 + $0x7c8] sm:$0xff]
        %v881 = vld [vmem:[#allocation4 + $0x7d0] sm:$0xff]
        %v882 = vld [vmem:[#allocation4 + $0x7d8] sm:$0xff]
        %v883 = vld [vmem:[#allocation4 + $0x7e0] sm:$0xff]
        %v884 = vld [vmem:[#allocation4 + $0x7e8] sm:$0xff]
        %v885 = vld [vmem:[#allocation4 + $0x7f0] sm:$0xff]
        %v886 = vld [vmem:[#allocation4 + $0x7f8] sm:$0xff]
        %v887 = vld [vmem:[#allocation6] sm:$0xf]
        %v889 = vperm.slane %v887, 0
        %v890 = vperm.slane %v887, 1
        %v891 = vperm.slane %v887, 2
        %v892 = vperm.slane %v887, 3
        %v1153 = vunpack.c.l.b16 %v631
        %v1154 = vunpack.c.h.b16 %v631
        %v1155 = vunpack.c.l.b16 %v632
        %v1156 = vunpack.c.h.b16 %v632
        %v1157 = vunpack.c.l.b16 %v633
        %v1158 = vunpack.c.h.b16 %v633
        %v1159 = vunpack.c.l.b16 %v634
        %v1160 = vunpack.c.h.b16 %v634
        %v1161 = vunpack.c.l.b16 %v635
        %v1162 = vunpack.c.h.b16 %v635
        %v1163 = vunpack.c.l.b16 %v636
        %v1164 = vunpack.c.h.b16 %v636
        %v1165 = vunpack.c.l.b16 %v637
        %v1166 = vunpack.c.h.b16 %v637
        %v1167 = vunpack.c.l.b16 %v638
        %v1168 = vunpack.c.h.b16 %v638
        %v1169 = vunpack.c.l.b16 %v639
        %v1170 = vunpack.c.h.b16 %v639
        %v1171 = vunpack.c.l.b16 %v640
        %v1172 = vunpack.c.h.b16 %v640
        %v1173 = vunpack.c.l.b16 %v641
        %v1174 = vunpack.c.h.b16 %v641
        %v1175 = vunpack.c.l.b16 %v642
        %v1176 = vunpack.c.h.b16 %v642
        %v1177 = vunpack.c.l.b16 %v643
        %v1178 = vunpack.c.h.b16 %v643
        %v1179 = vunpack.c.l.b16 %v644
        %v1180 = vunpack.c.h.b16 %v644
        %v1181 = vunpack.c.l.b16 %v645
        %v1182 = vunpack.c.h.b16 %v645
        %v1183 = vunpack.c.l.b16 %v646
        %v1184 = vunpack.c.h.b16 %v646
        %v1185 = vunpack.c.l.b16 %v647
        %v1186 = vunpack.c.h.b16 %v647
        %v1187 = vunpack.c.l.b16 %v648
        %v1188 = vunpack.c.h.b16 %v648
        %v1189 = vunpack.c.l.b16 %v649
        %v1190 = vunpack.c.h.b16 %v649
        %v1191 = vunpack.c.l.b16 %v650
        %v1192 = vunpack.c.h.b16 %v650
        %v1193 = vunpack.c.l.b16 %v651
        %v1194 = vunpack.c.h.b16 %v651
        %v1195 = vunpack.c.l.b16 %v652
        %v1196 = vunpack.c.h.b16 %v652
        %v1197 = vunpack.c.l.b16 %v653
        %v1198 = vunpack.c.h.b16 %v653
        %v1199 = vunpack.c.l.b16 %v654
        %v1200 = vunpack.c.h.b16 %v654
        %v1201 = vunpack.c.l.b16 %v655
        %v1202 = vunpack.c.h.b16 %v655
        %v1203 = vunpack.c.l.b16 %v656
        %v1204 = vunpack.c.h.b16 %v656
        %v1205 = vunpack.c.l.b16 %v657
        %v1206 = vunpack.c.h.b16 %v657
        %v1207 = vunpack.c.l.b16 %v658
        %v1208 = vunpack.c.h.b16 %v658
        %v1209 = vunpack.c.l.b16 %v659
        %v1210 = vunpack.c.h.b16 %v659
        %v1211 = vunpack.c.l.b16 %v660
        %v1212 = vunpack.c.h.b16 %v660
        %v1213 = vunpack.c.l.b16 %v661
        %v1214 = vunpack.c.h.b16 %v661
        %v1215 = vunpack.c.l.b16 %v662
        %v1216 = vunpack.c.h.b16 %v662
        %v1217 = vunpack.c.l.b16 %v663
        %v1218 = vunpack.c.h.b16 %v663
        %v1219 = vunpack.c.l.b16 %v664
        %v1220 = vunpack.c.h.b16 %v664
        %v1221 = vunpack.c.l.b16 %v665
        %v1222 = vunpack.c.h.b16 %v665
        %v1223 = vunpack.c.l.b16 %v666
        %v1224 = vunpack.c.h.b16 %v666
        %v1225 = vunpack.c.l.b16 %v667
        %v1226 = vunpack.c.h.b16 %v667
        %v1227 = vunpack.c.l.b16 %v668
        %v1228 = vunpack.c.h.b16 %v668
        %v1229 = vunpack.c.l.b16 %v669
        %v1230 = vunpack.c.h.b16 %v669
        %v1231 = vunpack.c.l.b16 %v670
        %v1232 = vunpack.c.h.b16 %v670
        %v1233 = vunpack.c.l.b16 %v671
        %v1234 = vunpack.c.h.b16 %v671
        %v1235 = vunpack.c.l.b16 %v672
        %v1236 = vunpack.c.h.b16 %v672
        %v1237 = vunpack.c.l.b16 %v673
        %v1238 = vunpack.c.h.b16 %v673
        %v1239 = vunpack.c.l.b16 %v674
        %v1240 = vunpack.c.h.b16 %v674
        %v1241 = vunpack.c.l.b16 %v675
        %v1242 = vunpack.c.h.b16 %v675
        %v1243 = vunpack.c.l.b16 %v676
        %v1244 = vunpack.c.h.b16 %v676
        %v1245 = vunpack.c.l.b16 %v677
        %v1246 = vunpack.c.h.b16 %v677
        %v1247 = vunpack.c.l.b16 %v678
        %v1248 = vunpack.c.h.b16 %v678
        %v1249 = vunpack.c.l.b16 %v679
        %v1250 = vunpack.c.h.b16 %v679
        %v1251 = vunpack.c.l.b16 %v680
        %v1252 = vunpack.c.h.b16 %v680
        %v1253 = vunpack.c.l.b16 %v681
        %v1254 = vunpack.c.h.b16 %v681
        %v1255 = vunpack.c.l.b16 %v682
        %v1256 = vunpack.c.h.b16 %v682
        %v1257 = vunpack.c.l.b16 %v683
        %v1258 = vunpack.c.h.b16 %v683
        %v1259 = vunpack.c.l.b16 %v684
        %v1260 = vunpack.c.h.b16 %v684
        %v1261 = vunpack.c.l.b16 %v685
        %v1262 = vunpack.c.h.b16 %v685
        %v1263 = vunpack.c.l.b16 %v686
        %v1264 = vunpack.c.h.b16 %v686
        %v1265 = vunpack.c.l.b16 %v687
        %v1266 = vunpack.c.h.b16 %v687
        %v1267 = vunpack.c.l.b16 %v688
        %v1268 = vunpack.c.h.b16 %v688
        %v1269 = vunpack.c.l.b16 %v689
        %v1270 = vunpack.c.h.b16 %v689
        %v1271 = vunpack.c.l.b16 %v690
        %v1272 = vunpack.c.h.b16 %v690
        %v1273 = vunpack.c.l.b16 %v691
        %v1274 = vunpack.c.h.b16 %v691
        %v1275 = vunpack.c.l.b16 %v692
        %v1276 = vunpack.c.h.b16 %v692
        %v1277 = vunpack.c.l.b16 %v693
        %v1278 = vunpack.c.h.b16 %v693
        %v1279 = vunpack.c.l.b16 %v694
        %v1280 = vunpack.c.h.b16 %v694
        %v1281 = vunpack.c.l.b16 %v695
        %v1282 = vunpack.c.h.b16 %v695
        %v1283 = vunpack.c.l.b16 %v696
        %v1284 = vunpack.c.h.b16 %v696
        %v1285 = vunpack.c.l.b16 %v697
        %v1286 = vunpack.c.h.b16 %v697
        %v1287 = vunpack.c.l.b16 %v698
        %v1288 = vunpack.c.h.b16 %v698
        %v1289 = vunpack.c.l.b16 %v699
        %v1290 = vunpack.c.h.b16 %v699
        %v1291 = vunpack.c.l.b16 %v700
        %v1292 = vunpack.c.h.b16 %v700
        %v1293 = vunpack.c.l.b16 %v701
        %v1294 = vunpack.c.h.b16 %v701
        %v1295 = vunpack.c.l.b16 %v702
        %v1296 = vunpack.c.h.b16 %v702
        %v1297 = vunpack.c.l.b16 %v703
        %v1298 = vunpack.c.h.b16 %v703
        %v1299 = vunpack.c.l.b16 %v704
        %v1300 = vunpack.c.h.b16 %v704
        %v1301 = vunpack.c.l.b16 %v705
        %v1302 = vunpack.c.h.b16 %v705
        %v1303 = vunpack.c.l.b16 %v706
        %v1304 = vunpack.c.h.b16 %v706
        %v1305 = vunpack.c.l.b16 %v707
        %v1306 = vunpack.c.h.b16 %v707
        %v1307 = vunpack.c.l.b16 %v708
        %v1308 = vunpack.c.h.b16 %v708
        %v1309 = vunpack.c.l.b16 %v709
        %v1310 = vunpack.c.h.b16 %v709
        %v1311 = vunpack.c.l.b16 %v710
        %v1312 = vunpack.c.h.b16 %v710
        %v1313 = vunpack.c.l.b16 %v711
        %v1314 = vunpack.c.h.b16 %v711
        %v1315 = vunpack.c.l.b16 %v712
        %v1316 = vunpack.c.h.b16 %v712
        %v1317 = vunpack.c.l.b16 %v713
        %v1318 = vunpack.c.h.b16 %v713
        %v1319 = vunpack.c.l.b16 %v714
        %v1320 = vunpack.c.h.b16 %v714
        %v1321 = vunpack.c.l.b16 %v715
        %v1322 = vunpack.c.h.b16 %v715
        %v1323 = vunpack.c.l.b16 %v716
        %v1324 = vunpack.c.h.b16 %v716
        %v1325 = vunpack.c.l.b16 %v717
        %v1326 = vunpack.c.h.b16 %v717
        %v1327 = vunpack.c.l.b16 %v718
        %v1328 = vunpack.c.h.b16 %v718
        %v1329 = vunpack.c.l.b16 %v719
        %v1330 = vunpack.c.h.b16 %v719
        %v1331 = vunpack.c.l.b16 %v720
        %v1332 = vunpack.c.h.b16 %v720
        %v1333 = vunpack.c.l.b16 %v721
        %v1334 = vunpack.c.h.b16 %v721
        %v1335 = vunpack.c.l.b16 %v722
        %v1336 = vunpack.c.h.b16 %v722
        %v1337 = vunpack.c.l.b16 %v723
        %v1338 = vunpack.c.h.b16 %v723
        %v1339 = vunpack.c.l.b16 %v724
        %v1340 = vunpack.c.h.b16 %v724
        %v1341 = vunpack.c.l.b16 %v725
        %v1342 = vunpack.c.h.b16 %v725
        %v1343 = vunpack.c.l.b16 %v726
        %v1344 = vunpack.c.h.b16 %v726
        %v1345 = vunpack.c.l.b16 %v727
        %v1346 = vunpack.c.h.b16 %v727
        %v1347 = vunpack.c.l.b16 %v728
        %v1348 = vunpack.c.h.b16 %v728
        %v1349 = vunpack.c.l.b16 %v729
        %v1350 = vunpack.c.h.b16 %v729
        %v1351 = vunpack.c.l.b16 %v730
        %v1352 = vunpack.c.h.b16 %v730
        %v1353 = vunpack.c.l.b16 %v731
        %v1354 = vunpack.c.h.b16 %v731
        %v1355 = vunpack.c.l.b16 %v732
        %v1356 = vunpack.c.h.b16 %v732
        %v1357 = vunpack.c.l.b16 %v733
        %v1358 = vunpack.c.h.b16 %v733
        %v1359 = vunpack.c.l.b16 %v734
        %v1360 = vunpack.c.h.b16 %v734
        %v1361 = vunpack.c.l.b16 %v735
        %v1362 = vunpack.c.h.b16 %v735
        %v1363 = vunpack.c.l.b16 %v736
        %v1364 = vunpack.c.h.b16 %v736
        %v1365 = vunpack.c.l.b16 %v737
        %v1366 = vunpack.c.h.b16 %v737
        %v1367 = vunpack.c.l.b16 %v738
        %v1368 = vunpack.c.h.b16 %v738
        %v1369 = vunpack.c.l.b16 %v739
        %v1370 = vunpack.c.h.b16 %v739
        %v1371 = vunpack.c.l.b16 %v740
        %v1372 = vunpack.c.h.b16 %v740
        %v1373 = vunpack.c.l.b16 %v741
        %v1374 = vunpack.c.h.b16 %v741
        %v1375 = vunpack.c.l.b16 %v742
        %v1376 = vunpack.c.h.b16 %v742
        %v1377 = vunpack.c.l.b16 %v743
        %v1378 = vunpack.c.h.b16 %v743
        %v1379 = vunpack.c.l.b16 %v744
        %v1380 = vunpack.c.h.b16 %v744
        %v1381 = vunpack.c.l.b16 %v745
        %v1382 = vunpack.c.h.b16 %v745
        %v1383 = vunpack.c.l.b16 %v746
        %v1384 = vunpack.c.h.b16 %v746
        %v1385 = vunpack.c.l.b16 %v747
        %v1386 = vunpack.c.h.b16 %v747
        %v1387 = vunpack.c.l.b16 %v748
        %v1388 = vunpack.c.h.b16 %v748
        %v1389 = vunpack.c.l.b16 %v749
        %v1390 = vunpack.c.h.b16 %v749
        %v1391 = vunpack.c.l.b16 %v750
        %v1392 = vunpack.c.h.b16 %v750
        %v1393 = vunpack.c.l.b16 %v751
        %v1394 = vunpack.c.h.b16 %v751
        %v1395 = vunpack.c.l.b16 %v752
        %v1396 = vunpack.c.h.b16 %v752
        %v1397 = vunpack.c.l.b16 %v753
        %v1398 = vunpack.c.h.b16 %v753
        %v1399 = vunpack.c.l.b16 %v754
        %v1400 = vunpack.c.h.b16 %v754
        %v1401 = vunpack.c.l.b16 %v755
        %v1402 = vunpack.c.h.b16 %v755
        %v1403 = vunpack.c.l.b16 %v756
        %v1404 = vunpack.c.h.b16 %v756
        %v1405 = vunpack.c.l.b16 %v757
        %v1406 = vunpack.c.h.b16 %v757
        %v1407 = vunpack.c.l.b16 %v758
        %v1408 = vunpack.c.h.b16 %v758
        %v1409 = vunpack.c.l.b16 %v759
        %v1410 = vunpack.c.h.b16 %v759
        %v1411 = vunpack.c.l.b16 %v760
        %v1412 = vunpack.c.h.b16 %v760
        %v1413 = vunpack.c.l.b16 %v761
        %v1414 = vunpack.c.h.b16 %v761
        %v1415 = vunpack.c.l.b16 %v762
        %v1416 = vunpack.c.h.b16 %v762
        %v1417 = vunpack.c.l.b16 %v763
        %v1418 = vunpack.c.h.b16 %v763
        %v1419 = vunpack.c.l.b16 %v764
        %v1420 = vunpack.c.h.b16 %v764
        %v1421 = vunpack.c.l.b16 %v765
        %v1422 = vunpack.c.h.b16 %v765
        %v1423 = vunpack.c.l.b16 %v766
        %v1424 = vunpack.c.h.b16 %v766
        %v1425 = vunpack.c.l.b16 %v767
        %v1426 = vunpack.c.h.b16 %v767
        %v1427 = vunpack.c.l.b16 %v768
        %v1428 = vunpack.c.h.b16 %v768
        %v1429 = vunpack.c.l.b16 %v769
        %v1430 = vunpack.c.h.b16 %v769
        %v1431 = vunpack.c.l.b16 %v770
        %v1432 = vunpack.c.h.b16 %v770
        %v1433 = vunpack.c.l.b16 %v771
        %v1434 = vunpack.c.h.b16 %v771
        %v1435 = vunpack.c.l.b16 %v772
        %v1436 = vunpack.c.h.b16 %v772
        %v1437 = vunpack.c.l.b16 %v773
        %v1438 = vunpack.c.h.b16 %v773
        %v1439 = vunpack.c.l.b16 %v774
        %v1440 = vunpack.c.h.b16 %v774
        %v1441 = vunpack.c.l.b16 %v775
        %v1442 = vunpack.c.h.b16 %v775
        %v1443 = vunpack.c.l.b16 %v776
        %v1444 = vunpack.c.h.b16 %v776
        %v1445 = vunpack.c.l.b16 %v777
        %v1446 = vunpack.c.h.b16 %v777
        %v1447 = vunpack.c.l.b16 %v778
        %v1448 = vunpack.c.h.b16 %v778
        %v1449 = vunpack.c.l.b16 %v779
        %v1450 = vunpack.c.h.b16 %v779
        %v1451 = vunpack.c.l.b16 %v780
        %v1452 = vunpack.c.h.b16 %v780
        %v1453 = vunpack.c.l.b16 %v781
        %v1454 = vunpack.c.h.b16 %v781
        %v1455 = vunpack.c.l.b16 %v782
        %v1456 = vunpack.c.h.b16 %v782
        %v1457 = vunpack.c.l.b16 %v783
        %v1458 = vunpack.c.h.b16 %v783
        %v1459 = vunpack.c.l.b16 %v784
        %v1460 = vunpack.c.h.b16 %v784
        %v1461 = vunpack.c.l.b16 %v785
        %v1462 = vunpack.c.h.b16 %v785
        %v1463 = vunpack.c.l.b16 %v786
        %v1464 = vunpack.c.h.b16 %v786
        %v1465 = vunpack.c.l.b16 %v787
        %v1466 = vunpack.c.h.b16 %v787
        %v1467 = vunpack.c.l.b16 %v788
        %v1468 = vunpack.c.h.b16 %v788
        %v1469 = vunpack.c.l.b16 %v789
        %v1470 = vunpack.c.h.b16 %v789
        %v1471 = vunpack.c.l.b16 %v790
        %v1472 = vunpack.c.h.b16 %v790
        %v1473 = vunpack.c.l.b16 %v791
        %v1474 = vunpack.c.h.b16 %v791
        %v1475 = vunpack.c.l.b16 %v792
        %v1476 = vunpack.c.h.b16 %v792
        %v1477 = vunpack.c.l.b16 %v793
        %v1478 = vunpack.c.h.b16 %v793
        %v1479 = vunpack.c.l.b16 %v794
        %v1480 = vunpack.c.h.b16 %v794
        %v1481 = vunpack.c.l.b16 %v795
        %v1482 = vunpack.c.h.b16 %v795
        %v1483 = vunpack.c.l.b16 %v796
        %v1484 = vunpack.c.h.b16 %v796
        %v1485 = vunpack.c.l.b16 %v797
        %v1486 = vunpack.c.h.b16 %v797
        %v1487 = vunpack.c.l.b16 %v798
        %v1488 = vunpack.c.h.b16 %v798
        %v1489 = vunpack.c.l.b16 %v799
        %v1490 = vunpack.c.h.b16 %v799
        %v1491 = vunpack.c.l.b16 %v800
        %v1492 = vunpack.c.h.b16 %v800
        %v1493 = vunpack.c.l.b16 %v801
        %v1494 = vunpack.c.h.b16 %v801
        %v1495 = vunpack.c.l.b16 %v802
        %v1496 = vunpack.c.h.b16 %v802
        %v1497 = vunpack.c.l.b16 %v803
        %v1498 = vunpack.c.h.b16 %v803
        %v1499 = vunpack.c.l.b16 %v804
        %v1500 = vunpack.c.h.b16 %v804
        %v1501 = vunpack.c.l.b16 %v805
        %v1502 = vunpack.c.h.b16 %v805
        %v1503 = vunpack.c.l.b16 %v806
        %v1504 = vunpack.c.h.b16 %v806
        %v1505 = vunpack.c.l.b16 %v807
        %v1506 = vunpack.c.h.b16 %v807
        %v1507 = vunpack.c.l.b16 %v808
        %v1508 = vunpack.c.h.b16 %v808
        %v1509 = vunpack.c.l.b16 %v809
        %v1510 = vunpack.c.h.b16 %v809
        %v1511 = vunpack.c.l.b16 %v810
        %v1512 = vunpack.c.h.b16 %v810
        %v1513 = vunpack.c.l.b16 %v811
        %v1514 = vunpack.c.h.b16 %v811
        %v1515 = vunpack.c.l.b16 %v812
        %v1516 = vunpack.c.h.b16 %v812
        %v1517 = vunpack.c.l.b16 %v813
        %v1518 = vunpack.c.h.b16 %v813
        %v1519 = vunpack.c.l.b16 %v814
        %v1520 = vunpack.c.h.b16 %v814
        %v1521 = vunpack.c.l.b16 %v815
        %v1522 = vunpack.c.h.b16 %v815
        %v1523 = vunpack.c.l.b16 %v816
        %v1524 = vunpack.c.h.b16 %v816
        %v1525 = vunpack.c.l.b16 %v817
        %v1526 = vunpack.c.h.b16 %v817
        %v1527 = vunpack.c.l.b16 %v818
        %v1528 = vunpack.c.h.b16 %v818
        %v1529 = vunpack.c.l.b16 %v819
        %v1530 = vunpack.c.h.b16 %v819
        %v1531 = vunpack.c.l.b16 %v820
        %v1532 = vunpack.c.h.b16 %v820
        %v1533 = vunpack.c.l.b16 %v821
        %v1534 = vunpack.c.h.b16 %v821
        %v1535 = vunpack.c.l.b16 %v822
        %v1536 = vunpack.c.h.b16 %v822
        %v1537 = vunpack.c.l.b16 %v823
        %v1538 = vunpack.c.h.b16 %v823
        %v1539 = vunpack.c.l.b16 %v824
        %v1540 = vunpack.c.h.b16 %v824
        %v1541 = vunpack.c.l.b16 %v825
        %v1542 = vunpack.c.h.b16 %v825
        %v1543 = vunpack.c.l.b16 %v826
        %v1544 = vunpack.c.h.b16 %v826
        %v1545 = vunpack.c.l.b16 %v827
        %v1546 = vunpack.c.h.b16 %v827
        %v1547 = vunpack.c.l.b16 %v828
        %v1548 = vunpack.c.h.b16 %v828
        %v1549 = vunpack.c.l.b16 %v829
        %v1550 = vunpack.c.h.b16 %v829
        %v1551 = vunpack.c.l.b16 %v830
        %v1552 = vunpack.c.h.b16 %v830
        %v1553 = vunpack.c.l.b16 %v831
        %v1554 = vunpack.c.h.b16 %v831
        %v1555 = vunpack.c.l.b16 %v832
        %v1556 = vunpack.c.h.b16 %v832
        %v1557 = vunpack.c.l.b16 %v833
        %v1558 = vunpack.c.h.b16 %v833
        %v1559 = vunpack.c.l.b16 %v834
        %v1560 = vunpack.c.h.b16 %v834
        %v1561 = vunpack.c.l.b16 %v835
        %v1562 = vunpack.c.h.b16 %v835
        %v1563 = vunpack.c.l.b16 %v836
        %v1564 = vunpack.c.h.b16 %v836
        %v1565 = vunpack.c.l.b16 %v837
        %v1566 = vunpack.c.h.b16 %v837
        %v1567 = vunpack.c.l.b16 %v838
        %v1568 = vunpack.c.h.b16 %v838
        %v1569 = vunpack.c.l.b16 %v839
        %v1570 = vunpack.c.h.b16 %v839
        %v1571 = vunpack.c.l.b16 %v840
        %v1572 = vunpack.c.h.b16 %v840
        %v1573 = vunpack.c.l.b16 %v841
        %v1574 = vunpack.c.h.b16 %v841
        %v1575 = vunpack.c.l.b16 %v842
        %v1576 = vunpack.c.h.b16 %v842
        %v1577 = vunpack.c.l.b16 %v843
        %v1578 = vunpack.c.h.b16 %v843
        %v1579 = vunpack.c.l.b16 %v844
        %v1580 = vunpack.c.h.b16 %v844
        %v1581 = vunpack.c.l.b16 %v845
        %v1582 = vunpack.c.h.b16 %v845
        %v1583 = vunpack.c.l.b16 %v846
        %v1584 = vunpack.c.h.b16 %v846
        %v1585 = vunpack.c.l.b16 %v847
        %v1586 = vunpack.c.h.b16 %v847
        %v1587 = vunpack.c.l.b16 %v848
        %v1588 = vunpack.c.h.b16 %v848
        %v1589 = vunpack.c.l.b16 %v849
        %v1590 = vunpack.c.h.b16 %v849
        %v1591 = vunpack.c.l.b16 %v850
        %v1592 = vunpack.c.h.b16 %v850
        %v1593 = vunpack.c.l.b16 %v851
        %v1594 = vunpack.c.h.b16 %v851
        %v1595 = vunpack.c.l.b16 %v852
        %v1596 = vunpack.c.h.b16 %v852
        %v1597 = vunpack.c.l.b16 %v853
        %v1598 = vunpack.c.h.b16 %v853
        %v1599 = vunpack.c.l.b16 %v854
        %v1600 = vunpack.c.h.b16 %v854
        %v1601 = vunpack.c.l.b16 %v855
        %v1602 = vunpack.c.h.b16 %v855
        %v1603 = vunpack.c.l.b16 %v856
        %v1604 = vunpack.c.h.b16 %v856
        %v1605 = vunpack.c.l.b16 %v857
        %v1606 = vunpack.c.h.b16 %v857
        %v1607 = vunpack.c.l.b16 %v858
        %v1608 = vunpack.c.h.b16 %v858
        %v1609 = vunpack.c.l.b16 %v859
        %v1610 = vunpack.c.h.b16 %v859
        %v1611 = vunpack.c.l.b16 %v860
        %v1612 = vunpack.c.h.b16 %v860
        %v1613 = vunpack.c.l.b16 %v861
        %v1614 = vunpack.c.h.b16 %v861
        %v1615 = vunpack.c.l.b16 %v862
        %v1616 = vunpack.c.h.b16 %v862
        %v1617 = vunpack.c.l.b16 %v863
        %v1618 = vunpack.c.h.b16 %v863
        %v1619 = vunpack.c.l.b16 %v864
        %v1620 = vunpack.c.h.b16 %v864
        %v1621 = vunpack.c.l.b16 %v865
        %v1622 = vunpack.c.h.b16 %v865
        %v1623 = vunpack.c.l.b16 %v866
        %v1624 = vunpack.c.h.b16 %v866
        %v1625 = vunpack.c.l.b16 %v867
        %v1626 = vunpack.c.h.b16 %v867
        %v1627 = vunpack.c.l.b16 %v868
        %v1628 = vunpack.c.h.b16 %v868
        %v1629 = vunpack.c.l.b16 %v869
        %v1630 = vunpack.c.h.b16 %v869
        %v1631 = vunpack.c.l.b16 %v870
        %v1632 = vunpack.c.h.b16 %v870
        %v1633 = vunpack.c.l.b16 %v871
        %v1634 = vunpack.c.h.b16 %v871
        %v1635 = vunpack.c.l.b16 %v872
        %v1636 = vunpack.c.h.b16 %v872
        %v1637 = vunpack.c.l.b16 %v873
        %v1638 = vunpack.c.h.b16 %v873
        %v1639 = vunpack.c.l.b16 %v874
        %v1640 = vunpack.c.h.b16 %v874
        %v1641 = vunpack.c.l.b16 %v875
        %v1642 = vunpack.c.h.b16 %v875
        %v1643 = vunpack.c.l.b16 %v876
        %v1644 = vunpack.c.h.b16 %v876
        %v1645 = vunpack.c.l.b16 %v877
        %v1646 = vunpack.c.h.b16 %v877
        %v1647 = vunpack.c.l.b16 %v878
        %v1648 = vunpack.c.h.b16 %v878
        %v1649 = vunpack.c.l.b16 %v879
        %v1650 = vunpack.c.h.b16 %v879
        %v1651 = vunpack.c.l.b16 %v880
        %v1652 = vunpack.c.h.b16 %v880
        %v1653 = vunpack.c.l.b16 %v881
        %v1654 = vunpack.c.h.b16 %v881
        %v1655 = vunpack.c.l.b16 %v882
        %v1656 = vunpack.c.h.b16 %v882
        %v1657 = vunpack.c.l.b16 %v883
        %v1658 = vunpack.c.h.b16 %v883
        %v1659 = vunpack.c.l.b16 %v884
        %v1660 = vunpack.c.h.b16 %v884
        %v1661 = vunpack.c.l.b16 %v885
        %v1662 = vunpack.c.h.b16 %v885
        %v1663 = vunpack.c.l.b16 %v886
        %v1664 = vunpack.c.h.b16 %v886
        %v1665 = vpack.c.b16 %v1157, %v1153
        %v1666 = vpack.c.b16 %v1158, %v1154
        %v1667 = vpack.c.b16 %v1159, %v1155
        %v1668 = vpack.c.b16 %v1160, %v1156
        %v1669 = vpack.c.b16 %v1165, %v1161
        %v1670 = vpack.c.b16 %v1166, %v1162
        %v1671 = vpack.c.b16 %v1167, %v1163
        %v1672 = vpack.c.b16 %v1168, %v1164
        %v1673 = vpack.c.b16 %v1173, %v1169
        %v1674 = vpack.c.b16 %v1174, %v1170
        %v1675 = vpack.c.b16 %v1175, %v1171
        %v1676 = vpack.c.b16 %v1176, %v1172
        %v1677 = vpack.c.b16 %v1181, %v1177
        %v1678 = vpack.c.b16 %v1182, %v1178
        %v1679 = vpack.c.b16 %v1183, %v1179
        %v1680 = vpack.c.b16 %v1184, %v1180
        %v1681 = vpack.c.b16 %v1189, %v1185
        %v1682 = vpack.c.b16 %v1190, %v1186
        %v1683 = vpack.c.b16 %v1191, %v1187
        %v1684 = vpack.c.b16 %v1192, %v1188
        %v1685 = vpack.c.b16 %v1197, %v1193
        %v1686 = vpack.c.b16 %v1198, %v1194
        %v1687 = vpack.c.b16 %v1199, %v1195
        %v1688 = vpack.c.b16 %v1200, %v1196
        %v1689 = vpack.c.b16 %v1205, %v1201
        %v1690 = vpack.c.b16 %v1206, %v1202
        %v1691 = vpack.c.b16 %v1207, %v1203
        %v1692 = vpack.c.b16 %v1208, %v1204
        %v1693 = vpack.c.b16 %v1213, %v1209
        %v1694 = vpack.c.b16 %v1214, %v1210
        %v1695 = vpack.c.b16 %v1215, %v1211
        %v1696 = vpack.c.b16 %v1216, %v1212
        %v1697 = vpack.c.b16 %v1221, %v1217
        %v1698 = vpack.c.b16 %v1222, %v1218
        %v1699 = vpack.c.b16 %v1223, %v1219
        %v1700 = vpack.c.b16 %v1224, %v1220
        %v1701 = vpack.c.b16 %v1229, %v1225
        %v1702 = vpack.c.b16 %v1230, %v1226
        %v1703 = vpack.c.b16 %v1231, %v1227
        %v1704 = vpack.c.b16 %v1232, %v1228
        %v1705 = vpack.c.b16 %v1237, %v1233
        %v1706 = vpack.c.b16 %v1238, %v1234
        %v1707 = vpack.c.b16 %v1239, %v1235
        %v1708 = vpack.c.b16 %v1240, %v1236
        %v1709 = vpack.c.b16 %v1245, %v1241
        %v1710 = vpack.c.b16 %v1246, %v1242
        %v1711 = vpack.c.b16 %v1247, %v1243
        %v1712 = vpack.c.b16 %v1248, %v1244
        %v1713 = vpack.c.b16 %v1253, %v1249
        %v1714 = vpack.c.b16 %v1254, %v1250
        %v1715 = vpack.c.b16 %v1255, %v1251
        %v1716 = vpack.c.b16 %v1256, %v1252
        %v1717 = vpack.c.b16 %v1261, %v1257
        %v1718 = vpack.c.b16 %v1262, %v1258
        %v1719 = vpack.c.b16 %v1263, %v1259
        %v1720 = vpack.c.b16 %v1264, %v1260
        %v1721 = vpack.c.b16 %v1269, %v1265
        %v1722 = vpack.c.b16 %v1270, %v1266
        %v1723 = vpack.c.b16 %v1271, %v1267
        %v1724 = vpack.c.b16 %v1272, %v1268
        %v1725 = vpack.c.b16 %v1277, %v1273
        %v1726 = vpack.c.b16 %v1278, %v1274
        %v1727 = vpack.c.b16 %v1279, %v1275
        %v1728 = vpack.c.b16 %v1280, %v1276
        %v1729 = vpack.c.b16 %v1285, %v1281
        %v1730 = vpack.c.b16 %v1286, %v1282
        %v1731 = vpack.c.b16 %v1287, %v1283
        %v1732 = vpack.c.b16 %v1288, %v1284
        %v1733 = vpack.c.b16 %v1293, %v1289
        %v1734 = vpack.c.b16 %v1294, %v1290
        %v1735 = vpack.c.b16 %v1295, %v1291
        %v1736 = vpack.c.b16 %v1296, %v1292
        %v1737 = vpack.c.b16 %v1301, %v1297
        %v1738 = vpack.c.b16 %v1302, %v1298
        %v1739 = vpack.c.b16 %v1303, %v1299
        %v1740 = vpack.c.b16 %v1304, %v1300
        %v1741 = vpack.c.b16 %v1309, %v1305
        %v1742 = vpack.c.b16 %v1310, %v1306
        %v1743 = vpack.c.b16 %v1311, %v1307
        %v1744 = vpack.c.b16 %v1312, %v1308
        %v1745 = vpack.c.b16 %v1317, %v1313
        %v1746 = vpack.c.b16 %v1318, %v1314
        %v1747 = vpack.c.b16 %v1319, %v1315
        %v1748 = vpack.c.b16 %v1320, %v1316
        %v1749 = vpack.c.b16 %v1325, %v1321
        %v1750 = vpack.c.b16 %v1326, %v1322
        %v1751 = vpack.c.b16 %v1327, %v1323
        %v1752 = vpack.c.b16 %v1328, %v1324
        %v1753 = vpack.c.b16 %v1333, %v1329
        %v1754 = vpack.c.b16 %v1334, %v1330
        %v1755 = vpack.c.b16 %v1335, %v1331
        %v1756 = vpack.c.b16 %v1336, %v1332
        %v1757 = vpack.c.b16 %v1341, %v1337
        %v1758 = vpack.c.b16 %v1342, %v1338
        %v1759 = vpack.c.b16 %v1343, %v1339
        %v1760 = vpack.c.b16 %v1344, %v1340
        %v1761 = vpack.c.b16 %v1349, %v1345
        %v1762 = vpack.c.b16 %v1350, %v1346
        %v1763 = vpack.c.b16 %v1351, %v1347
        %v1764 = vpack.c.b16 %v1352, %v1348
        %v1765 = vpack.c.b16 %v1357, %v1353
        %v1766 = vpack.c.b16 %v1358, %v1354
        %v1767 = vpack.c.b16 %v1359, %v1355
        %v1768 = vpack.c.b16 %v1360, %v1356
        %v1769 = vpack.c.b16 %v1365, %v1361
        %v1770 = vpack.c.b16 %v1366, %v1362
        %v1771 = vpack.c.b16 %v1367, %v1363
        %v1772 = vpack.c.b16 %v1368, %v1364
        %v1773 = vpack.c.b16 %v1373, %v1369
        %v1774 = vpack.c.b16 %v1374, %v1370
        %v1775 = vpack.c.b16 %v1375, %v1371
        %v1776 = vpack.c.b16 %v1376, %v1372
        %v1777 = vpack.c.b16 %v1381, %v1377
        %v1778 = vpack.c.b16 %v1382, %v1378
        %v1779 = vpack.c.b16 %v1383, %v1379
        %v1780 = vpack.c.b16 %v1384, %v1380
        %v1781 = vpack.c.b16 %v1389, %v1385
        %v1782 = vpack.c.b16 %v1390, %v1386
        %v1783 = vpack.c.b16 %v1391, %v1387
        %v1784 = vpack.c.b16 %v1392, %v1388
        %v1785 = vpack.c.b16 %v1397, %v1393
        %v1786 = vpack.c.b16 %v1398, %v1394
        %v1787 = vpack.c.b16 %v1399, %v1395
        %v1788 = vpack.c.b16 %v1400, %v1396
        %v1789 = vpack.c.b16 %v1405, %v1401
        %v1790 = vpack.c.b16 %v1406, %v1402
        %v1791 = vpack.c.b16 %v1407, %v1403
        %v1792 = vpack.c.b16 %v1408, %v1404
        %v1793 = vpack.c.b16 %v1413, %v1409
        %v1794 = vpack.c.b16 %v1414, %v1410
        %v1795 = vpack.c.b16 %v1415, %v1411
        %v1796 = vpack.c.b16 %v1416, %v1412
        %v1797 = vpack.c.b16 %v1421, %v1417
        %v1798 = vpack.c.b16 %v1422, %v1418
        %v1799 = vpack.c.b16 %v1423, %v1419
        %v1800 = vpack.c.b16 %v1424, %v1420
        %v1801 = vpack.c.b16 %v1429, %v1425
        %v1802 = vpack.c.b16 %v1430, %v1426
        %v1803 = vpack.c.b16 %v1431, %v1427
        %v1804 = vpack.c.b16 %v1432, %v1428
        %v1805 = vpack.c.b16 %v1437, %v1433
        %v1806 = vpack.c.b16 %v1438, %v1434
        %v1807 = vpack.c.b16 %v1439, %v1435
        %v1808 = vpack.c.b16 %v1440, %v1436
        %v1809 = vpack.c.b16 %v1445, %v1441
        %v1810 = vpack.c.b16 %v1446, %v1442
        %v1811 = vpack.c.b16 %v1447, %v1443
        %v1812 = vpack.c.b16 %v1448, %v1444
        %v1813 = vpack.c.b16 %v1453, %v1449
        %v1814 = vpack.c.b16 %v1454, %v1450
        %v1815 = vpack.c.b16 %v1455, %v1451
        %v1816 = vpack.c.b16 %v1456, %v1452
        %v1817 = vpack.c.b16 %v1461, %v1457
        %v1818 = vpack.c.b16 %v1462, %v1458
        %v1819 = vpack.c.b16 %v1463, %v1459
        %v1820 = vpack.c.b16 %v1464, %v1460
        %v1821 = vpack.c.b16 %v1469, %v1465
        %v1822 = vpack.c.b16 %v1470, %v1466
        %v1823 = vpack.c.b16 %v1471, %v1467
        %v1824 = vpack.c.b16 %v1472, %v1468
        %v1825 = vpack.c.b16 %v1477, %v1473
        %v1826 = vpack.c.b16 %v1478, %v1474
        %v1827 = vpack.c.b16 %v1479, %v1475
        %v1828 = vpack.c.b16 %v1480, %v1476
        %v1829 = vpack.c.b16 %v1485, %v1481
        %v1830 = vpack.c.b16 %v1486, %v1482
        %v1831 = vpack.c.b16 %v1487, %v1483
        %v1832 = vpack.c.b16 %v1488, %v1484
        %v1833 = vpack.c.b16 %v1493, %v1489
        %v1834 = vpack.c.b16 %v1494, %v1490
        %v1835 = vpack.c.b16 %v1495, %v1491
        %v1836 = vpack.c.b16 %v1496, %v1492
        %v1837 = vpack.c.b16 %v1501, %v1497
        %v1838 = vpack.c.b16 %v1502, %v1498
        %v1839 = vpack.c.b16 %v1503, %v1499
        %v1840 = vpack.c.b16 %v1504, %v1500
        %v1841 = vpack.c.b16 %v1509, %v1505
        %v1842 = vpack.c.b16 %v1510, %v1506
        %v1843 = vpack.c.b16 %v1511, %v1507
        %v1844 = vpack.c.b16 %v1512, %v1508
        %v1845 = vpack.c.b16 %v1517, %v1513
        %v1846 = vpack.c.b16 %v1518, %v1514
        %v1847 = vpack.c.b16 %v1519, %v1515
        %v1848 = vpack.c.b16 %v1520, %v1516
        %v1849 = vpack.c.b16 %v1525, %v1521
        %v1850 = vpack.c.b16 %v1526, %v1522
        %v1851 = vpack.c.b16 %v1527, %v1523
        %v1852 = vpack.c.b16 %v1528, %v1524
        %v1853 = vpack.c.b16 %v1533, %v1529
        %v1854 = vpack.c.b16 %v1534, %v1530
        %v1855 = vpack.c.b16 %v1535, %v1531
        %v1856 = vpack.c.b16 %v1536, %v1532
        %v1857 = vpack.c.b16 %v1541, %v1537
        %v1858 = vpack.c.b16 %v1542, %v1538
        %v1859 = vpack.c.b16 %v1543, %v1539
        %v1860 = vpack.c.b16 %v1544, %v1540
        %v1861 = vpack.c.b16 %v1549, %v1545
        %v1862 = vpack.c.b16 %v1550, %v1546
        %v1863 = vpack.c.b16 %v1551, %v1547
        %v1864 = vpack.c.b16 %v1552, %v1548
        %v1865 = vpack.c.b16 %v1557, %v1553
        %v1866 = vpack.c.b16 %v1558, %v1554
        %v1867 = vpack.c.b16 %v1559, %v1555
        %v1868 = vpack.c.b16 %v1560, %v1556
        %v1869 = vpack.c.b16 %v1565, %v1561
        %v1870 = vpack.c.b16 %v1566, %v1562
        %v1871 = vpack.c.b16 %v1567, %v1563
        %v1872 = vpack.c.b16 %v1568, %v1564
        %v1873 = vpack.c.b16 %v1573, %v1569
        %v1874 = vpack.c.b16 %v1574, %v1570
        %v1875 = vpack.c.b16 %v1575, %v1571
        %v1876 = vpack.c.b16 %v1576, %v1572
        %v1877 = vpack.c.b16 %v1581, %v1577
        %v1878 = vpack.c.b16 %v1582, %v1578
        %v1879 = vpack.c.b16 %v1583, %v1579
        %v1880 = vpack.c.b16 %v1584, %v1580
        %v1881 = vpack.c.b16 %v1589, %v1585
        %v1882 = vpack.c.b16 %v1590, %v1586
        %v1883 = vpack.c.b16 %v1591, %v1587
        %v1884 = vpack.c.b16 %v1592, %v1588
        %v1885 = vpack.c.b16 %v1597, %v1593
        %v1886 = vpack.c.b16 %v1598, %v1594
        %v1887 = vpack.c.b16 %v1599, %v1595
        %v1888 = vpack.c.b16 %v1600, %v1596
        %v1889 = vpack.c.b16 %v1605, %v1601
        %v1890 = vpack.c.b16 %v1606, %v1602
        %v1891 = vpack.c.b16 %v1607, %v1603
        %v1892 = vpack.c.b16 %v1608, %v1604
        %v1893 = vpack.c.b16 %v1613, %v1609
        %v1894 = vpack.c.b16 %v1614, %v1610
        %v1895 = vpack.c.b16 %v1615, %v1611
        %v1896 = vpack.c.b16 %v1616, %v1612
        %v1897 = vpack.c.b16 %v1621, %v1617
        %v1898 = vpack.c.b16 %v1622, %v1618
        %v1899 = vpack.c.b16 %v1623, %v1619
        %v1900 = vpack.c.b16 %v1624, %v1620
        %v1901 = vpack.c.b16 %v1629, %v1625
        %v1902 = vpack.c.b16 %v1630, %v1626
        %v1903 = vpack.c.b16 %v1631, %v1627
        %v1904 = vpack.c.b16 %v1632, %v1628
        %v1905 = vpack.c.b16 %v1637, %v1633
        %v1906 = vpack.c.b16 %v1638, %v1634
        %v1907 = vpack.c.b16 %v1639, %v1635
        %v1908 = vpack.c.b16 %v1640, %v1636
        %v1909 = vpack.c.b16 %v1645, %v1641
        %v1910 = vpack.c.b16 %v1646, %v1642
        %v1911 = vpack.c.b16 %v1647, %v1643
        %v1912 = vpack.c.b16 %v1648, %v1644
        %v1913 = vpack.c.b16 %v1653, %v1649
        %v1914 = vpack.c.b16 %v1654, %v1650
        %v1915 = vpack.c.b16 %v1655, %v1651
        %v1916 = vpack.c.b16 %v1656, %v1652
        %v1917 = vpack.c.b16 %v1661, %v1657
        %v1918 = vpack.c.b16 %v1662, %v1658
        %v1919 = vpack.c.b16 %v1663, %v1659
        %v1920 = vpack.c.b16 %v1664, %v1660
        %2177 = vmatpush.bf16.msra.mxu0 %v1693
        %2178 = vmatpush.bf16.msra.mxu0 %v1689
        %2179 = vmatpush.bf16.msra.mxu0 %v1685
        %2180 = vmatpush.bf16.msra.mxu0 %v1681
        %2181 = vmatpush.bf16.msra.mxu0 %v1677
        %2182 = vmatpush.bf16.msra.mxu0 %v1673
        %2183 = vmatpush.bf16.msra.mxu0 %v1669
        %2184 = vmatpush.bf16.msra.mxu0 %v1665
        %2185 = vmatmul.bf16.gmra.mxu0 %v567
        %v2186 = vpop.f32.mrf.mxu0
        %v2187 = vadd.f32 %v889, %v2186
        %v2188 = vpop.f32.mrf.mxu0
        %v2189 = vadd.f32 %v889, %v2188
        %2190 = vmatmul.bf16.gmra.mxu0 %v575
        %v2191 = vpop.f32.mrf.mxu0
        %v2192 = vadd.f32 %v889, %v2191
        %v2193 = vpop.f32.mrf.mxu0
        %v2194 = vadd.f32 %v889, %v2193
        %2195 = vmatmul.bf16.gmra.mxu0 %v583
        %v2196 = vpop.f32.mrf.mxu0
        %v2197 = vadd.f32 %v889, %v2196
        %v2198 = vpop.f32.mrf.mxu0
        %v2199 = vadd.f32 %v889, %v2198
        %2200 = vmatmul.bf16.gmra.mxu0 %v591
        %v2201 = vpop.f32.mrf.mxu0
        %v2202 = vadd.f32 %v889, %v2201
        %v2203 = vpop.f32.mrf.mxu0
        %v2204 = vadd.f32 %v889, %v2203
        %2205 = vmatmul.bf16.gmra.mxu0 %v599
        %v2206 = vpop.f32.mrf.mxu0
        %v2207 = vadd.f32 %v889, %v2206
        %v2208 = vpop.f32.mrf.mxu0
        %v2209 = vadd.f32 %v889, %v2208
        %2210 = vmatmul.bf16.gmra.mxu0 %v607
        %v2211 = vpop.f32.mrf.mxu0
        %v2212 = vadd.f32 %v889, %v2211
        %v2213 = vpop.f32.mrf.mxu0
        %v2214 = vadd.f32 %v889, %v2213
        %2215 = vmatmul.bf16.gmra.mxu0 %v615
        %v2216 = vpop.f32.mrf.mxu0
        %v2217 = vadd.f32 %v889, %v2216
        %v2218 = vpop.f32.mrf.mxu0
        %v2219 = vadd.f32 %v889, %v2218
        %2220 = vmatmul.bf16.gmra.mxu0 %v623
        %v2221 = vpop.f32.mrf.mxu0
        %v2222 = vadd.f32 %v889, %v2221
        %v2223 = vpop.f32.mrf.mxu0
        %v2224 = vadd.f32 %v889, %v2223
        %2225 = vdwg.mxu0
        %2226 = vmatpush.bf16.msra.mxu0 %v1725
        %2227 = vmatpush.bf16.msra.mxu0 %v1721
        %2228 = vmatpush.bf16.msra.mxu0 %v1717
        %2229 = vmatpush.bf16.msra.mxu0 %v1713
        %2230 = vmatpush.bf16.msra.mxu0 %v1709
        %2231 = vmatpush.bf16.msra.mxu0 %v1705
        %2232 = vmatpush.bf16.msra.mxu0 %v1701
        %2233 = vmatpush.bf16.msra.mxu0 %v1697
        %2234 = vmatmul.bf16.gmra.mxu0 %v568
        %v2235 = vpop.f32.mrf.mxu0
        %v2236 = vadd.f32 %v2187, %v2235
        %v2237 = vpop.f32.mrf.mxu0
        %v2238 = vadd.f32 %v2189, %v2237
        %2239 = vmatmul.bf16.gmra.mxu0 %v576
        %v2240 = vpop.f32.mrf.mxu0
        %v2241 = vadd.f32 %v2192, %v2240
        %v2242 = vpop.f32.mrf.mxu0
        %v2243 = vadd.f32 %v2194, %v2242
        %2244 = vmatmul.bf16.gmra.mxu0 %v584
        %v2245 = vpop.f32.mrf.mxu0
        %v2246 = vadd.f32 %v2197, %v2245
        %v2247 = vpop.f32.mrf.mxu0
        %v2248 = vadd.f32 %v2199, %v2247
        %2249 = vmatmul.bf16.gmra.mxu0 %v592
        %v2250 = vpop.f32.mrf.mxu0
        %v2251 = vadd.f32 %v2202, %v2250
        %v2252 = vpop.f32.mrf.mxu0
        %v2253 = vadd.f32 %v2204, %v2252
        %2254 = vmatmul.bf16.gmra.mxu0 %v600
        %v2255 = vpop.f32.mrf.mxu0
        %v2256 = vadd.f32 %v2207, %v2255
        %v2257 = vpop.f32.mrf.mxu0
        %v2258 = vadd.f32 %v2209, %v2257
        %2259 = vmatmul.bf16.gmra.mxu0 %v608
        %v2260 = vpop.f32.mrf.mxu0
        %v2261 = vadd.f32 %v2212, %v2260
        %v2262 = vpop.f32.mrf.mxu0
        %v2263 = vadd.f32 %v2214, %v2262
        %2264 = vmatmul.bf16.gmra.mxu0 %v616
        %v2265 = vpop.f32.mrf.mxu0
        %v2266 = vadd.f32 %v2217, %v2265
        %v2267 = vpop.f32.mrf.mxu0
        %v2268 = vadd.f32 %v2219, %v2267
        %2269 = vmatmul.bf16.gmra.mxu0 %v624
        %v2270 = vpop.f32.mrf.mxu0
        %v2271 = vadd.f32 %v2222, %v2270
        %v2272 = vpop.f32.mrf.mxu0
        %v2273 = vadd.f32 %v2224, %v2272
        %2274 = vdwg.mxu0
        %2275 = vmatpush.bf16.msra.mxu0 %v1757
        %2276 = vmatpush.bf16.msra.mxu0 %v1753
        %2277 = vmatpush.bf16.msra.mxu0 %v1749
        %2278 = vmatpush.bf16.msra.mxu0 %v1745
        %2279 = vmatpush.bf16.msra.mxu0 %v1741
        %2280 = vmatpush.bf16.msra.mxu0 %v1737
        %2281 = vmatpush.bf16.msra.mxu0 %v1733
        %2282 = vmatpush.bf16.msra.mxu0 %v1729
        %2283 = vmatmul.bf16.gmra.mxu0 %v569
        %v2284 = vpop.f32.mrf.mxu0
        %v2285 = vadd.f32 %v2236, %v2284
        %v2286 = vpop.f32.mrf.mxu0
        %v2287 = vadd.f32 %v2238, %v2286
        %2288 = vmatmul.bf16.gmra.mxu0 %v577
        %v2289 = vpop.f32.mrf.mxu0
        %v2290 = vadd.f32 %v2241, %v2289
        %v2291 = vpop.f32.mrf.mxu0
        %v2292 = vadd.f32 %v2243, %v2291
        %2293 = vmatmul.bf16.gmra.mxu0 %v585
        %v2294 = vpop.f32.mrf.mxu0
        %v2295 = vadd.f32 %v2246, %v2294
        %v2296 = vpop.f32.mrf.mxu0
        %v2297 = vadd.f32 %v2248, %v2296
        %2298 = vmatmul.bf16.gmra.mxu0 %v593
        %v2299 = vpop.f32.mrf.mxu0
        %v2300 = vadd.f32 %v2251, %v2299
        %v2301 = vpop.f32.mrf.mxu0
        %v2302 = vadd.f32 %v2253, %v2301
        %2303 = vmatmul.bf16.gmra.mxu0 %v601
        %v2304 = vpop.f32.mrf.mxu0
        %v2305 = vadd.f32 %v2256, %v2304
        %v2306 = vpop.f32.mrf.mxu0
        %v2307 = vadd.f32 %v2258, %v2306
        %2308 = vmatmul.bf16.gmra.mxu0 %v609
        %v2309 = vpop.f32.mrf.mxu0
        %v2310 = vadd.f32 %v2261, %v2309
        %v2311 = vpop.f32.mrf.mxu0
        %v2312 = vadd.f32 %v2263, %v2311
        %2313 = vmatmul.bf16.gmra.mxu0 %v617
        %v2314 = vpop.f32.mrf.mxu0
        %v2315 = vadd.f32 %v2266, %v2314
        %v2316 = vpop.f32.mrf.mxu0
        %v2317 = vadd.f32 %v2268, %v2316
        %2318 = vmatmul.bf16.gmra.mxu0 %v625
        %v2319 = vpop.f32.mrf.mxu0
        %v2320 = vadd.f32 %v2271, %v2319
        %v2321 = vpop.f32.mrf.mxu0
        %v2322 = vadd.f32 %v2273, %v2321
        %2323 = vdwg.mxu0
        %2324 = vmatpush.bf16.msra.mxu0 %v1789
        %2325 = vmatpush.bf16.msra.mxu0 %v1785
        %2326 = vmatpush.bf16.msra.mxu0 %v1781
        %2327 = vmatpush.bf16.msra.mxu0 %v1777
        %2328 = vmatpush.bf16.msra.mxu0 %v1773
        %2329 = vmatpush.bf16.msra.mxu0 %v1769
        %2330 = vmatpush.bf16.msra.mxu0 %v1765
        %2331 = vmatpush.bf16.msra.mxu0 %v1761
        %2332 = vmatmul.bf16.gmra.mxu0 %v570
        %v2333 = vpop.f32.mrf.mxu0
        %v2334 = vadd.f32 %v2285, %v2333
        %v2335 = vpop.f32.mrf.mxu0
        %v2336 = vadd.f32 %v2287, %v2335
        %2337 = vmatmul.bf16.gmra.mxu0 %v578
        %v2338 = vpop.f32.mrf.mxu0
        %v2339 = vadd.f32 %v2290, %v2338
        %v2340 = vpop.f32.mrf.mxu0
        %v2341 = vadd.f32 %v2292, %v2340
        %2342 = vmatmul.bf16.gmra.mxu0 %v586
        %v2343 = vpop.f32.mrf.mxu0
        %v2344 = vadd.f32 %v2295, %v2343
        %v2345 = vpop.f32.mrf.mxu0
        %v2346 = vadd.f32 %v2297, %v2345
        %2347 = vmatmul.bf16.gmra.mxu0 %v594
        %v2348 = vpop.f32.mrf.mxu0
        %v2349 = vadd.f32 %v2300, %v2348
        %v2350 = vpop.f32.mrf.mxu0
        %v2351 = vadd.f32 %v2302, %v2350
        %2352 = vmatmul.bf16.gmra.mxu0 %v602
        %v2353 = vpop.f32.mrf.mxu0
        %v2354 = vadd.f32 %v2305, %v2353
        %v2355 = vpop.f32.mrf.mxu0
        %v2356 = vadd.f32 %v2307, %v2355
        %2357 = vmatmul.bf16.gmra.mxu0 %v610
        %v2358 = vpop.f32.mrf.mxu0
        %v2359 = vadd.f32 %v2310, %v2358
        %v2360 = vpop.f32.mrf.mxu0
        %v2361 = vadd.f32 %v2312, %v2360
        %2362 = vmatmul.bf16.gmra.mxu0 %v618
        %v2363 = vpop.f32.mrf.mxu0
        %v2364 = vadd.f32 %v2315, %v2363
        %v2365 = vpop.f32.mrf.mxu0
        %v2366 = vadd.f32 %v2317, %v2365
        %2367 = vmatmul.bf16.gmra.mxu0 %v626
        %v2368 = vpop.f32.mrf.mxu0
        %v2369 = vadd.f32 %v2320, %v2368
        %v2370 = vpop.f32.mrf.mxu0
        %v2371 = vadd.f32 %v2322, %v2370
        %2372 = vdwg.mxu0
        %2373 = vmatpush.bf16.msra.mxu0 %v1821
        %2374 = vmatpush.bf16.msra.mxu0 %v1817
        %2375 = vmatpush.bf16.msra.mxu0 %v1813
        %2376 = vmatpush.bf16.msra.mxu0 %v1809
        %2377 = vmatpush.bf16.msra.mxu0 %v1805
        %2378 = vmatpush.bf16.msra.mxu0 %v1801
        %2379 = vmatpush.bf16.msra.mxu0 %v1797
        %2380 = vmatpush.bf16.msra.mxu0 %v1793
        %2381 = vmatmul.bf16.gmra.mxu0 %v571
        %v2382 = vpop.f32.mrf.mxu0
        %v2383 = vadd.f32 %v2334, %v2382
        %v2384 = vpop.f32.mrf.mxu0
        %v2385 = vadd.f32 %v2336, %v2384
        %2386 = vmatmul.bf16.gmra.mxu0 %v579
        %v2387 = vpop.f32.mrf.mxu0
        %v2388 = vadd.f32 %v2339, %v2387
        %v2389 = vpop.f32.mrf.mxu0
        %v2390 = vadd.f32 %v2341, %v2389
        %2391 = vmatmul.bf16.gmra.mxu0 %v587
        %v2392 = vpop.f32.mrf.mxu0
        %v2393 = vadd.f32 %v2344, %v2392
        %v2394 = vpop.f32.mrf.mxu0
        %v2395 = vadd.f32 %v2346, %v2394
        %2396 = vmatmul.bf16.gmra.mxu0 %v595
        %v2397 = vpop.f32.mrf.mxu0
        %v2398 = vadd.f32 %v2349, %v2397
        %v2399 = vpop.f32.mrf.mxu0
        %v2400 = vadd.f32 %v2351, %v2399
        %2401 = vmatmul.bf16.gmra.mxu0 %v603
        %v2402 = vpop.f32.mrf.mxu0
        %v2403 = vadd.f32 %v2354, %v2402
        %v2404 = vpop.f32.mrf.mxu0
        %v2405 = vadd.f32 %v2356, %v2404
        %2406 = vmatmul.bf16.gmra.mxu0 %v611
        %v2407 = vpop.f32.mrf.mxu0
        %v2408 = vadd.f32 %v2359, %v2407
        %v2409 = vpop.f32.mrf.mxu0
        %v2410 = vadd.f32 %v2361, %v2409
        %2411 = vmatmul.bf16.gmra.mxu0 %v619
        %v2412 = vpop.f32.mrf.mxu0
        %v2413 = vadd.f32 %v2364, %v2412
        %v2414 = vpop.f32.mrf.mxu0
        %v2415 = vadd.f32 %v2366, %v2414
        %2416 = vmatmul.bf16.gmra.mxu0 %v627
        %v2417 = vpop.f32.mrf.mxu0
        %v2418 = vadd.f32 %v2369, %v2417
        %v2419 = vpop.f32.mrf.mxu0
        %v2420 = vadd.f32 %v2371, %v2419
        %2421 = vdwg.mxu0
        %2422 = vmatpush.bf16.msra.mxu0 %v1853
        %2423 = vmatpush.bf16.msra.mxu0 %v1849
        %2424 = vmatpush.bf16.msra.mxu0 %v1845
        %2425 = vmatpush.bf16.msra.mxu0 %v1841
        %2426 = vmatpush.bf16.msra.mxu0 %v1837
        %2427 = vmatpush.bf16.msra.mxu0 %v1833
        %2428 = vmatpush.bf16.msra.mxu0 %v1829
        %2429 = vmatpush.bf16.msra.mxu0 %v1825
        %2430 = vmatmul.bf16.gmra.mxu0 %v572
        %v2431 = vpop.f32.mrf.mxu0
        %v2432 = vadd.f32 %v2383, %v2431
        %v2433 = vpop.f32.mrf.mxu0
        %v2434 = vadd.f32 %v2385, %v2433
        %2435 = vmatmul.bf16.gmra.mxu0 %v580
        %v2436 = vpop.f32.mrf.mxu0
        %v2437 = vadd.f32 %v2388, %v2436
        %v2438 = vpop.f32.mrf.mxu0
        %v2439 = vadd.f32 %v2390, %v2438
        %2440 = vmatmul.bf16.gmra.mxu0 %v588
        %v2441 = vpop.f32.mrf.mxu0
        %v2442 = vadd.f32 %v2393, %v2441
        %v2443 = vpop.f32.mrf.mxu0
        %v2444 = vadd.f32 %v2395, %v2443
        %2445 = vmatmul.bf16.gmra.mxu0 %v596
        %v2446 = vpop.f32.mrf.mxu0
        %v2447 = vadd.f32 %v2398, %v2446
        %v2448 = vpop.f32.mrf.mxu0
        %v2449 = vadd.f32 %v2400, %v2448
        %2450 = vmatmul.bf16.gmra.mxu0 %v604
        %v2451 = vpop.f32.mrf.mxu0
        %v2452 = vadd.f32 %v2403, %v2451
        %v2453 = vpop.f32.mrf.mxu0
        %v2454 = vadd.f32 %v2405, %v2453
        %2455 = vmatmul.bf16.gmra.mxu0 %v612
        %v2456 = vpop.f32.mrf.mxu0
        %v2457 = vadd.f32 %v2408, %v2456
        %v2458 = vpop.f32.mrf.mxu0
        %v2459 = vadd.f32 %v2410, %v2458
        %2460 = vmatmul.bf16.gmra.mxu0 %v620
        %v2461 = vpop.f32.mrf.mxu0
        %v2462 = vadd.f32 %v2413, %v2461
        %v2463 = vpop.f32.mrf.mxu0
        %v2464 = vadd.f32 %v2415, %v2463
        %2465 = vmatmul.bf16.gmra.mxu0 %v628
        %v2466 = vpop.f32.mrf.mxu0
        %v2467 = vadd.f32 %v2418, %v2466
        %v2468 = vpop.f32.mrf.mxu0
        %v2469 = vadd.f32 %v2420, %v2468
        %2470 = vdwg.mxu0
        %2471 = vmatpush.bf16.msra.mxu0 %v1885
        %2472 = vmatpush.bf16.msra.mxu0 %v1881
        %2473 = vmatpush.bf16.msra.mxu0 %v1877
        %2474 = vmatpush.bf16.msra.mxu0 %v1873
        %2475 = vmatpush.bf16.msra.mxu0 %v1869
        %2476 = vmatpush.bf16.msra.mxu0 %v1865
        %2477 = vmatpush.bf16.msra.mxu0 %v1861
        %2478 = vmatpush.bf16.msra.mxu0 %v1857
        %2479 = vmatmul.bf16.gmra.mxu0 %v573
        %v2480 = vpop.f32.mrf.mxu0
        %v2481 = vadd.f32 %v2432, %v2480
        %v2482 = vpop.f32.mrf.mxu0
        %v2483 = vadd.f32 %v2434, %v2482
        %2484 = vmatmul.bf16.gmra.mxu0 %v581
        %v2485 = vpop.f32.mrf.mxu0
        %v2486 = vadd.f32 %v2437, %v2485
        %v2487 = vpop.f32.mrf.mxu0
        %v2488 = vadd.f32 %v2439, %v2487
        %2489 = vmatmul.bf16.gmra.mxu0 %v589
        %v2490 = vpop.f32.mrf.mxu0
        %v2491 = vadd.f32 %v2442, %v2490
        %v2492 = vpop.f32.mrf.mxu0
        %v2493 = vadd.f32 %v2444, %v2492
        %2494 = vmatmul.bf16.gmra.mxu0 %v597
        %v2495 = vpop.f32.mrf.mxu0
        %v2496 = vadd.f32 %v2447, %v2495
        %v2497 = vpop.f32.mrf.mxu0
        %v2498 = vadd.f32 %v2449, %v2497
        %2499 = vmatmul.bf16.gmra.mxu0 %v605
        %v2500 = vpop.f32.mrf.mxu0
        %v2501 = vadd.f32 %v2452, %v2500
        %v2502 = vpop.f32.mrf.mxu0
        %v2503 = vadd.f32 %v2454, %v2502
        %2504 = vmatmul.bf16.gmra.mxu0 %v613
        %v2505 = vpop.f32.mrf.mxu0
        %v2506 = vadd.f32 %v2457, %v2505
        %v2507 = vpop.f32.mrf.mxu0
        %v2508 = vadd.f32 %v2459, %v2507
        %2509 = vmatmul.bf16.gmra.mxu0 %v621
        %v2510 = vpop.f32.mrf.mxu0
        %v2511 = vadd.f32 %v2462, %v2510
        %v2512 = vpop.f32.mrf.mxu0
        %v2513 = vadd.f32 %v2464, %v2512
        %2514 = vmatmul.bf16.gmra.mxu0 %v629
        %v2515 = vpop.f32.mrf.mxu0
        %v2516 = vadd.f32 %v2467, %v2515
        %v2517 = vpop.f32.mrf.mxu0
        %v2518 = vadd.f32 %v2469, %v2517
        %2519 = vdwg.mxu0
        %2520 = vmatpush.bf16.msra.mxu0 %v1917
        %2521 = vmatpush.bf16.msra.mxu0 %v1913
        %2522 = vmatpush.bf16.msra.mxu0 %v1909
        %2523 = vmatpush.bf16.msra.mxu0 %v1905
        %2524 = vmatpush.bf16.msra.mxu0 %v1901
        %2525 = vmatpush.bf16.msra.mxu0 %v1897
        %2526 = vmatpush.bf16.msra.mxu0 %v1893
        %2527 = vmatpush.bf16.msra.mxu0 %v1889
        %2528 = vmatmul.bf16.gmra.mxu0 %v574
        %v2529 = vpop.f32.mrf.mxu0
        %v2530 = vadd.f32 %v2481, %v2529
        %v2531 = vpop.f32.mrf.mxu0
        %v2532 = vadd.f32 %v2483, %v2531
        %2533 = vmatmul.bf16.gmra.mxu0 %v582
        %v2534 = vpop.f32.mrf.mxu0
        %v2535 = vadd.f32 %v2486, %v2534
        %v2536 = vpop.f32.mrf.mxu0
        %v2537 = vadd.f32 %v2488, %v2536
        %2538 = vmatmul.bf16.gmra.mxu0 %v590
        %v2539 = vpop.f32.mrf.mxu0
        %v2540 = vadd.f32 %v2491, %v2539
        %v2541 = vpop.f32.mrf.mxu0
        %v2542 = vadd.f32 %v2493, %v2541
        %2543 = vmatmul.bf16.gmra.mxu0 %v598
        %v2544 = vpop.f32.mrf.mxu0
        %v2545 = vadd.f32 %v2496, %v2544
        %v2546 = vpop.f32.mrf.mxu0
        %v2547 = vadd.f32 %v2498, %v2546
        %2548 = vmatmul.bf16.gmra.mxu0 %v606
        %v2549 = vpop.f32.mrf.mxu0
        %v2550 = vadd.f32 %v2501, %v2549
        %v2551 = vpop.f32.mrf.mxu0
        %v2552 = vadd.f32 %v2503, %v2551
        %2553 = vmatmul.bf16.gmra.mxu0 %v614
        %v2554 = vpop.f32.mrf.mxu0
        %v2555 = vadd.f32 %v2506, %v2554
        %v2556 = vpop.f32.mrf.mxu0
        %v2557 = vadd.f32 %v2508, %v2556
        %2558 = vmatmul.bf16.gmra.mxu0 %v622
        %v2559 = vpop.f32.mrf.mxu0
        %v2560 = vadd.f32 %v2511, %v2559
        %v2561 = vpop.f32.mrf.mxu0
        %v2562 = vadd.f32 %v2513, %v2561
        %2563 = vmatmul.bf16.gmra.mxu0 %v630
        %v2564 = vpop.f32.mrf.mxu0
        %v2565 = vadd.f32 %v2516, %v2564
        %v2566 = vpop.f32.mrf.mxu0
        %v2567 = vadd.f32 %v2518, %v2566
        %2568 = vdwg.mxu0
        %2569 = vmatpush.bf16.msra.mxu0 %v1694
        %2570 = vmatpush.bf16.msra.mxu0 %v1690
        %2571 = vmatpush.bf16.msra.mxu0 %v1686
        %2572 = vmatpush.bf16.msra.mxu0 %v1682
        %2573 = vmatpush.bf16.msra.mxu0 %v1678
        %2574 = vmatpush.bf16.msra.mxu0 %v1674
        %2575 = vmatpush.bf16.msra.mxu0 %v1670
        %2576 = vmatpush.bf16.msra.mxu0 %v1666
        %2577 = vmatmul.bf16.gmra.mxu0 %v567
        %v2578 = vpop.f32.mrf.mxu0
        %v2579 = vadd.f32 %v890, %v2578
        %v2580 = vpop.f32.mrf.mxu0
        %v2581 = vadd.f32 %v890, %v2580
        %2582 = vmatmul.bf16.gmra.mxu0 %v575
        %v2583 = vpop.f32.mrf.mxu0
        %v2584 = vadd.f32 %v890, %v2583
        %v2585 = vpop.f32.mrf.mxu0
        %v2586 = vadd.f32 %v890, %v2585
        %2587 = vmatmul.bf16.gmra.mxu0 %v583
        %v2588 = vpop.f32.mrf.mxu0
        %v2589 = vadd.f32 %v890, %v2588
        %v2590 = vpop.f32.mrf.mxu0
        %v2591 = vadd.f32 %v890, %v2590
        %2592 = vmatmul.bf16.gmra.mxu0 %v591
        %v2593 = vpop.f32.mrf.mxu0
        %v2594 = vadd.f32 %v890, %v2593
        %v2595 = vpop.f32.mrf.mxu0
        %v2596 = vadd.f32 %v890, %v2595
        %2597 = vmatmul.bf16.gmra.mxu0 %v599
        %v2598 = vpop.f32.mrf.mxu0
        %v2599 = vadd.f32 %v890, %v2598
        %v2600 = vpop.f32.mrf.mxu0
        %v2601 = vadd.f32 %v890, %v2600
        %2602 = vmatmul.bf16.gmra.mxu0 %v607
        %v2603 = vpop.f32.mrf.mxu0
        %v2604 = vadd.f32 %v890, %v2603
        %v2605 = vpop.f32.mrf.mxu0
        %v2606 = vadd.f32 %v890, %v2605
        %2607 = vmatmul.bf16.gmra.mxu0 %v615
        %v2608 = vpop.f32.mrf.mxu0
        %v2609 = vadd.f32 %v890, %v2608
        %v2610 = vpop.f32.mrf.mxu0
        %v2611 = vadd.f32 %v890, %v2610
        %2612 = vmatmul.bf16.gmra.mxu0 %v623
        %v2613 = vpop.f32.mrf.mxu0
        %v2614 = vadd.f32 %v890, %v2613
        %v2615 = vpop.f32.mrf.mxu0
        %v2616 = vadd.f32 %v890, %v2615
        %2617 = vdwg.mxu0
        %2618 = vmatpush.bf16.msra.mxu0 %v1726
        %2619 = vmatpush.bf16.msra.mxu0 %v1722
        %2620 = vmatpush.bf16.msra.mxu0 %v1718
        %2621 = vmatpush.bf16.msra.mxu0 %v1714
        %2622 = vmatpush.bf16.msra.mxu0 %v1710
        %2623 = vmatpush.bf16.msra.mxu0 %v1706
        %2624 = vmatpush.bf16.msra.mxu0 %v1702
        %2625 = vmatpush.bf16.msra.mxu0 %v1698
        %2626 = vmatmul.bf16.gmra.mxu0 %v568
        %v2627 = vpop.f32.mrf.mxu0
        %v2628 = vadd.f32 %v2579, %v2627
        %v2629 = vpop.f32.mrf.mxu0
        %v2630 = vadd.f32 %v2581, %v2629
        %2631 = vmatmul.bf16.gmra.mxu0 %v576
        %v2632 = vpop.f32.mrf.mxu0
        %v2633 = vadd.f32 %v2584, %v2632
        %v2634 = vpop.f32.mrf.mxu0
        %v2635 = vadd.f32 %v2586, %v2634
        %2636 = vmatmul.bf16.gmra.mxu0 %v584
        %v2637 = vpop.f32.mrf.mxu0
        %v2638 = vadd.f32 %v2589, %v2637
        %v2639 = vpop.f32.mrf.mxu0
        %v2640 = vadd.f32 %v2591, %v2639
        %2641 = vmatmul.bf16.gmra.mxu0 %v592
        %v2642 = vpop.f32.mrf.mxu0
        %v2643 = vadd.f32 %v2594, %v2642
        %v2644 = vpop.f32.mrf.mxu0
        %v2645 = vadd.f32 %v2596, %v2644
        %2646 = vmatmul.bf16.gmra.mxu0 %v600
        %v2647 = vpop.f32.mrf.mxu0
        %v2648 = vadd.f32 %v2599, %v2647
        %v2649 = vpop.f32.mrf.mxu0
        %v2650 = vadd.f32 %v2601, %v2649
        %2651 = vmatmul.bf16.gmra.mxu0 %v608
        %v2652 = vpop.f32.mrf.mxu0
        %v2653 = vadd.f32 %v2604, %v2652
        %v2654 = vpop.f32.mrf.mxu0
        %v2655 = vadd.f32 %v2606, %v2654
        %2656 = vmatmul.bf16.gmra.mxu0 %v616
        %v2657 = vpop.f32.mrf.mxu0
        %v2658 = vadd.f32 %v2609, %v2657
        %v2659 = vpop.f32.mrf.mxu0
        %v2660 = vadd.f32 %v2611, %v2659
        %2661 = vmatmul.bf16.gmra.mxu0 %v624
        %v2662 = vpop.f32.mrf.mxu0
        %v2663 = vadd.f32 %v2614, %v2662
        %v2664 = vpop.f32.mrf.mxu0
        %v2665 = vadd.f32 %v2616, %v2664
        %2666 = vdwg.mxu0
        %2667 = vmatpush.bf16.msra.mxu0 %v1758
        %2668 = vmatpush.bf16.msra.mxu0 %v1754
        %2669 = vmatpush.bf16.msra.mxu0 %v1750
        %2670 = vmatpush.bf16.msra.mxu0 %v1746
        %2671 = vmatpush.bf16.msra.mxu0 %v1742
        %2672 = vmatpush.bf16.msra.mxu0 %v1738
        %2673 = vmatpush.bf16.msra.mxu0 %v1734
        %2674 = vmatpush.bf16.msra.mxu0 %v1730
        %2675 = vmatmul.bf16.gmra.mxu0 %v569
        %v2676 = vpop.f32.mrf.mxu0
        %v2677 = vadd.f32 %v2628, %v2676
        %v2678 = vpop.f32.mrf.mxu0
        %v2679 = vadd.f32 %v2630, %v2678
        %2680 = vmatmul.bf16.gmra.mxu0 %v577
        %v2681 = vpop.f32.mrf.mxu0
        %v2682 = vadd.f32 %v2633, %v2681
        %v2683 = vpop.f32.mrf.mxu0
        %v2684 = vadd.f32 %v2635, %v2683
        %2685 = vmatmul.bf16.gmra.mxu0 %v585
        %v2686 = vpop.f32.mrf.mxu0
        %v2687 = vadd.f32 %v2638, %v2686
        %v2688 = vpop.f32.mrf.mxu0
        %v2689 = vadd.f32 %v2640, %v2688
        %2690 = vmatmul.bf16.gmra.mxu0 %v593
        %v2691 = vpop.f32.mrf.mxu0
        %v2692 = vadd.f32 %v2643, %v2691
        %v2693 = vpop.f32.mrf.mxu0
        %v2694 = vadd.f32 %v2645, %v2693
        %2695 = vmatmul.bf16.gmra.mxu0 %v601
        %v2696 = vpop.f32.mrf.mxu0
        %v2697 = vadd.f32 %v2648, %v2696
        %v2698 = vpop.f32.mrf.mxu0
        %v2699 = vadd.f32 %v2650, %v2698
        %2700 = vmatmul.bf16.gmra.mxu0 %v609
        %v2701 = vpop.f32.mrf.mxu0
        %v2702 = vadd.f32 %v2653, %v2701
        %v2703 = vpop.f32.mrf.mxu0
        %v2704 = vadd.f32 %v2655, %v2703
        %2705 = vmatmul.bf16.gmra.mxu0 %v617
        %v2706 = vpop.f32.mrf.mxu0
        %v2707 = vadd.f32 %v2658, %v2706
        %v2708 = vpop.f32.mrf.mxu0
        %v2709 = vadd.f32 %v2660, %v2708
        %2710 = vmatmul.bf16.gmra.mxu0 %v625
        %v2711 = vpop.f32.mrf.mxu0
        %v2712 = vadd.f32 %v2663, %v2711
        %v2713 = vpop.f32.mrf.mxu0
        %v2714 = vadd.f32 %v2665, %v2713
        %2715 = vdwg.mxu0
        %2716 = vmatpush.bf16.msra.mxu0 %v1790
        %2717 = vmatpush.bf16.msra.mxu0 %v1786
        %2718 = vmatpush.bf16.msra.mxu0 %v1782
        %2719 = vmatpush.bf16.msra.mxu0 %v1778
        %2720 = vmatpush.bf16.msra.mxu0 %v1774
        %2721 = vmatpush.bf16.msra.mxu0 %v1770
        %2722 = vmatpush.bf16.msra.mxu0 %v1766
        %2723 = vmatpush.bf16.msra.mxu0 %v1762
        %2724 = vmatmul.bf16.gmra.mxu0 %v570
        %v2725 = vpop.f32.mrf.mxu0
        %v2726 = vadd.f32 %v2677, %v2725
        %v2727 = vpop.f32.mrf.mxu0
        %v2728 = vadd.f32 %v2679, %v2727
        %2729 = vmatmul.bf16.gmra.mxu0 %v578
        %v2730 = vpop.f32.mrf.mxu0
        %v2731 = vadd.f32 %v2682, %v2730
        %v2732 = vpop.f32.mrf.mxu0
        %v2733 = vadd.f32 %v2684, %v2732
        %2734 = vmatmul.bf16.gmra.mxu0 %v586
        %v2735 = vpop.f32.mrf.mxu0
        %v2736 = vadd.f32 %v2687, %v2735
        %v2737 = vpop.f32.mrf.mxu0
        %v2738 = vadd.f32 %v2689, %v2737
        %2739 = vmatmul.bf16.gmra.mxu0 %v594
        %v2740 = vpop.f32.mrf.mxu0
        %v2741 = vadd.f32 %v2692, %v2740
        %v2742 = vpop.f32.mrf.mxu0
        %v2743 = vadd.f32 %v2694, %v2742
        %2744 = vmatmul.bf16.gmra.mxu0 %v602
        %v2745 = vpop.f32.mrf.mxu0
        %v2746 = vadd.f32 %v2697, %v2745
        %v2747 = vpop.f32.mrf.mxu0
        %v2748 = vadd.f32 %v2699, %v2747
        %2749 = vmatmul.bf16.gmra.mxu0 %v610
        %v2750 = vpop.f32.mrf.mxu0
        %v2751 = vadd.f32 %v2702, %v2750
        %v2752 = vpop.f32.mrf.mxu0
        %v2753 = vadd.f32 %v2704, %v2752
        %2754 = vmatmul.bf16.gmra.mxu0 %v618
        %v2755 = vpop.f32.mrf.mxu0
        %v2756 = vadd.f32 %v2707, %v2755
        %v2757 = vpop.f32.mrf.mxu0
        %v2758 = vadd.f32 %v2709, %v2757
        %2759 = vmatmul.bf16.gmra.mxu0 %v626
        %v2760 = vpop.f32.mrf.mxu0
        %v2761 = vadd.f32 %v2712, %v2760
        %v2762 = vpop.f32.mrf.mxu0
        %v2763 = vadd.f32 %v2714, %v2762
        %2764 = vdwg.mxu0
        %2765 = vmatpush.bf16.msra.mxu0 %v1822
        %2766 = vmatpush.bf16.msra.mxu0 %v1818
        %2767 = vmatpush.bf16.msra.mxu0 %v1814
        %2768 = vmatpush.bf16.msra.mxu0 %v1810
        %2769 = vmatpush.bf16.msra.mxu0 %v1806
        %2770 = vmatpush.bf16.msra.mxu0 %v1802
        %2771 = vmatpush.bf16.msra.mxu0 %v1798
        %2772 = vmatpush.bf16.msra.mxu0 %v1794
        %2773 = vmatmul.bf16.gmra.mxu0 %v571
        %v2774 = vpop.f32.mrf.mxu0
        %v2775 = vadd.f32 %v2726, %v2774
        %v2776 = vpop.f32.mrf.mxu0
        %v2777 = vadd.f32 %v2728, %v2776
        %2778 = vmatmul.bf16.gmra.mxu0 %v579
        %v2779 = vpop.f32.mrf.mxu0
        %v2780 = vadd.f32 %v2731, %v2779
        %v2781 = vpop.f32.mrf.mxu0
        %v2782 = vadd.f32 %v2733, %v2781
        %2783 = vmatmul.bf16.gmra.mxu0 %v587
        %v2784 = vpop.f32.mrf.mxu0
        %v2785 = vadd.f32 %v2736, %v2784
        %v2786 = vpop.f32.mrf.mxu0
        %v2787 = vadd.f32 %v2738, %v2786
        %2788 = vmatmul.bf16.gmra.mxu0 %v595
        %v2789 = vpop.f32.mrf.mxu0
        %v2790 = vadd.f32 %v2741, %v2789
        %v2791 = vpop.f32.mrf.mxu0
        %v2792 = vadd.f32 %v2743, %v2791
        %2793 = vmatmul.bf16.gmra.mxu0 %v603
        %v2794 = vpop.f32.mrf.mxu0
        %v2795 = vadd.f32 %v2746, %v2794
        %v2796 = vpop.f32.mrf.mxu0
        %v2797 = vadd.f32 %v2748, %v2796
        %2798 = vmatmul.bf16.gmra.mxu0 %v611
        %v2799 = vpop.f32.mrf.mxu0
        %v2800 = vadd.f32 %v2751, %v2799
        %v2801 = vpop.f32.mrf.mxu0
        %v2802 = vadd.f32 %v2753, %v2801
        %2803 = vmatmul.bf16.gmra.mxu0 %v619
        %v2804 = vpop.f32.mrf.mxu0
        %v2805 = vadd.f32 %v2756, %v2804
        %v2806 = vpop.f32.mrf.mxu0
        %v2807 = vadd.f32 %v2758, %v2806
        %2808 = vmatmul.bf16.gmra.mxu0 %v627
        %v2809 = vpop.f32.mrf.mxu0
        %v2810 = vadd.f32 %v2761, %v2809
        %v2811 = vpop.f32.mrf.mxu0
        %v2812 = vadd.f32 %v2763, %v2811
        %2813 = vdwg.mxu0
        %2814 = vmatpush.bf16.msra.mxu0 %v1854
        %2815 = vmatpush.bf16.msra.mxu0 %v1850
        %2816 = vmatpush.bf16.msra.mxu0 %v1846
        %2817 = vmatpush.bf16.msra.mxu0 %v1842
        %2818 = vmatpush.bf16.msra.mxu0 %v1838
        %2819 = vmatpush.bf16.msra.mxu0 %v1834
        %2820 = vmatpush.bf16.msra.mxu0 %v1830
        %2821 = vmatpush.bf16.msra.mxu0 %v1826
        %2822 = vmatmul.bf16.gmra.mxu0 %v572
        %v2823 = vpop.f32.mrf.mxu0
        %v2824 = vadd.f32 %v2775, %v2823
        %v2825 = vpop.f32.mrf.mxu0
        %v2826 = vadd.f32 %v2777, %v2825
        %2827 = vmatmul.bf16.gmra.mxu0 %v580
        %v2828 = vpop.f32.mrf.mxu0
        %v2829 = vadd.f32 %v2780, %v2828
        %v2830 = vpop.f32.mrf.mxu0
        %v2831 = vadd.f32 %v2782, %v2830
        %2832 = vmatmul.bf16.gmra.mxu0 %v588
        %v2833 = vpop.f32.mrf.mxu0
        %v2834 = vadd.f32 %v2785, %v2833
        %v2835 = vpop.f32.mrf.mxu0
        %v2836 = vadd.f32 %v2787, %v2835
        %2837 = vmatmul.bf16.gmra.mxu0 %v596
        %v2838 = vpop.f32.mrf.mxu0
        %v2839 = vadd.f32 %v2790, %v2838
        %v2840 = vpop.f32.mrf.mxu0
        %v2841 = vadd.f32 %v2792, %v2840
        %2842 = vmatmul.bf16.gmra.mxu0 %v604
        %v2843 = vpop.f32.mrf.mxu0
        %v2844 = vadd.f32 %v2795, %v2843
        %v2845 = vpop.f32.mrf.mxu0
        %v2846 = vadd.f32 %v2797, %v2845
        %2847 = vmatmul.bf16.gmra.mxu0 %v612
        %v2848 = vpop.f32.mrf.mxu0
        %v2849 = vadd.f32 %v2800, %v2848
        %v2850 = vpop.f32.mrf.mxu0
        %v2851 = vadd.f32 %v2802, %v2850
        %2852 = vmatmul.bf16.gmra.mxu0 %v620
        %v2853 = vpop.f32.mrf.mxu0
        %v2854 = vadd.f32 %v2805, %v2853
        %v2855 = vpop.f32.mrf.mxu0
        %v2856 = vadd.f32 %v2807, %v2855
        %2857 = vmatmul.bf16.gmra.mxu0 %v628
        %v2858 = vpop.f32.mrf.mxu0
        %v2859 = vadd.f32 %v2810, %v2858
        %v2860 = vpop.f32.mrf.mxu0
        %v2861 = vadd.f32 %v2812, %v2860
        %2862 = vdwg.mxu0
        %2863 = vmatpush.bf16.msra.mxu0 %v1886
        %2864 = vmatpush.bf16.msra.mxu0 %v1882
        %2865 = vmatpush.bf16.msra.mxu0 %v1878
        %2866 = vmatpush.bf16.msra.mxu0 %v1874
        %2867 = vmatpush.bf16.msra.mxu0 %v1870
        %2868 = vmatpush.bf16.msra.mxu0 %v1866
        %2869 = vmatpush.bf16.msra.mxu0 %v1862
        %2870 = vmatpush.bf16.msra.mxu0 %v1858
        %2871 = vmatmul.bf16.gmra.mxu0 %v573
        %v2872 = vpop.f32.mrf.mxu0
        %v2873 = vadd.f32 %v2824, %v2872
        %v2874 = vpop.f32.mrf.mxu0
        %v2875 = vadd.f32 %v2826, %v2874
        %2876 = vmatmul.bf16.gmra.mxu0 %v581
        %v2877 = vpop.f32.mrf.mxu0
        %v2878 = vadd.f32 %v2829, %v2877
        %v2879 = vpop.f32.mrf.mxu0
        %v2880 = vadd.f32 %v2831, %v2879
        %2881 = vmatmul.bf16.gmra.mxu0 %v589
        %v2882 = vpop.f32.mrf.mxu0
        %v2883 = vadd.f32 %v2834, %v2882
        %v2884 = vpop.f32.mrf.mxu0
        %v2885 = vadd.f32 %v2836, %v2884
        %2886 = vmatmul.bf16.gmra.mxu0 %v597
        %v2887 = vpop.f32.mrf.mxu0
        %v2888 = vadd.f32 %v2839, %v2887
        %v2889 = vpop.f32.mrf.mxu0
        %v2890 = vadd.f32 %v2841, %v2889
        %2891 = vmatmul.bf16.gmra.mxu0 %v605
        %v2892 = vpop.f32.mrf.mxu0
        %v2893 = vadd.f32 %v2844, %v2892
        %v2894 = vpop.f32.mrf.mxu0
        %v2895 = vadd.f32 %v2846, %v2894
        %2896 = vmatmul.bf16.gmra.mxu0 %v613
        %v2897 = vpop.f32.mrf.mxu0
        %v2898 = vadd.f32 %v2849, %v2897
        %v2899 = vpop.f32.mrf.mxu0
        %v2900 = vadd.f32 %v2851, %v2899
        %2901 = vmatmul.bf16.gmra.mxu0 %v621
        %v2902 = vpop.f32.mrf.mxu0
        %v2903 = vadd.f32 %v2854, %v2902
        %v2904 = vpop.f32.mrf.mxu0
        %v2905 = vadd.f32 %v2856, %v2904
        %2906 = vmatmul.bf16.gmra.mxu0 %v629
        %v2907 = vpop.f32.mrf.mxu0
        %v2908 = vadd.f32 %v2859, %v2907
        %v2909 = vpop.f32.mrf.mxu0
        %v2910 = vadd.f32 %v2861, %v2909
        %2911 = vdwg.mxu0
        %2912 = vmatpush.bf16.msra.mxu0 %v1918
        %2913 = vmatpush.bf16.msra.mxu0 %v1914
        %2914 = vmatpush.bf16.msra.mxu0 %v1910
        %2915 = vmatpush.bf16.msra.mxu0 %v1906
        %2916 = vmatpush.bf16.msra.mxu0 %v1902
        %2917 = vmatpush.bf16.msra.mxu0 %v1898
        %2918 = vmatpush.bf16.msra.mxu0 %v1894
        %2919 = vmatpush.bf16.msra.mxu0 %v1890
        %2920 = vmatmul.bf16.gmra.mxu0 %v574
        %v2921 = vpop.f32.mrf.mxu0
        %v2922 = vadd.f32 %v2873, %v2921
        %v2923 = vpop.f32.mrf.mxu0
        %v2924 = vadd.f32 %v2875, %v2923
        %2925 = vmatmul.bf16.gmra.mxu0 %v582
        %v2926 = vpop.f32.mrf.mxu0
        %v2927 = vadd.f32 %v2878, %v2926
        %v2928 = vpop.f32.mrf.mxu0
        %v2929 = vadd.f32 %v2880, %v2928
        %2930 = vmatmul.bf16.gmra.mxu0 %v590
        %v2931 = vpop.f32.mrf.mxu0
        %v2932 = vadd.f32 %v2883, %v2931
        %v2933 = vpop.f32.mrf.mxu0
        %v2934 = vadd.f32 %v2885, %v2933
        %2935 = vmatmul.bf16.gmra.mxu0 %v598
        %v2936 = vpop.f32.mrf.mxu0
        %v2937 = vadd.f32 %v2888, %v2936
        %v2938 = vpop.f32.mrf.mxu0
        %v2939 = vadd.f32 %v2890, %v2938
        %2940 = vmatmul.bf16.gmra.mxu0 %v606
        %v2941 = vpop.f32.mrf.mxu0
        %v2942 = vadd.f32 %v2893, %v2941
        %v2943 = vpop.f32.mrf.mxu0
        %v2944 = vadd.f32 %v2895, %v2943
        %2945 = vmatmul.bf16.gmra.mxu0 %v614
        %v2946 = vpop.f32.mrf.mxu0
        %v2947 = vadd.f32 %v2898, %v2946
        %v2948 = vpop.f32.mrf.mxu0
        %v2949 = vadd.f32 %v2900, %v2948
        %2950 = vmatmul.bf16.gmra.mxu0 %v622
        %v2951 = vpop.f32.mrf.mxu0
        %v2952 = vadd.f32 %v2903, %v2951
        %v2953 = vpop.f32.mrf.mxu0
        %v2954 = vadd.f32 %v2905, %v2953
        %2955 = vmatmul.bf16.gmra.mxu0 %v630
        %v2956 = vpop.f32.mrf.mxu0
        %v2957 = vadd.f32 %v2908, %v2956
        %v2958 = vpop.f32.mrf.mxu0
        %v2959 = vadd.f32 %v2910, %v2958
        %2960 = vdwg.mxu0
        %2961 = vmatpush.bf16.msra.mxu0 %v1695
        %2962 = vmatpush.bf16.msra.mxu0 %v1691
        %2963 = vmatpush.bf16.msra.mxu0 %v1687
        %2964 = vmatpush.bf16.msra.mxu0 %v1683
        %2965 = vmatpush.bf16.msra.mxu0 %v1679
        %2966 = vmatpush.bf16.msra.mxu0 %v1675
        %2967 = vmatpush.bf16.msra.mxu0 %v1671
        %2968 = vmatpush.bf16.msra.mxu0 %v1667
        %2969 = vmatmul.bf16.gmra.mxu0 %v567
        %v2970 = vpop.f32.mrf.mxu0
        %v2971 = vadd.f32 %v891, %v2970
        %v2972 = vpop.f32.mrf.mxu0
        %v2973 = vadd.f32 %v891, %v2972
        %2974 = vmatmul.bf16.gmra.mxu0 %v575
        %v2975 = vpop.f32.mrf.mxu0
        %v2976 = vadd.f32 %v891, %v2975
        %v2977 = vpop.f32.mrf.mxu0
        %v2978 = vadd.f32 %v891, %v2977
        %2979 = vmatmul.bf16.gmra.mxu0 %v583
        %v2980 = vpop.f32.mrf.mxu0
        %v2981 = vadd.f32 %v891, %v2980
        %v2982 = vpop.f32.mrf.mxu0
        %v2983 = vadd.f32 %v891, %v2982
        %2984 = vmatmul.bf16.gmra.mxu0 %v591
        %v2985 = vpop.f32.mrf.mxu0
        %v2986 = vadd.f32 %v891, %v2985
        %v2987 = vpop.f32.mrf.mxu0
        %v2988 = vadd.f32 %v891, %v2987
        %2989 = vmatmul.bf16.gmra.mxu0 %v599
        %v2990 = vpop.f32.mrf.mxu0
        %v2991 = vadd.f32 %v891, %v2990
        %v2992 = vpop.f32.mrf.mxu0
        %v2993 = vadd.f32 %v891, %v2992
        %2994 = vmatmul.bf16.gmra.mxu0 %v607
        %v2995 = vpop.f32.mrf.mxu0
        %v2996 = vadd.f32 %v891, %v2995
        %v2997 = vpop.f32.mrf.mxu0
        %v2998 = vadd.f32 %v891, %v2997
        %2999 = vmatmul.bf16.gmra.mxu0 %v615
        %v3000 = vpop.f32.mrf.mxu0
        %v3001 = vadd.f32 %v891, %v3000
        %v3002 = vpop.f32.mrf.mxu0
        %v3003 = vadd.f32 %v891, %v3002
        %3004 = vmatmul.bf16.gmra.mxu0 %v623
        %v3005 = vpop.f32.mrf.mxu0
        %v3006 = vadd.f32 %v891, %v3005
        %v3007 = vpop.f32.mrf.mxu0
        %v3008 = vadd.f32 %v891, %v3007
        %3009 = vdwg.mxu0
        %3010 = vmatpush.bf16.msra.mxu0 %v1727
        %3011 = vmatpush.bf16.msra.mxu0 %v1723
        %3012 = vmatpush.bf16.msra.mxu0 %v1719
        %3013 = vmatpush.bf16.msra.mxu0 %v1715
        %3014 = vmatpush.bf16.msra.mxu0 %v1711
        %3015 = vmatpush.bf16.msra.mxu0 %v1707
        %3016 = vmatpush.bf16.msra.mxu0 %v1703
        %3017 = vmatpush.bf16.msra.mxu0 %v1699
        %3018 = vmatmul.bf16.gmra.mxu0 %v568
        %v3019 = vpop.f32.mrf.mxu0
        %v3020 = vadd.f32 %v2971, %v3019
        %v3021 = vpop.f32.mrf.mxu0
        %v3022 = vadd.f32 %v2973, %v3021
        %3023 = vmatmul.bf16.gmra.mxu0 %v576
        %v3024 = vpop.f32.mrf.mxu0
        %v3025 = vadd.f32 %v2976, %v3024
        %v3026 = vpop.f32.mrf.mxu0
        %v3027 = vadd.f32 %v2978, %v3026
        %3028 = vmatmul.bf16.gmra.mxu0 %v584
        %v3029 = vpop.f32.mrf.mxu0
        %v3030 = vadd.f32 %v2981, %v3029
        %v3031 = vpop.f32.mrf.mxu0
        %v3032 = vadd.f32 %v2983, %v3031
        %3033 = vmatmul.bf16.gmra.mxu0 %v592
        %v3034 = vpop.f32.mrf.mxu0
        %v3035 = vadd.f32 %v2986, %v3034
        %v3036 = vpop.f32.mrf.mxu0
        %v3037 = vadd.f32 %v2988, %v3036
        %3038 = vmatmul.bf16.gmra.mxu0 %v600
        %v3039 = vpop.f32.mrf.mxu0
        %v3040 = vadd.f32 %v2991, %v3039
        %v3041 = vpop.f32.mrf.mxu0
        %v3042 = vadd.f32 %v2993, %v3041
        %3043 = vmatmul.bf16.gmra.mxu0 %v608
        %v3044 = vpop.f32.mrf.mxu0
        %v3045 = vadd.f32 %v2996, %v3044
        %v3046 = vpop.f32.mrf.mxu0
        %v3047 = vadd.f32 %v2998, %v3046
        %3048 = vmatmul.bf16.gmra.mxu0 %v616
        %v3049 = vpop.f32.mrf.mxu0
        %v3050 = vadd.f32 %v3001, %v3049
        %v3051 = vpop.f32.mrf.mxu0
        %v3052 = vadd.f32 %v3003, %v3051
        %3053 = vmatmul.bf16.gmra.mxu0 %v624
        %v3054 = vpop.f32.mrf.mxu0
        %v3055 = vadd.f32 %v3006, %v3054
        %v3056 = vpop.f32.mrf.mxu0
        %v3057 = vadd.f32 %v3008, %v3056
        %3058 = vdwg.mxu0
        %3059 = vmatpush.bf16.msra.mxu0 %v1759
        %3060 = vmatpush.bf16.msra.mxu0 %v1755
        %3061 = vmatpush.bf16.msra.mxu0 %v1751
        %3062 = vmatpush.bf16.msra.mxu0 %v1747
        %3063 = vmatpush.bf16.msra.mxu0 %v1743
        %3064 = vmatpush.bf16.msra.mxu0 %v1739
        %3065 = vmatpush.bf16.msra.mxu0 %v1735
        %3066 = vmatpush.bf16.msra.mxu0 %v1731
        %3067 = vmatmul.bf16.gmra.mxu0 %v569
        %v3068 = vpop.f32.mrf.mxu0
        %v3069 = vadd.f32 %v3020, %v3068
        %v3070 = vpop.f32.mrf.mxu0
        %v3071 = vadd.f32 %v3022, %v3070
        %3072 = vmatmul.bf16.gmra.mxu0 %v577
        %v3073 = vpop.f32.mrf.mxu0
        %v3074 = vadd.f32 %v3025, %v3073
        %v3075 = vpop.f32.mrf.mxu0
        %v3076 = vadd.f32 %v3027, %v3075
        %3077 = vmatmul.bf16.gmra.mxu0 %v585
        %v3078 = vpop.f32.mrf.mxu0
        %v3079 = vadd.f32 %v3030, %v3078
        %v3080 = vpop.f32.mrf.mxu0
        %v3081 = vadd.f32 %v3032, %v3080
        %3082 = vmatmul.bf16.gmra.mxu0 %v593
        %v3083 = vpop.f32.mrf.mxu0
        %v3084 = vadd.f32 %v3035, %v3083
        %v3085 = vpop.f32.mrf.mxu0
        %v3086 = vadd.f32 %v3037, %v3085
        %3087 = vmatmul.bf16.gmra.mxu0 %v601
        %v3088 = vpop.f32.mrf.mxu0
        %v3089 = vadd.f32 %v3040, %v3088
        %v3090 = vpop.f32.mrf.mxu0
        %v3091 = vadd.f32 %v3042, %v3090
        %3092 = vmatmul.bf16.gmra.mxu0 %v609
        %v3093 = vpop.f32.mrf.mxu0
        %v3094 = vadd.f32 %v3045, %v3093
        %v3095 = vpop.f32.mrf.mxu0
        %v3096 = vadd.f32 %v3047, %v3095
        %3097 = vmatmul.bf16.gmra.mxu0 %v617
        %v3098 = vpop.f32.mrf.mxu0
        %v3099 = vadd.f32 %v3050, %v3098
        %v3100 = vpop.f32.mrf.mxu0
        %v3101 = vadd.f32 %v3052, %v3100
        %3102 = vmatmul.bf16.gmra.mxu0 %v625
        %v3103 = vpop.f32.mrf.mxu0
        %v3104 = vadd.f32 %v3055, %v3103
        %v3105 = vpop.f32.mrf.mxu0
        %v3106 = vadd.f32 %v3057, %v3105
        %3107 = vdwg.mxu0
        %3108 = vmatpush.bf16.msra.mxu0 %v1791
        %3109 = vmatpush.bf16.msra.mxu0 %v1787
        %3110 = vmatpush.bf16.msra.mxu0 %v1783
        %3111 = vmatpush.bf16.msra.mxu0 %v1779
        %3112 = vmatpush.bf16.msra.mxu0 %v1775
        %3113 = vmatpush.bf16.msra.mxu0 %v1771
        %3114 = vmatpush.bf16.msra.mxu0 %v1767
        %3115 = vmatpush.bf16.msra.mxu0 %v1763
        %3116 = vmatmul.bf16.gmra.mxu0 %v570
        %v3117 = vpop.f32.mrf.mxu0
        %v3118 = vadd.f32 %v3069, %v3117
        %v3119 = vpop.f32.mrf.mxu0
        %v3120 = vadd.f32 %v3071, %v3119
        %3121 = vmatmul.bf16.gmra.mxu0 %v578
        %v3122 = vpop.f32.mrf.mxu0
        %v3123 = vadd.f32 %v3074, %v3122
        %v3124 = vpop.f32.mrf.mxu0
        %v3125 = vadd.f32 %v3076, %v3124
        %3126 = vmatmul.bf16.gmra.mxu0 %v586
        %v3127 = vpop.f32.mrf.mxu0
        %v3128 = vadd.f32 %v3079, %v3127
        %v3129 = vpop.f32.mrf.mxu0
        %v3130 = vadd.f32 %v3081, %v3129
        %3131 = vmatmul.bf16.gmra.mxu0 %v594
        %v3132 = vpop.f32.mrf.mxu0
        %v3133 = vadd.f32 %v3084, %v3132
        %v3134 = vpop.f32.mrf.mxu0
        %v3135 = vadd.f32 %v3086, %v3134
        %3136 = vmatmul.bf16.gmra.mxu0 %v602
        %v3137 = vpop.f32.mrf.mxu0
        %v3138 = vadd.f32 %v3089, %v3137
        %v3139 = vpop.f32.mrf.mxu0
        %v3140 = vadd.f32 %v3091, %v3139
        %3141 = vmatmul.bf16.gmra.mxu0 %v610
        %v3142 = vpop.f32.mrf.mxu0
        %v3143 = vadd.f32 %v3094, %v3142
        %v3144 = vpop.f32.mrf.mxu0
        %v3145 = vadd.f32 %v3096, %v3144
        %3146 = vmatmul.bf16.gmra.mxu0 %v618
        %v3147 = vpop.f32.mrf.mxu0
        %v3148 = vadd.f32 %v3099, %v3147
        %v3149 = vpop.f32.mrf.mxu0
        %v3150 = vadd.f32 %v3101, %v3149
        %3151 = vmatmul.bf16.gmra.mxu0 %v626
        %v3152 = vpop.f32.mrf.mxu0
        %v3153 = vadd.f32 %v3104, %v3152
        %v3154 = vpop.f32.mrf.mxu0
        %v3155 = vadd.f32 %v3106, %v3154
        %3156 = vdwg.mxu0
        %3157 = vmatpush.bf16.msra.mxu0 %v1823
        %3158 = vmatpush.bf16.msra.mxu0 %v1819
        %3159 = vmatpush.bf16.msra.mxu0 %v1815
        %3160 = vmatpush.bf16.msra.mxu0 %v1811
        %3161 = vmatpush.bf16.msra.mxu0 %v1807
        %3162 = vmatpush.bf16.msra.mxu0 %v1803
        %3163 = vmatpush.bf16.msra.mxu0 %v1799
        %3164 = vmatpush.bf16.msra.mxu0 %v1795
        %3165 = vmatmul.bf16.gmra.mxu0 %v571
        %v3166 = vpop.f32.mrf.mxu0
        %v3167 = vadd.f32 %v3118, %v3166
        %v3168 = vpop.f32.mrf.mxu0
        %v3169 = vadd.f32 %v3120, %v3168
        %3170 = vmatmul.bf16.gmra.mxu0 %v579
        %v3171 = vpop.f32.mrf.mxu0
        %v3172 = vadd.f32 %v3123, %v3171
        %v3173 = vpop.f32.mrf.mxu0
        %v3174 = vadd.f32 %v3125, %v3173
        %3175 = vmatmul.bf16.gmra.mxu0 %v587
        %v3176 = vpop.f32.mrf.mxu0
        %v3177 = vadd.f32 %v3128, %v3176
        %v3178 = vpop.f32.mrf.mxu0
        %v3179 = vadd.f32 %v3130, %v3178
        %3180 = vmatmul.bf16.gmra.mxu0 %v595
        %v3181 = vpop.f32.mrf.mxu0
        %v3182 = vadd.f32 %v3133, %v3181
        %v3183 = vpop.f32.mrf.mxu0
        %v3184 = vadd.f32 %v3135, %v3183
        %3185 = vmatmul.bf16.gmra.mxu0 %v603
        %v3186 = vpop.f32.mrf.mxu0
        %v3187 = vadd.f32 %v3138, %v3186
        %v3188 = vpop.f32.mrf.mxu0
        %v3189 = vadd.f32 %v3140, %v3188
        %3190 = vmatmul.bf16.gmra.mxu0 %v611
        %v3191 = vpop.f32.mrf.mxu0
        %v3192 = vadd.f32 %v3143, %v3191
        %v3193 = vpop.f32.mrf.mxu0
        %v3194 = vadd.f32 %v3145, %v3193
        %3195 = vmatmul.bf16.gmra.mxu0 %v619
        %v3196 = vpop.f32.mrf.mxu0
        %v3197 = vadd.f32 %v3148, %v3196
        %v3198 = vpop.f32.mrf.mxu0
        %v3199 = vadd.f32 %v3150, %v3198
        %3200 = vmatmul.bf16.gmra.mxu0 %v627
        %v3201 = vpop.f32.mrf.mxu0
        %v3202 = vadd.f32 %v3153, %v3201
        %v3203 = vpop.f32.mrf.mxu0
        %v3204 = vadd.f32 %v3155, %v3203
        %3205 = vdwg.mxu0
        %3206 = vmatpush.bf16.msra.mxu0 %v1855
        %3207 = vmatpush.bf16.msra.mxu0 %v1851
        %3208 = vmatpush.bf16.msra.mxu0 %v1847
        %3209 = vmatpush.bf16.msra.mxu0 %v1843
        %3210 = vmatpush.bf16.msra.mxu0 %v1839
        %3211 = vmatpush.bf16.msra.mxu0 %v1835
        %3212 = vmatpush.bf16.msra.mxu0 %v1831
        %3213 = vmatpush.bf16.msra.mxu0 %v1827
        %3214 = vmatmul.bf16.gmra.mxu0 %v572
        %v3215 = vpop.f32.mrf.mxu0
        %v3216 = vadd.f32 %v3167, %v3215
        %v3217 = vpop.f32.mrf.mxu0
        %v3218 = vadd.f32 %v3169, %v3217
        %3219 = vmatmul.bf16.gmra.mxu0 %v580
        %v3220 = vpop.f32.mrf.mxu0
        %v3221 = vadd.f32 %v3172, %v3220
        %v3222 = vpop.f32.mrf.mxu0
        %v3223 = vadd.f32 %v3174, %v3222
        %3224 = vmatmul.bf16.gmra.mxu0 %v588
        %v3225 = vpop.f32.mrf.mxu0
        %v3226 = vadd.f32 %v3177, %v3225
        %v3227 = vpop.f32.mrf.mxu0
        %v3228 = vadd.f32 %v3179, %v3227
        %3229 = vmatmul.bf16.gmra.mxu0 %v596
        %v3230 = vpop.f32.mrf.mxu0
        %v3231 = vadd.f32 %v3182, %v3230
        %v3232 = vpop.f32.mrf.mxu0
        %v3233 = vadd.f32 %v3184, %v3232
        %3234 = vmatmul.bf16.gmra.mxu0 %v604
        %v3235 = vpop.f32.mrf.mxu0
        %v3236 = vadd.f32 %v3187, %v3235
        %v3237 = vpop.f32.mrf.mxu0
        %v3238 = vadd.f32 %v3189, %v3237
        %3239 = vmatmul.bf16.gmra.mxu0 %v612
        %v3240 = vpop.f32.mrf.mxu0
        %v3241 = vadd.f32 %v3192, %v3240
        %v3242 = vpop.f32.mrf.mxu0
        %v3243 = vadd.f32 %v3194, %v3242
        %3244 = vmatmul.bf16.gmra.mxu0 %v620
        %v3245 = vpop.f32.mrf.mxu0
        %v3246 = vadd.f32 %v3197, %v3245
        %v3247 = vpop.f32.mrf.mxu0
        %v3248 = vadd.f32 %v3199, %v3247
        %3249 = vmatmul.bf16.gmra.mxu0 %v628
        %v3250 = vpop.f32.mrf.mxu0
        %v3251 = vadd.f32 %v3202, %v3250
        %v3252 = vpop.f32.mrf.mxu0
        %v3253 = vadd.f32 %v3204, %v3252
        %3254 = vdwg.mxu0
        %3255 = vmatpush.bf16.msra.mxu0 %v1887
        %3256 = vmatpush.bf16.msra.mxu0 %v1883
        %3257 = vmatpush.bf16.msra.mxu0 %v1879
        %3258 = vmatpush.bf16.msra.mxu0 %v1875
        %3259 = vmatpush.bf16.msra.mxu0 %v1871
        %3260 = vmatpush.bf16.msra.mxu0 %v1867
        %3261 = vmatpush.bf16.msra.mxu0 %v1863
        %3262 = vmatpush.bf16.msra.mxu0 %v1859
        %3263 = vmatmul.bf16.gmra.mxu0 %v573
        %v3264 = vpop.f32.mrf.mxu0
        %v3265 = vadd.f32 %v3216, %v3264
        %v3266 = vpop.f32.mrf.mxu0
        %v3267 = vadd.f32 %v3218, %v3266
        %3268 = vmatmul.bf16.gmra.mxu0 %v581
        %v3269 = vpop.f32.mrf.mxu0
        %v3270 = vadd.f32 %v3221, %v3269
        %v3271 = vpop.f32.mrf.mxu0
        %v3272 = vadd.f32 %v3223, %v3271
        %3273 = vmatmul.bf16.gmra.mxu0 %v589
        %v3274 = vpop.f32.mrf.mxu0
        %v3275 = vadd.f32 %v3226, %v3274
        %v3276 = vpop.f32.mrf.mxu0
        %v3277 = vadd.f32 %v3228, %v3276
        %3278 = vmatmul.bf16.gmra.mxu0 %v597
        %v3279 = vpop.f32.mrf.mxu0
        %v3280 = vadd.f32 %v3231, %v3279
        %v3281 = vpop.f32.mrf.mxu0
        %v3282 = vadd.f32 %v3233, %v3281
        %3283 = vmatmul.bf16.gmra.mxu0 %v605
        %v3284 = vpop.f32.mrf.mxu0
        %v3285 = vadd.f32 %v3236, %v3284
        %v3286 = vpop.f32.mrf.mxu0
        %v3287 = vadd.f32 %v3238, %v3286
        %3288 = vmatmul.bf16.gmra.mxu0 %v613
        %v3289 = vpop.f32.mrf.mxu0
        %v3290 = vadd.f32 %v3241, %v3289
        %v3291 = vpop.f32.mrf.mxu0
        %v3292 = vadd.f32 %v3243, %v3291
        %3293 = vmatmul.bf16.gmra.mxu0 %v621
        %v3294 = vpop.f32.mrf.mxu0
        %v3295 = vadd.f32 %v3246, %v3294
        %v3296 = vpop.f32.mrf.mxu0
        %v3297 = vadd.f32 %v3248, %v3296
        %3298 = vmatmul.bf16.gmra.mxu0 %v629
        %v3299 = vpop.f32.mrf.mxu0
        %v3300 = vadd.f32 %v3251, %v3299
        %v3301 = vpop.f32.mrf.mxu0
        %v3302 = vadd.f32 %v3253, %v3301
        %3303 = vdwg.mxu0
        %3304 = vmatpush.bf16.msra.mxu0 %v1919
        %3305 = vmatpush.bf16.msra.mxu0 %v1915
        %3306 = vmatpush.bf16.msra.mxu0 %v1911
        %3307 = vmatpush.bf16.msra.mxu0 %v1907
        %3308 = vmatpush.bf16.msra.mxu0 %v1903
        %3309 = vmatpush.bf16.msra.mxu0 %v1899
        %3310 = vmatpush.bf16.msra.mxu0 %v1895
        %3311 = vmatpush.bf16.msra.mxu0 %v1891
        %3312 = vmatmul.bf16.gmra.mxu0 %v574
        %v3313 = vpop.f32.mrf.mxu0
        %v3314 = vadd.f32 %v3265, %v3313
        %v3315 = vpop.f32.mrf.mxu0
        %v3316 = vadd.f32 %v3267, %v3315
        %3317 = vmatmul.bf16.gmra.mxu0 %v582
        %v3318 = vpop.f32.mrf.mxu0
        %v3319 = vadd.f32 %v3270, %v3318
        %v3320 = vpop.f32.mrf.mxu0
        %v3321 = vadd.f32 %v3272, %v3320
        %3322 = vmatmul.bf16.gmra.mxu0 %v590
        %v3323 = vpop.f32.mrf.mxu0
        %v3324 = vadd.f32 %v3275, %v3323
        %v3325 = vpop.f32.mrf.mxu0
        %v3326 = vadd.f32 %v3277, %v3325
        %3327 = vmatmul.bf16.gmra.mxu0 %v598
        %v3328 = vpop.f32.mrf.mxu0
        %v3329 = vadd.f32 %v3280, %v3328
        %v3330 = vpop.f32.mrf.mxu0
        %v3331 = vadd.f32 %v3282, %v3330
        %3332 = vmatmul.bf16.gmra.mxu0 %v606
        %v3333 = vpop.f32.mrf.mxu0
        %v3334 = vadd.f32 %v3285, %v3333
        %v3335 = vpop.f32.mrf.mxu0
        %v3336 = vadd.f32 %v3287, %v3335
        %3337 = vmatmul.bf16.gmra.mxu0 %v614
        %v3338 = vpop.f32.mrf.mxu0
        %v3339 = vadd.f32 %v3290, %v3338
        %v3340 = vpop.f32.mrf.mxu0
        %v3341 = vadd.f32 %v3292, %v3340
        %3342 = vmatmul.bf16.gmra.mxu0 %v622
        %v3343 = vpop.f32.mrf.mxu0
        %v3344 = vadd.f32 %v3295, %v3343
        %v3345 = vpop.f32.mrf.mxu0
        %v3346 = vadd.f32 %v3297, %v3345
        %3347 = vmatmul.bf16.gmra.mxu0 %v630
        %v3348 = vpop.f32.mrf.mxu0
        %v3349 = vadd.f32 %v3300, %v3348
        %v3350 = vpop.f32.mrf.mxu0
        %v3351 = vadd.f32 %v3302, %v3350
        %3352 = vdwg.mxu0
        %3353 = vmatpush.bf16.msra.mxu0 %v1696
        %3354 = vmatpush.bf16.msra.mxu0 %v1692
        %3355 = vmatpush.bf16.msra.mxu0 %v1688
        %3356 = vmatpush.bf16.msra.mxu0 %v1684
        %3357 = vmatpush.bf16.msra.mxu0 %v1680
        %3358 = vmatpush.bf16.msra.mxu0 %v1676
        %3359 = vmatpush.bf16.msra.mxu0 %v1672
        %3360 = vmatpush.bf16.msra.mxu0 %v1668
        %3361 = vmatmul.bf16.gmra.mxu0 %v567
        %v3362 = vpop.f32.mrf.mxu0
        %v3363 = vadd.f32 %v892, %v3362
        %v3364 = vpop.f32.mrf.mxu0
        %v3365 = vadd.f32 %v892, %v3364
        %3366 = vmatmul.bf16.gmra.mxu0 %v575
        %v3367 = vpop.f32.mrf.mxu0
        %v3368 = vadd.f32 %v892, %v3367
        %v3369 = vpop.f32.mrf.mxu0
        %v3370 = vadd.f32 %v892, %v3369
        %3371 = vmatmul.bf16.gmra.mxu0 %v583
        %v3372 = vpop.f32.mrf.mxu0
        %v3373 = vadd.f32 %v892, %v3372
        %v3374 = vpop.f32.mrf.mxu0
        %v3375 = vadd.f32 %v892, %v3374
        %3376 = vmatmul.bf16.gmra.mxu0 %v591
        %v3377 = vpop.f32.mrf.mxu0
        %v3378 = vadd.f32 %v892, %v3377
        %v3379 = vpop.f32.mrf.mxu0
        %v3380 = vadd.f32 %v892, %v3379
        %3381 = vmatmul.bf16.gmra.mxu0 %v599
        %v3382 = vpop.f32.mrf.mxu0
        %v3383 = vadd.f32 %v892, %v3382
        %v3384 = vpop.f32.mrf.mxu0
        %v3385 = vadd.f32 %v892, %v3384
        %3386 = vmatmul.bf16.gmra.mxu0 %v607
        %v3387 = vpop.f32.mrf.mxu0
        %v3388 = vadd.f32 %v892, %v3387
        %v3389 = vpop.f32.mrf.mxu0
        %v3390 = vadd.f32 %v892, %v3389
        %3391 = vmatmul.bf16.gmra.mxu0 %v615
        %v3392 = vpop.f32.mrf.mxu0
        %v3393 = vadd.f32 %v892, %v3392
        %v3394 = vpop.f32.mrf.mxu0
        %v3395 = vadd.f32 %v892, %v3394
        %3396 = vmatmul.bf16.gmra.mxu0 %v623
        %v3397 = vpop.f32.mrf.mxu0
        %v3398 = vadd.f32 %v892, %v3397
        %v3399 = vpop.f32.mrf.mxu0
        %v3400 = vadd.f32 %v892, %v3399
        %3401 = vdwg.mxu0
        %3402 = vmatpush.bf16.msra.mxu0 %v1728
        %3403 = vmatpush.bf16.msra.mxu0 %v1724
        %3404 = vmatpush.bf16.msra.mxu0 %v1720
        %3405 = vmatpush.bf16.msra.mxu0 %v1716
        %3406 = vmatpush.bf16.msra.mxu0 %v1712
        %3407 = vmatpush.bf16.msra.mxu0 %v1708
        %3408 = vmatpush.bf16.msra.mxu0 %v1704
        %3409 = vmatpush.bf16.msra.mxu0 %v1700
        %3410 = vmatmul.bf16.gmra.mxu0 %v568
        %v3411 = vpop.f32.mrf.mxu0
        %v3412 = vadd.f32 %v3363, %v3411
        %v3413 = vpop.f32.mrf.mxu0
        %v3414 = vadd.f32 %v3365, %v3413
        %3415 = vmatmul.bf16.gmra.mxu0 %v576
        %v3416 = vpop.f32.mrf.mxu0
        %v3417 = vadd.f32 %v3368, %v3416
        %v3418 = vpop.f32.mrf.mxu0
        %v3419 = vadd.f32 %v3370, %v3418
        %3420 = vmatmul.bf16.gmra.mxu0 %v584
        %v3421 = vpop.f32.mrf.mxu0
        %v3422 = vadd.f32 %v3373, %v3421
        %v3423 = vpop.f32.mrf.mxu0
        %v3424 = vadd.f32 %v3375, %v3423
        %3425 = vmatmul.bf16.gmra.mxu0 %v592
        %v3426 = vpop.f32.mrf.mxu0
        %v3427 = vadd.f32 %v3378, %v3426
        %v3428 = vpop.f32.mrf.mxu0
        %v3429 = vadd.f32 %v3380, %v3428
        %3430 = vmatmul.bf16.gmra.mxu0 %v600
        %v3431 = vpop.f32.mrf.mxu0
        %v3432 = vadd.f32 %v3383, %v3431
        %v3433 = vpop.f32.mrf.mxu0
        %v3434 = vadd.f32 %v3385, %v3433
        %3435 = vmatmul.bf16.gmra.mxu0 %v608
        %v3436 = vpop.f32.mrf.mxu0
        %v3437 = vadd.f32 %v3388, %v3436
        %v3438 = vpop.f32.mrf.mxu0
        %v3439 = vadd.f32 %v3390, %v3438
        %3440 = vmatmul.bf16.gmra.mxu0 %v616
        %v3441 = vpop.f32.mrf.mxu0
        %v3442 = vadd.f32 %v3393, %v3441
        %v3443 = vpop.f32.mrf.mxu0
        %v3444 = vadd.f32 %v3395, %v3443
        %3445 = vmatmul.bf16.gmra.mxu0 %v624
        %v3446 = vpop.f32.mrf.mxu0
        %v3447 = vadd.f32 %v3398, %v3446
        %v3448 = vpop.f32.mrf.mxu0
        %v3449 = vadd.f32 %v3400, %v3448
        %3450 = vdwg.mxu0
        %3451 = vmatpush.bf16.msra.mxu0 %v1760
        %3452 = vmatpush.bf16.msra.mxu0 %v1756
        %3453 = vmatpush.bf16.msra.mxu0 %v1752
        %3454 = vmatpush.bf16.msra.mxu0 %v1748
        %3455 = vmatpush.bf16.msra.mxu0 %v1744
        %3456 = vmatpush.bf16.msra.mxu0 %v1740
        %3457 = vmatpush.bf16.msra.mxu0 %v1736
        %3458 = vmatpush.bf16.msra.mxu0 %v1732
        %3459 = vmatmul.bf16.gmra.mxu0 %v569
        %v3460 = vpop.f32.mrf.mxu0
        %v3461 = vadd.f32 %v3412, %v3460
        %v3462 = vpop.f32.mrf.mxu0
        %v3463 = vadd.f32 %v3414, %v3462
        %3464 = vmatmul.bf16.gmra.mxu0 %v577
        %v3465 = vpop.f32.mrf.mxu0
        %v3466 = vadd.f32 %v3417, %v3465
        %v3467 = vpop.f32.mrf.mxu0
        %v3468 = vadd.f32 %v3419, %v3467
        %3469 = vmatmul.bf16.gmra.mxu0 %v585
        %v3470 = vpop.f32.mrf.mxu0
        %v3471 = vadd.f32 %v3422, %v3470
        %v3472 = vpop.f32.mrf.mxu0
        %v3473 = vadd.f32 %v3424, %v3472
        %3474 = vmatmul.bf16.gmra.mxu0 %v593
        %v3475 = vpop.f32.mrf.mxu0
        %v3476 = vadd.f32 %v3427, %v3475
        %v3477 = vpop.f32.mrf.mxu0
        %v3478 = vadd.f32 %v3429, %v3477
        %3479 = vmatmul.bf16.gmra.mxu0 %v601
        %v3480 = vpop.f32.mrf.mxu0
        %v3481 = vadd.f32 %v3432, %v3480
        %v3482 = vpop.f32.mrf.mxu0
        %v3483 = vadd.f32 %v3434, %v3482
        %3484 = vmatmul.bf16.gmra.mxu0 %v609
        %v3485 = vpop.f32.mrf.mxu0
        %v3486 = vadd.f32 %v3437, %v3485
        %v3487 = vpop.f32.mrf.mxu0
        %v3488 = vadd.f32 %v3439, %v3487
        %3489 = vmatmul.bf16.gmra.mxu0 %v617
        %v3490 = vpop.f32.mrf.mxu0
        %v3491 = vadd.f32 %v3442, %v3490
        %v3492 = vpop.f32.mrf.mxu0
        %v3493 = vadd.f32 %v3444, %v3492
        %3494 = vmatmul.bf16.gmra.mxu0 %v625
        %v3495 = vpop.f32.mrf.mxu0
        %v3496 = vadd.f32 %v3447, %v3495
        %v3497 = vpop.f32.mrf.mxu0
        %v3498 = vadd.f32 %v3449, %v3497
        %3499 = vdwg.mxu0
        %3500 = vmatpush.bf16.msra.mxu0 %v1792
        %3501 = vmatpush.bf16.msra.mxu0 %v1788
        %3502 = vmatpush.bf16.msra.mxu0 %v1784
        %3503 = vmatpush.bf16.msra.mxu0 %v1780
        %3504 = vmatpush.bf16.msra.mxu0 %v1776
        %3505 = vmatpush.bf16.msra.mxu0 %v1772
        %3506 = vmatpush.bf16.msra.mxu0 %v1768
        %3507 = vmatpush.bf16.msra.mxu0 %v1764
        %3508 = vmatmul.bf16.gmra.mxu0 %v570
        %v3509 = vpop.f32.mrf.mxu0
        %v3510 = vadd.f32 %v3461, %v3509
        %v3511 = vpop.f32.mrf.mxu0
        %v3512 = vadd.f32 %v3463, %v3511
        %3513 = vmatmul.bf16.gmra.mxu0 %v578
        %v3514 = vpop.f32.mrf.mxu0
        %v3515 = vadd.f32 %v3466, %v3514
        %v3516 = vpop.f32.mrf.mxu0
        %v3517 = vadd.f32 %v3468, %v3516
        %3518 = vmatmul.bf16.gmra.mxu0 %v586
        %v3519 = vpop.f32.mrf.mxu0
        %v3520 = vadd.f32 %v3471, %v3519
        %v3521 = vpop.f32.mrf.mxu0
        %v3522 = vadd.f32 %v3473, %v3521
        %3523 = vmatmul.bf16.gmra.mxu0 %v594
        %v3524 = vpop.f32.mrf.mxu0
        %v3525 = vadd.f32 %v3476, %v3524
        %v3526 = vpop.f32.mrf.mxu0
        %v3527 = vadd.f32 %v3478, %v3526
        %3528 = vmatmul.bf16.gmra.mxu0 %v602
        %v3529 = vpop.f32.mrf.mxu0
        %v3530 = vadd.f32 %v3481, %v3529
        %v3531 = vpop.f32.mrf.mxu0
        %v3532 = vadd.f32 %v3483, %v3531
        %3533 = vmatmul.bf16.gmra.mxu0 %v610
        %v3534 = vpop.f32.mrf.mxu0
        %v3535 = vadd.f32 %v3486, %v3534
        %v3536 = vpop.f32.mrf.mxu0
        %v3537 = vadd.f32 %v3488, %v3536
        %3538 = vmatmul.bf16.gmra.mxu0 %v618
        %v3539 = vpop.f32.mrf.mxu0
        %v3540 = vadd.f32 %v3491, %v3539
        %v3541 = vpop.f32.mrf.mxu0
        %v3542 = vadd.f32 %v3493, %v3541
        %3543 = vmatmul.bf16.gmra.mxu0 %v626
        %v3544 = vpop.f32.mrf.mxu0
        %v3545 = vadd.f32 %v3496, %v3544
        %v3546 = vpop.f32.mrf.mxu0
        %v3547 = vadd.f32 %v3498, %v3546
        %3548 = vdwg.mxu0
        %3549 = vmatpush.bf16.msra.mxu0 %v1824
        %3550 = vmatpush.bf16.msra.mxu0 %v1820
        %3551 = vmatpush.bf16.msra.mxu0 %v1816
        %3552 = vmatpush.bf16.msra.mxu0 %v1812
        %3553 = vmatpush.bf16.msra.mxu0 %v1808
        %3554 = vmatpush.bf16.msra.mxu0 %v1804
        %3555 = vmatpush.bf16.msra.mxu0 %v1800
        %3556 = vmatpush.bf16.msra.mxu0 %v1796
        %3557 = vmatmul.bf16.gmra.mxu0 %v571
        %v3558 = vpop.f32.mrf.mxu0
        %v3559 = vadd.f32 %v3510, %v3558
        %v3560 = vpop.f32.mrf.mxu0
        %v3561 = vadd.f32 %v3512, %v3560
        %3562 = vmatmul.bf16.gmra.mxu0 %v579
        %v3563 = vpop.f32.mrf.mxu0
        %v3564 = vadd.f32 %v3515, %v3563
        %v3565 = vpop.f32.mrf.mxu0
        %v3566 = vadd.f32 %v3517, %v3565
        %3567 = vmatmul.bf16.gmra.mxu0 %v587
        %v3568 = vpop.f32.mrf.mxu0
        %v3569 = vadd.f32 %v3520, %v3568
        %v3570 = vpop.f32.mrf.mxu0
        %v3571 = vadd.f32 %v3522, %v3570
        %3572 = vmatmul.bf16.gmra.mxu0 %v595
        %v3573 = vpop.f32.mrf.mxu0
        %v3574 = vadd.f32 %v3525, %v3573
        %v3575 = vpop.f32.mrf.mxu0
        %v3576 = vadd.f32 %v3527, %v3575
        %3577 = vmatmul.bf16.gmra.mxu0 %v603
        %v3578 = vpop.f32.mrf.mxu0
        %v3579 = vadd.f32 %v3530, %v3578
        %v3580 = vpop.f32.mrf.mxu0
        %v3581 = vadd.f32 %v3532, %v3580
        %3582 = vmatmul.bf16.gmra.mxu0 %v611
        %v3583 = vpop.f32.mrf.mxu0
        %v3584 = vadd.f32 %v3535, %v3583
        %v3585 = vpop.f32.mrf.mxu0
        %v3586 = vadd.f32 %v3537, %v3585
        %3587 = vmatmul.bf16.gmra.mxu0 %v619
        %v3588 = vpop.f32.mrf.mxu0
        %v3589 = vadd.f32 %v3540, %v3588
        %v3590 = vpop.f32.mrf.mxu0
        %v3591 = vadd.f32 %v3542, %v3590
        %3592 = vmatmul.bf16.gmra.mxu0 %v627
        %v3593 = vpop.f32.mrf.mxu0
        %v3594 = vadd.f32 %v3545, %v3593
        %v3595 = vpop.f32.mrf.mxu0
        %v3596 = vadd.f32 %v3547, %v3595
        %3597 = vdwg.mxu0
        %3598 = vmatpush.bf16.msra.mxu0 %v1856
        %3599 = vmatpush.bf16.msra.mxu0 %v1852
        %3600 = vmatpush.bf16.msra.mxu0 %v1848
        %3601 = vmatpush.bf16.msra.mxu0 %v1844
        %3602 = vmatpush.bf16.msra.mxu0 %v1840
        %3603 = vmatpush.bf16.msra.mxu0 %v1836
        %3604 = vmatpush.bf16.msra.mxu0 %v1832
        %3605 = vmatpush.bf16.msra.mxu0 %v1828
        %3606 = vmatmul.bf16.gmra.mxu0 %v572
        %v3607 = vpop.f32.mrf.mxu0
        %v3608 = vadd.f32 %v3559, %v3607
        %v3609 = vpop.f32.mrf.mxu0
        %v3610 = vadd.f32 %v3561, %v3609
        %3611 = vmatmul.bf16.gmra.mxu0 %v580
        %v3612 = vpop.f32.mrf.mxu0
        %v3613 = vadd.f32 %v3564, %v3612
        %v3614 = vpop.f32.mrf.mxu0
        %v3615 = vadd.f32 %v3566, %v3614
        %3616 = vmatmul.bf16.gmra.mxu0 %v588
        %v3617 = vpop.f32.mrf.mxu0
        %v3618 = vadd.f32 %v3569, %v3617
        %v3619 = vpop.f32.mrf.mxu0
        %v3620 = vadd.f32 %v3571, %v3619
        %3621 = vmatmul.bf16.gmra.mxu0 %v596
        %v3622 = vpop.f32.mrf.mxu0
        %v3623 = vadd.f32 %v3574, %v3622
        %v3624 = vpop.f32.mrf.mxu0
        %v3625 = vadd.f32 %v3576, %v3624
        %3626 = vmatmul.bf16.gmra.mxu0 %v604
        %v3627 = vpop.f32.mrf.mxu0
        %v3628 = vadd.f32 %v3579, %v3627
        %v3629 = vpop.f32.mrf.mxu0
        %v3630 = vadd.f32 %v3581, %v3629
        %3631 = vmatmul.bf16.gmra.mxu0 %v612
        %v3632 = vpop.f32.mrf.mxu0
        %v3633 = vadd.f32 %v3584, %v3632
        %v3634 = vpop.f32.mrf.mxu0
        %v3635 = vadd.f32 %v3586, %v3634
        %3636 = vmatmul.bf16.gmra.mxu0 %v620
        %v3637 = vpop.f32.mrf.mxu0
        %v3638 = vadd.f32 %v3589, %v3637
        %v3639 = vpop.f32.mrf.mxu0
        %v3640 = vadd.f32 %v3591, %v3639
        %3641 = vmatmul.bf16.gmra.mxu0 %v628
        %v3642 = vpop.f32.mrf.mxu0
        %v3643 = vadd.f32 %v3594, %v3642
        %v3644 = vpop.f32.mrf.mxu0
        %v3645 = vadd.f32 %v3596, %v3644
        %3646 = vdwg.mxu0
        %3647 = vmatpush.bf16.msra.mxu0 %v1888
        %3648 = vmatpush.bf16.msra.mxu0 %v1884
        %3649 = vmatpush.bf16.msra.mxu0 %v1880
        %3650 = vmatpush.bf16.msra.mxu0 %v1876
        %3651 = vmatpush.bf16.msra.mxu0 %v1872
        %3652 = vmatpush.bf16.msra.mxu0 %v1868
        %3653 = vmatpush.bf16.msra.mxu0 %v1864
        %3654 = vmatpush.bf16.msra.mxu0 %v1860
        %3655 = vmatmul.bf16.gmra.mxu0 %v573
        %v3656 = vpop.f32.mrf.mxu0
        %v3657 = vadd.f32 %v3608, %v3656
        %v3658 = vpop.f32.mrf.mxu0
        %v3659 = vadd.f32 %v3610, %v3658
        %3660 = vmatmul.bf16.gmra.mxu0 %v581
        %v3661 = vpop.f32.mrf.mxu0
        %v3662 = vadd.f32 %v3613, %v3661
        %v3663 = vpop.f32.mrf.mxu0
        %v3664 = vadd.f32 %v3615, %v3663
        %3665 = vmatmul.bf16.gmra.mxu0 %v589
        %v3666 = vpop.f32.mrf.mxu0
        %v3667 = vadd.f32 %v3618, %v3666
        %v3668 = vpop.f32.mrf.mxu0
        %v3669 = vadd.f32 %v3620, %v3668
        %3670 = vmatmul.bf16.gmra.mxu0 %v597
        %v3671 = vpop.f32.mrf.mxu0
        %v3672 = vadd.f32 %v3623, %v3671
        %v3673 = vpop.f32.mrf.mxu0
        %v3674 = vadd.f32 %v3625, %v3673
        %3675 = vmatmul.bf16.gmra.mxu0 %v605
        %v3676 = vpop.f32.mrf.mxu0
        %v3677 = vadd.f32 %v3628, %v3676
        %v3678 = vpop.f32.mrf.mxu0
        %v3679 = vadd.f32 %v3630, %v3678
        %3680 = vmatmul.bf16.gmra.mxu0 %v613
        %v3681 = vpop.f32.mrf.mxu0
        %v3682 = vadd.f32 %v3633, %v3681
        %v3683 = vpop.f32.mrf.mxu0
        %v3684 = vadd.f32 %v3635, %v3683
        %3685 = vmatmul.bf16.gmra.mxu0 %v621
        %v3686 = vpop.f32.mrf.mxu0
        %v3687 = vadd.f32 %v3638, %v3686
        %v3688 = vpop.f32.mrf.mxu0
        %v3689 = vadd.f32 %v3640, %v3688
        %3690 = vmatmul.bf16.gmra.mxu0 %v629
        %v3691 = vpop.f32.mrf.mxu0
        %v3692 = vadd.f32 %v3643, %v3691
        %v3693 = vpop.f32.mrf.mxu0
        %v3694 = vadd.f32 %v3645, %v3693
        %3695 = vdwg.mxu0
        %3696 = vmatpush.bf16.msra.mxu0 %v1920
        %3697 = vmatpush.bf16.msra.mxu0 %v1916
        %3698 = vmatpush.bf16.msra.mxu0 %v1912
        %3699 = vmatpush.bf16.msra.mxu0 %v1908
        %3700 = vmatpush.bf16.msra.mxu0 %v1904
        %3701 = vmatpush.bf16.msra.mxu0 %v1900
        %3702 = vmatpush.bf16.msra.mxu0 %v1896
        %3703 = vmatpush.bf16.msra.mxu0 %v1892
        %3704 = vmatmul.bf16.gmra.mxu0 %v574
        %v3705 = vpop.f32.mrf.mxu0
        %v3706 = vadd.f32 %v3657, %v3705
        %v3707 = vpop.f32.mrf.mxu0
        %v3708 = vadd.f32 %v3659, %v3707
        %3709 = vmatmul.bf16.gmra.mxu0 %v582
        %v3710 = vpop.f32.mrf.mxu0
        %v3711 = vadd.f32 %v3662, %v3710
        %v3712 = vpop.f32.mrf.mxu0
        %v3713 = vadd.f32 %v3664, %v3712
        %3714 = vmatmul.bf16.gmra.mxu0 %v590
        %v3715 = vpop.f32.mrf.mxu0
        %v3716 = vadd.f32 %v3667, %v3715
        %v3717 = vpop.f32.mrf.mxu0
        %v3718 = vadd.f32 %v3669, %v3717
        %3719 = vmatmul.bf16.gmra.mxu0 %v598
        %v3720 = vpop.f32.mrf.mxu0
        %v3721 = vadd.f32 %v3672, %v3720
        %v3722 = vpop.f32.mrf.mxu0
        %v3723 = vadd.f32 %v3674, %v3722
        %3724 = vmatmul.bf16.gmra.mxu0 %v606
        %v3725 = vpop.f32.mrf.mxu0
        %v3726 = vadd.f32 %v3677, %v3725
        %v3727 = vpop.f32.mrf.mxu0
        %v3728 = vadd.f32 %v3679, %v3727
        %3729 = vmatmul.bf16.gmra.mxu0 %v614
        %v3730 = vpop.f32.mrf.mxu0
        %v3731 = vadd.f32 %v3682, %v3730
        %v3732 = vpop.f32.mrf.mxu0
        %v3733 = vadd.f32 %v3684, %v3732
        %3734 = vmatmul.bf16.gmra.mxu0 %v622
        %v3735 = vpop.f32.mrf.mxu0
        %v3736 = vadd.f32 %v3687, %v3735
        %v3737 = vpop.f32.mrf.mxu0
        %v3738 = vadd.f32 %v3689, %v3737
        %3739 = vmatmul.bf16.gmra.mxu0 %v630
        %v3740 = vpop.f32.mrf.mxu0
        %v3741 = vadd.f32 %v3692, %v3740
        %v3742 = vpop.f32.mrf.mxu0
        %v3743 = vadd.f32 %v3694, %v3742
        %3744 = vdwg.mxu0
        %v3745 = vpack.c.bf16 %v2532, %v2530
        %v3746 = vpack.c.bf16 %v2924, %v2922
        %v3747 = vpack.c.bf16 %v3316, %v3314
        %v3748 = vpack.c.bf16 %v3708, %v3706
        %v3749 = vpack.c.bf16 %v2537, %v2535
        %v3750 = vpack.c.bf16 %v2929, %v2927
        %v3751 = vpack.c.bf16 %v3321, %v3319
        %v3752 = vpack.c.bf16 %v3713, %v3711
        %v3753 = vpack.c.bf16 %v2542, %v2540
        %v3754 = vpack.c.bf16 %v2934, %v2932
        %v3755 = vpack.c.bf16 %v3326, %v3324
        %v3756 = vpack.c.bf16 %v3718, %v3716
        %v3757 = vpack.c.bf16 %v2547, %v2545
        %v3758 = vpack.c.bf16 %v2939, %v2937
        %v3759 = vpack.c.bf16 %v3331, %v3329
        %v3760 = vpack.c.bf16 %v3723, %v3721
        %v3761 = vpack.c.bf16 %v2552, %v2550
        %v3762 = vpack.c.bf16 %v2944, %v2942
        %v3763 = vpack.c.bf16 %v3336, %v3334
        %v3764 = vpack.c.bf16 %v3728, %v3726
        %v3765 = vpack.c.bf16 %v2557, %v2555
        %v3766 = vpack.c.bf16 %v2949, %v2947
        %v3767 = vpack.c.bf16 %v3341, %v3339
        %v3768 = vpack.c.bf16 %v3733, %v3731
        %v3769 = vpack.c.bf16 %v2562, %v2560
        %v3770 = vpack.c.bf16 %v2954, %v2952
        %v3771 = vpack.c.bf16 %v3346, %v3344
        %v3772 = vpack.c.bf16 %v3738, %v3736
        %v3773 = vpack.c.bf16 %v2567, %v2565
        %v3774 = vpack.c.bf16 %v2959, %v2957
        %v3775 = vpack.c.bf16 %v3351, %v3349
        %v3776 = vpack.c.bf16 %v3743, %v3741
        %v3777 = vld [vmem:[#allocation7] sm:$0xff]
        %v3778 = vld [vmem:[#allocation7 + $0x8] sm:$0xff]
        %v3779 = vld [vmem:[#allocation7 + $0x10] sm:$0xff]
        %v3780 = vld [vmem:[#allocation7 + $0x18] sm:$0xff]
        %v3781 = vld [vmem:[#allocation7 + $0x20] sm:$0xff]
        %v3782 = vld [vmem:[#allocation7 + $0x28] sm:$0xff]
        %v3783 = vld [vmem:[#allocation7 + $0x30] sm:$0xff]
        %v3784 = vld [vmem:[#allocation7 + $0x38] sm:$0xff]
        %v3785 = vld [vmem:[#allocation7 + $0x40] sm:$0xff]
        %v3786 = vld [vmem:[#allocation7 + $0x48] sm:$0xff]
        %v3787 = vld [vmem:[#allocation7 + $0x50] sm:$0xff]
        %v3788 = vld [vmem:[#allocation7 + $0x58] sm:$0xff]
        %v3789 = vld [vmem:[#allocation7 + $0x60] sm:$0xff]
        %v3790 = vld [vmem:[#allocation7 + $0x68] sm:$0xff]
        %v3791 = vld [vmem:[#allocation7 + $0x70] sm:$0xff]
        %v3792 = vld [vmem:[#allocation7 + $0x78] sm:$0xff]
        %v3793 = vld [vmem:[#allocation7 + $0x80] sm:$0xff]
        %v3794 = vld [vmem:[#allocation7 + $0x88] sm:$0xff]
        %v3795 = vld [vmem:[#allocation7 + $0x90] sm:$0xff]
        %v3796 = vld [vmem:[#allocation7 + $0x98] sm:$0xff]
        %v3797 = vld [vmem:[#allocation7 + $0xa0] sm:$0xff]
        %v3798 = vld [vmem:[#allocation7 + $0xa8] sm:$0xff]
        %v3799 = vld [vmem:[#allocation7 + $0xb0] sm:$0xff]
        %v3800 = vld [vmem:[#allocation7 + $0xb8] sm:$0xff]
        %v3801 = vld [vmem:[#allocation7 + $0xc0] sm:$0xff]
        %v3802 = vld [vmem:[#allocation7 + $0xc8] sm:$0xff]
        %v3803 = vld [vmem:[#allocation7 + $0xd0] sm:$0xff]
        %v3804 = vld [vmem:[#allocation7 + $0xd8] sm:$0xff]
        %v3805 = vld [vmem:[#allocation7 + $0xe0] sm:$0xff]
        %v3806 = vld [vmem:[#allocation7 + $0xe8] sm:$0xff]
        %v3807 = vld [vmem:[#allocation7 + $0xf0] sm:$0xff]
        %v3808 = vld [vmem:[#allocation7 + $0xf8] sm:$0xff]
        %v3809 = vld [vmem:[#allocation7 + $0x100] sm:$0xff]
        %v3810 = vld [vmem:[#allocation7 + $0x108] sm:$0xff]
        %v3811 = vld [vmem:[#allocation7 + $0x110] sm:$0xff]
        %v3812 = vld [vmem:[#allocation7 + $0x118] sm:$0xff]
        %v3813 = vld [vmem:[#allocation7 + $0x120] sm:$0xff]
        %v3814 = vld [vmem:[#allocation7 + $0x128] sm:$0xff]
        %v3815 = vld [vmem:[#allocation7 + $0x130] sm:$0xff]
        %v3816 = vld [vmem:[#allocation7 + $0x138] sm:$0xff]
        %v3817 = vld [vmem:[#allocation7 + $0x140] sm:$0xff]
        %v3818 = vld [vmem:[#allocation7 + $0x148] sm:$0xff]
        %v3819 = vld [vmem:[#allocation7 + $0x150] sm:$0xff]
        %v3820 = vld [vmem:[#allocation7 + $0x158] sm:$0xff]
        %v3821 = vld [vmem:[#allocation7 + $0x160] sm:$0xff]
        %v3822 = vld [vmem:[#allocation7 + $0x168] sm:$0xff]
        %v3823 = vld [vmem:[#allocation7 + $0x170] sm:$0xff]
        %v3824 = vld [vmem:[#allocation7 + $0x178] sm:$0xff]
        %v3825 = vld [vmem:[#allocation7 + $0x180] sm:$0xff]
        %v3826 = vld [vmem:[#allocation7 + $0x188] sm:$0xff]
        %v3827 = vld [vmem:[#allocation7 + $0x190] sm:$0xff]
        %v3828 = vld [vmem:[#allocation7 + $0x198] sm:$0xff]
        %v3829 = vld [vmem:[#allocation7 + $0x1a0] sm:$0xff]
        %v3830 = vld [vmem:[#allocation7 + $0x1a8] sm:$0xff]
        %v3831 = vld [vmem:[#allocation7 + $0x1b0] sm:$0xff]
        %v3832 = vld [vmem:[#allocation7 + $0x1b8] sm:$0xff]
        %v3833 = vld [vmem:[#allocation7 + $0x1c0] sm:$0xff]
        %v3834 = vld [vmem:[#allocation7 + $0x1c8] sm:$0xff]
        %v3835 = vld [vmem:[#allocation7 + $0x1d0] sm:$0xff]
        %v3836 = vld [vmem:[#allocation7 + $0x1d8] sm:$0xff]
        %v3837 = vld [vmem:[#allocation7 + $0x1e0] sm:$0xff]
        %v3838 = vld [vmem:[#allocation7 + $0x1e8] sm:$0xff]
        %v3839 = vld [vmem:[#allocation7 + $0x1f0] sm:$0xff]
        %v3840 = vld [vmem:[#allocation7 + $0x1f8] sm:$0xff]
        %v3841 = vld [vmem:[%s4] sm:$0x3]
        %v3843 = vperm.slane %v3841, 0
        %v3844 = vperm.slane %v3841, 1
        %v3911 = vunpack.c.l.b16 %v3777
        %v3912 = vunpack.c.h.b16 %v3777
        %v3913 = vunpack.c.l.b16 %v3778
        %v3914 = vunpack.c.h.b16 %v3778
        %v3915 = vunpack.c.l.b16 %v3779
        %v3916 = vunpack.c.h.b16 %v3779
        %v3917 = vunpack.c.l.b16 %v3780
        %v3918 = vunpack.c.h.b16 %v3780
        %v3919 = vunpack.c.l.b16 %v3781
        %v3920 = vunpack.c.h.b16 %v3781
        %v3921 = vunpack.c.l.b16 %v3782
        %v3922 = vunpack.c.h.b16 %v3782
        %v3923 = vunpack.c.l.b16 %v3783
        %v3924 = vunpack.c.h.b16 %v3783
        %v3925 = vunpack.c.l.b16 %v3784
        %v3926 = vunpack.c.h.b16 %v3784
        %v3927 = vunpack.c.l.b16 %v3785
        %v3928 = vunpack.c.h.b16 %v3785
        %v3929 = vunpack.c.l.b16 %v3786
        %v3930 = vunpack.c.h.b16 %v3786
        %v3931 = vunpack.c.l.b16 %v3787
        %v3932 = vunpack.c.h.b16 %v3787
        %v3933 = vunpack.c.l.b16 %v3788
        %v3934 = vunpack.c.h.b16 %v3788
        %v3935 = vunpack.c.l.b16 %v3789
        %v3936 = vunpack.c.h.b16 %v3789
        %v3937 = vunpack.c.l.b16 %v3790
        %v3938 = vunpack.c.h.b16 %v3790
        %v3939 = vunpack.c.l.b16 %v3791
        %v3940 = vunpack.c.h.b16 %v3791
        %v3941 = vunpack.c.l.b16 %v3792
        %v3942 = vunpack.c.h.b16 %v3792
        %v3943 = vunpack.c.l.b16 %v3793
        %v3944 = vunpack.c.h.b16 %v3793
        %v3945 = vunpack.c.l.b16 %v3794
        %v3946 = vunpack.c.h.b16 %v3794
        %v3947 = vunpack.c.l.b16 %v3795
        %v3948 = vunpack.c.h.b16 %v3795
        %v3949 = vunpack.c.l.b16 %v3796
        %v3950 = vunpack.c.h.b16 %v3796
        %v3951 = vunpack.c.l.b16 %v3797
        %v3952 = vunpack.c.h.b16 %v3797
        %v3953 = vunpack.c.l.b16 %v3798
        %v3954 = vunpack.c.h.b16 %v3798
        %v3955 = vunpack.c.l.b16 %v3799
        %v3956 = vunpack.c.h.b16 %v3799
        %v3957 = vunpack.c.l.b16 %v3800
        %v3958 = vunpack.c.h.b16 %v3800
        %v3959 = vunpack.c.l.b16 %v3801
        %v3960 = vunpack.c.h.b16 %v3801
        %v3961 = vunpack.c.l.b16 %v3802
        %v3962 = vunpack.c.h.b16 %v3802
        %v3963 = vunpack.c.l.b16 %v3803
        %v3964 = vunpack.c.h.b16 %v3803
        %v3965 = vunpack.c.l.b16 %v3804
        %v3966 = vunpack.c.h.b16 %v3804
        %v3967 = vunpack.c.l.b16 %v3805
        %v3968 = vunpack.c.h.b16 %v3805
        %v3969 = vunpack.c.l.b16 %v3806
        %v3970 = vunpack.c.h.b16 %v3806
        %v3971 = vunpack.c.l.b16 %v3807
        %v3972 = vunpack.c.h.b16 %v3807
        %v3973 = vunpack.c.l.b16 %v3808
        %v3974 = vunpack.c.h.b16 %v3808
        %v3975 = vunpack.c.l.b16 %v3809
        %v3976 = vunpack.c.h.b16 %v3809
        %v3977 = vunpack.c.l.b16 %v3810
        %v3978 = vunpack.c.h.b16 %v3810
        %v3979 = vunpack.c.l.b16 %v3811
        %v3980 = vunpack.c.h.b16 %v3811
        %v3981 = vunpack.c.l.b16 %v3812
        %v3982 = vunpack.c.h.b16 %v3812
        %v3983 = vunpack.c.l.b16 %v3813
        %v3984 = vunpack.c.h.b16 %v3813
        %v3985 = vunpack.c.l.b16 %v3814
        %v3986 = vunpack.c.h.b16 %v3814
        %v3987 = vunpack.c.l.b16 %v3815
        %v3988 = vunpack.c.h.b16 %v3815
        %v3989 = vunpack.c.l.b16 %v3816
        %v3990 = vunpack.c.h.b16 %v3816
        %v3991 = vunpack.c.l.b16 %v3817
        %v3992 = vunpack.c.h.b16 %v3817
        %v3993 = vunpack.c.l.b16 %v3818
        %v3994 = vunpack.c.h.b16 %v3818
        %v3995 = vunpack.c.l.b16 %v3819
        %v3996 = vunpack.c.h.b16 %v3819
        %v3997 = vunpack.c.l.b16 %v3820
        %v3998 = vunpack.c.h.b16 %v3820
        %v3999 = vunpack.c.l.b16 %v3821
        %v4000 = vunpack.c.h.b16 %v3821
        %v4001 = vunpack.c.l.b16 %v3822
        %v4002 = vunpack.c.h.b16 %v3822
        %v4003 = vunpack.c.l.b16 %v3823
        %v4004 = vunpack.c.h.b16 %v3823
        %v4005 = vunpack.c.l.b16 %v3824
        %v4006 = vunpack.c.h.b16 %v3824
        %v4007 = vunpack.c.l.b16 %v3825
        %v4008 = vunpack.c.h.b16 %v3825
        %v4009 = vunpack.c.l.b16 %v3826
        %v4010 = vunpack.c.h.b16 %v3826
        %v4011 = vunpack.c.l.b16 %v3827
        %v4012 = vunpack.c.h.b16 %v3827
        %v4013 = vunpack.c.l.b16 %v3828
        %v4014 = vunpack.c.h.b16 %v3828
        %v4015 = vunpack.c.l.b16 %v3829
        %v4016 = vunpack.c.h.b16 %v3829
        %v4017 = vunpack.c.l.b16 %v3830
        %v4018 = vunpack.c.h.b16 %v3830
        %v4019 = vunpack.c.l.b16 %v3831
        %v4020 = vunpack.c.h.b16 %v3831
        %v4021 = vunpack.c.l.b16 %v3832
        %v4022 = vunpack.c.h.b16 %v3832
        %v4023 = vunpack.c.l.b16 %v3833
        %v4024 = vunpack.c.h.b16 %v3833
        %v4025 = vunpack.c.l.b16 %v3834
        %v4026 = vunpack.c.h.b16 %v3834
        %v4027 = vunpack.c.l.b16 %v3835
        %v4028 = vunpack.c.h.b16 %v3835
        %v4029 = vunpack.c.l.b16 %v3836
        %v4030 = vunpack.c.h.b16 %v3836
        %v4031 = vunpack.c.l.b16 %v3837
        %v4032 = vunpack.c.h.b16 %v3837
        %v4033 = vunpack.c.l.b16 %v3838
        %v4034 = vunpack.c.h.b16 %v3838
        %v4035 = vunpack.c.l.b16 %v3839
        %v4036 = vunpack.c.h.b16 %v3839
        %v4037 = vunpack.c.l.b16 %v3840
        %v4038 = vunpack.c.h.b16 %v3840
        %v4039 = vpack.c.b16 %v3913, %v3911
        %v4040 = vpack.c.b16 %v3914, %v3912
        %v4041 = vpack.c.b16 %v3917, %v3915
        %v4042 = vpack.c.b16 %v3918, %v3916
        %v4043 = vpack.c.b16 %v3921, %v3919
        %v4044 = vpack.c.b16 %v3922, %v3920
        %v4045 = vpack.c.b16 %v3925, %v3923
        %v4046 = vpack.c.b16 %v3926, %v3924
        %v4047 = vpack.c.b16 %v3929, %v3927
        %v4048 = vpack.c.b16 %v3930, %v3928
        %v4049 = vpack.c.b16 %v3933, %v3931
        %v4050 = vpack.c.b16 %v3934, %v3932
        %v4051 = vpack.c.b16 %v3937, %v3935
        %v4052 = vpack.c.b16 %v3938, %v3936
        %v4053 = vpack.c.b16 %v3941, %v3939
        %v4054 = vpack.c.b16 %v3942, %v3940
        %v4055 = vpack.c.b16 %v3945, %v3943
        %v4056 = vpack.c.b16 %v3946, %v3944
        %v4057 = vpack.c.b16 %v3949, %v3947
        %v4058 = vpack.c.b16 %v3950, %v3948
        %v4059 = vpack.c.b16 %v3953, %v3951
        %v4060 = vpack.c.b16 %v3954, %v3952
        %v4061 = vpack.c.b16 %v3957, %v3955
        %v4062 = vpack.c.b16 %v3958, %v3956
        %v4063 = vpack.c.b16 %v3961, %v3959
        %v4064 = vpack.c.b16 %v3962, %v3960
        %v4065 = vpack.c.b16 %v3965, %v3963
        %v4066 = vpack.c.b16 %v3966, %v3964
        %v4067 = vpack.c.b16 %v3969, %v3967
        %v4068 = vpack.c.b16 %v3970, %v3968
        %v4069 = vpack.c.b16 %v3973, %v3971
        %v4070 = vpack.c.b16 %v3974, %v3972
        %v4071 = vpack.c.b16 %v3977, %v3975
        %v4072 = vpack.c.b16 %v3978, %v3976
        %v4073 = vpack.c.b16 %v3981, %v3979
        %v4074 = vpack.c.b16 %v3982, %v3980
        %v4075 = vpack.c.b16 %v3985, %v3983
        %v4076 = vpack.c.b16 %v3986, %v3984
        %v4077 = vpack.c.b16 %v3989, %v3987
        %v4078 = vpack.c.b16 %v3990, %v3988
        %v4079 = vpack.c.b16 %v3993, %v3991
        %v4080 = vpack.c.b16 %v3994, %v3992
        %v4081 = vpack.c.b16 %v3997, %v3995
        %v4082 = vpack.c.b16 %v3998, %v3996
        %v4083 = vpack.c.b16 %v4001, %v3999
        %v4084 = vpack.c.b16 %v4002, %v4000
        %v4085 = vpack.c.b16 %v4005, %v4003
        %v4086 = vpack.c.b16 %v4006, %v4004
        %v4087 = vpack.c.b16 %v4009, %v4007
        %v4088 = vpack.c.b16 %v4010, %v4008
        %v4089 = vpack.c.b16 %v4013, %v4011
        %v4090 = vpack.c.b16 %v4014, %v4012
        %v4091 = vpack.c.b16 %v4017, %v4015
        %v4092 = vpack.c.b16 %v4018, %v4016
        %v4093 = vpack.c.b16 %v4021, %v4019
        %v4094 = vpack.c.b16 %v4022, %v4020
        %v4095 = vpack.c.b16 %v4025, %v4023
        %v4096 = vpack.c.b16 %v4026, %v4024
        %v4097 = vpack.c.b16 %v4029, %v4027
        %v4098 = vpack.c.b16 %v4030, %v4028
        %v4099 = vpack.c.b16 %v4033, %v4031
        %v4100 = vpack.c.b16 %v4034, %v4032
        %v4101 = vpack.c.b16 %v4037, %v4035
        %v4102 = vpack.c.b16 %v4038, %v4036
        %4167 = vmatpush.bf16.msra.mxu0 %v4053
        %4168 = vmatpush.bf16.msra.mxu0 %v4051
        %4169 = vmatpush.bf16.msra.mxu0 %v4049
        %4170 = vmatpush.bf16.msra.mxu0 %v4047
        %4171 = vmatpush.bf16.msra.mxu0 %v4045
        %4172 = vmatpush.bf16.msra.mxu0 %v4043
        %4173 = vmatpush.bf16.msra.mxu0 %v4041
        %4174 = vmatpush.bf16.msra.mxu0 %v4039
        %4175 = vmatmul.bf16.gmra.mxu0 %v3745
        %v4176 = vpop.f32.mrf.mxu0
        %v4177 = vadd.f32 %v3843, %v4176
        %v4178 = vpop.f32.mrf.mxu0
        %v4179 = vadd.f32 %v3843, %v4178
        %4180 = vmatmul.bf16.gmra.mxu0 %v3749
        %v4181 = vpop.f32.mrf.mxu0
        %v4182 = vadd.f32 %v3843, %v4181
        %v4183 = vpop.f32.mrf.mxu0
        %v4184 = vadd.f32 %v3843, %v4183
        %4185 = vmatmul.bf16.gmra.mxu0 %v3753
        %v4186 = vpop.f32.mrf.mxu0
        %v4187 = vadd.f32 %v3843, %v4186
        %v4188 = vpop.f32.mrf.mxu0
        %v4189 = vadd.f32 %v3843, %v4188
        %4190 = vmatmul.bf16.gmra.mxu0 %v3757
        %v4191 = vpop.f32.mrf.mxu0
        %v4192 = vadd.f32 %v3843, %v4191
        %v4193 = vpop.f32.mrf.mxu0
        %v4194 = vadd.f32 %v3843, %v4193
        %4195 = vmatmul.bf16.gmra.mxu0 %v3761
        %v4196 = vpop.f32.mrf.mxu0
        %v4197 = vadd.f32 %v3843, %v4196
        %v4198 = vpop.f32.mrf.mxu0
        %v4199 = vadd.f32 %v3843, %v4198
        %4200 = vmatmul.bf16.gmra.mxu0 %v3765
        %v4201 = vpop.f32.mrf.mxu0
        %v4202 = vadd.f32 %v3843, %v4201
        %v4203 = vpop.f32.mrf.mxu0
        %v4204 = vadd.f32 %v3843, %v4203
        %4205 = vmatmul.bf16.gmra.mxu0 %v3769
        %v4206 = vpop.f32.mrf.mxu0
        %v4207 = vadd.f32 %v3843, %v4206
        %v4208 = vpop.f32.mrf.mxu0
        %v4209 = vadd.f32 %v3843, %v4208
        %4210 = vmatmul.bf16.gmra.mxu0 %v3773
        %v4211 = vpop.f32.mrf.mxu0
        %v4212 = vadd.f32 %v3843, %v4211
        %v4213 = vpop.f32.mrf.mxu0
        %v4214 = vadd.f32 %v3843, %v4213
        %4215 = vdwg.mxu0
        %4216 = vmatpush.bf16.msra.mxu0 %v4069
        %4217 = vmatpush.bf16.msra.mxu0 %v4067
        %4218 = vmatpush.bf16.msra.mxu0 %v4065
        %4219 = vmatpush.bf16.msra.mxu0 %v4063
        %4220 = vmatpush.bf16.msra.mxu0 %v4061
        %4221 = vmatpush.bf16.msra.mxu0 %v4059
        %4222 = vmatpush.bf16.msra.mxu0 %v4057
        %4223 = vmatpush.bf16.msra.mxu0 %v4055
        %4224 = vmatmul.bf16.gmra.mxu0 %v3746
        %v4225 = vpop.f32.mrf.mxu0
        %v4226 = vadd.f32 %v4177, %v4225
        %v4227 = vpop.f32.mrf.mxu0
        %v4228 = vadd.f32 %v4179, %v4227
        %4229 = vmatmul.bf16.gmra.mxu0 %v3750
        %v4230 = vpop.f32.mrf.mxu0
        %v4231 = vadd.f32 %v4182, %v4230
        %v4232 = vpop.f32.mrf.mxu0
        %v4233 = vadd.f32 %v4184, %v4232
        %4234 = vmatmul.bf16.gmra.mxu0 %v3754
        %v4235 = vpop.f32.mrf.mxu0
        %v4236 = vadd.f32 %v4187, %v4235
        %v4237 = vpop.f32.mrf.mxu0
        %v4238 = vadd.f32 %v4189, %v4237
        %4239 = vmatmul.bf16.gmra.mxu0 %v3758
        %v4240 = vpop.f32.mrf.mxu0
        %v4241 = vadd.f32 %v4192, %v4240
        %v4242 = vpop.f32.mrf.mxu0
        %v4243 = vadd.f32 %v4194, %v4242
        %4244 = vmatmul.bf16.gmra.mxu0 %v3762
        %v4245 = vpop.f32.mrf.mxu0
        %v4246 = vadd.f32 %v4197, %v4245
        %v4247 = vpop.f32.mrf.mxu0
        %v4248 = vadd.f32 %v4199, %v4247
        %4249 = vmatmul.bf16.gmra.mxu0 %v3766
        %v4250 = vpop.f32.mrf.mxu0
        %v4251 = vadd.f32 %v4202, %v4250
        %v4252 = vpop.f32.mrf.mxu0
        %v4253 = vadd.f32 %v4204, %v4252
        %4254 = vmatmul.bf16.gmra.mxu0 %v3770
        %v4255 = vpop.f32.mrf.mxu0
        %v4256 = vadd.f32 %v4207, %v4255
        %v4257 = vpop.f32.mrf.mxu0
        %v4258 = vadd.f32 %v4209, %v4257
        %4259 = vmatmul.bf16.gmra.mxu0 %v3774
        %v4260 = vpop.f32.mrf.mxu0
        %v4261 = vadd.f32 %v4212, %v4260
        %v4262 = vpop.f32.mrf.mxu0
        %v4263 = vadd.f32 %v4214, %v4262
        %4264 = vdwg.mxu0
        %4265 = vmatpush.bf16.msra.mxu0 %v4085
        %4266 = vmatpush.bf16.msra.mxu0 %v4083
        %4267 = vmatpush.bf16.msra.mxu0 %v4081
        %4268 = vmatpush.bf16.msra.mxu0 %v4079
        %4269 = vmatpush.bf16.msra.mxu0 %v4077
        %4270 = vmatpush.bf16.msra.mxu0 %v4075
        %4271 = vmatpush.bf16.msra.mxu0 %v4073
        %4272 = vmatpush.bf16.msra.mxu0 %v4071
        %4273 = vmatmul.bf16.gmra.mxu0 %v3747
        %v4274 = vpop.f32.mrf.mxu0
        %v4275 = vadd.f32 %v4226, %v4274
        %v4276 = vpop.f32.mrf.mxu0
        %v4277 = vadd.f32 %v4228, %v4276
        %4278 = vmatmul.bf16.gmra.mxu0 %v3751
        %v4279 = vpop.f32.mrf.mxu0
        %v4280 = vadd.f32 %v4231, %v4279
        %v4281 = vpop.f32.mrf.mxu0
        %v4282 = vadd.f32 %v4233, %v4281
        %4283 = vmatmul.bf16.gmra.mxu0 %v3755
        %v4284 = vpop.f32.mrf.mxu0
        %v4285 = vadd.f32 %v4236, %v4284
        %v4286 = vpop.f32.mrf.mxu0
        %v4287 = vadd.f32 %v4238, %v4286
        %4288 = vmatmul.bf16.gmra.mxu0 %v3759
        %v4289 = vpop.f32.mrf.mxu0
        %v4290 = vadd.f32 %v4241, %v4289
        %v4291 = vpop.f32.mrf.mxu0
        %v4292 = vadd.f32 %v4243, %v4291
        %4293 = vmatmul.bf16.gmra.mxu0 %v3763
        %v4294 = vpop.f32.mrf.mxu0
        %v4295 = vadd.f32 %v4246, %v4294
        %v4296 = vpop.f32.mrf.mxu0
        %v4297 = vadd.f32 %v4248, %v4296
        %4298 = vmatmul.bf16.gmra.mxu0 %v3767
        %v4299 = vpop.f32.mrf.mxu0
        %v4300 = vadd.f32 %v4251, %v4299
        %v4301 = vpop.f32.mrf.mxu0
        %v4302 = vadd.f32 %v4253, %v4301
        %4303 = vmatmul.bf16.gmra.mxu0 %v3771
        %v4304 = vpop.f32.mrf.mxu0
        %v4305 = vadd.f32 %v4256, %v4304
        %v4306 = vpop.f32.mrf.mxu0
        %v4307 = vadd.f32 %v4258, %v4306
        %4308 = vmatmul.bf16.gmra.mxu0 %v3775
        %v4309 = vpop.f32.mrf.mxu0
        %v4310 = vadd.f32 %v4261, %v4309
        %v4311 = vpop.f32.mrf.mxu0
        %v4312 = vadd.f32 %v4263, %v4311
        %4313 = vdwg.mxu0
        %4314 = vmatpush.bf16.msra.mxu0 %v4101
        %4315 = vmatpush.bf16.msra.mxu0 %v4099
        %4316 = vmatpush.bf16.msra.mxu0 %v4097
        %4317 = vmatpush.bf16.msra.mxu0 %v4095
        %4318 = vmatpush.bf16.msra.mxu0 %v4093
        %4319 = vmatpush.bf16.msra.mxu0 %v4091
        %4320 = vmatpush.bf16.msra.mxu0 %v4089
        %4321 = vmatpush.bf16.msra.mxu0 %v4087
        %4322 = vmatmul.bf16.gmra.mxu0 %v3748
        %v4323 = vpop.f32.mrf.mxu0
        %v4324 = vadd.f32 %v4275, %v4323
        %v4325 = vpop.f32.mrf.mxu0
        %v4326 = vadd.f32 %v4277, %v4325
        %4327 = vmatmul.bf16.gmra.mxu0 %v3752
        %v4328 = vpop.f32.mrf.mxu0
        %v4329 = vadd.f32 %v4280, %v4328
        %v4330 = vpop.f32.mrf.mxu0
        %v4331 = vadd.f32 %v4282, %v4330
        %4332 = vmatmul.bf16.gmra.mxu0 %v3756
        %v4333 = vpop.f32.mrf.mxu0
        %v4334 = vadd.f32 %v4285, %v4333
        %v4335 = vpop.f32.mrf.mxu0
        %v4336 = vadd.f32 %v4287, %v4335
        %4337 = vmatmul.bf16.gmra.mxu0 %v3760
        %v4338 = vpop.f32.mrf.mxu0
        %v4339 = vadd.f32 %v4290, %v4338
        %v4340 = vpop.f32.mrf.mxu0
        %v4341 = vadd.f32 %v4292, %v4340
        %4342 = vmatmul.bf16.gmra.mxu0 %v3764
        %v4343 = vpop.f32.mrf.mxu0
        %v4344 = vadd.f32 %v4295, %v4343
        %v4345 = vpop.f32.mrf.mxu0
        %v4346 = vadd.f32 %v4297, %v4345
        %4347 = vmatmul.bf16.gmra.mxu0 %v3768
        %v4348 = vpop.f32.mrf.mxu0
        %v4349 = vadd.f32 %v4300, %v4348
        %v4350 = vpop.f32.mrf.mxu0
        %v4351 = vadd.f32 %v4302, %v4350
        %4352 = vmatmul.bf16.gmra.mxu0 %v3772
        %v4353 = vpop.f32.mrf.mxu0
        %v4354 = vadd.f32 %v4305, %v4353
        %v4355 = vpop.f32.mrf.mxu0
        %v4356 = vadd.f32 %v4307, %v4355
        %4357 = vmatmul.bf16.gmra.mxu0 %v3776
        %v4358 = vpop.f32.mrf.mxu0
        %v4359 = vadd.f32 %v4310, %v4358
        %v4360 = vpop.f32.mrf.mxu0
        %v4361 = vadd.f32 %v4312, %v4360
        %4362 = vdwg.mxu0
        %4363 = vmatpush.bf16.msra.mxu0 %v4054
        %4364 = vmatpush.bf16.msra.mxu0 %v4052
        %4365 = vmatpush.bf16.msra.mxu0 %v4050
        %4366 = vmatpush.bf16.msra.mxu0 %v4048
        %4367 = vmatpush.bf16.msra.mxu0 %v4046
        %4368 = vmatpush.bf16.msra.mxu0 %v4044
        %4369 = vmatpush.bf16.msra.mxu0 %v4042
        %4370 = vmatpush.bf16.msra.mxu0 %v4040
        %4371 = vmatmul.bf16.gmra.mxu0 %v3745
        %v4372 = vpop.f32.mrf.mxu0
        %v4373 = vadd.f32 %v3844, %v4372
        %v4374 = vpop.f32.mrf.mxu0
        %v4375 = vadd.f32 %v3844, %v4374
        %4376 = vmatmul.bf16.gmra.mxu0 %v3749
        %v4377 = vpop.f32.mrf.mxu0
        %v4378 = vadd.f32 %v3844, %v4377
        %v4379 = vpop.f32.mrf.mxu0
        %v4380 = vadd.f32 %v3844, %v4379
        %4381 = vmatmul.bf16.gmra.mxu0 %v3753
        %v4382 = vpop.f32.mrf.mxu0
        %v4383 = vadd.f32 %v3844, %v4382
        %v4384 = vpop.f32.mrf.mxu0
        %v4385 = vadd.f32 %v3844, %v4384
        %4386 = vmatmul.bf16.gmra.mxu0 %v3757
        %v4387 = vpop.f32.mrf.mxu0
        %v4388 = vadd.f32 %v3844, %v4387
        %v4389 = vpop.f32.mrf.mxu0
        %v4390 = vadd.f32 %v3844, %v4389
        %4391 = vmatmul.bf16.gmra.mxu0 %v3761
        %v4392 = vpop.f32.mrf.mxu0
        %v4393 = vadd.f32 %v3844, %v4392
        %v4394 = vpop.f32.mrf.mxu0
        %v4395 = vadd.f32 %v3844, %v4394
        %4396 = vmatmul.bf16.gmra.mxu0 %v3765
        %v4397 = vpop.f32.mrf.mxu0
        %v4398 = vadd.f32 %v3844, %v4397
        %v4399 = vpop.f32.mrf.mxu0
        %v4400 = vadd.f32 %v3844, %v4399
        %4401 = vmatmul.bf16.gmra.mxu0 %v3769
        %v4402 = vpop.f32.mrf.mxu0
        %v4403 = vadd.f32 %v3844, %v4402
        %v4404 = vpop.f32.mrf.mxu0
        %v4405 = vadd.f32 %v3844, %v4404
        %4406 = vmatmul.bf16.gmra.mxu0 %v3773
        %v4407 = vpop.f32.mrf.mxu0
        %v4408 = vadd.f32 %v3844, %v4407
        %v4409 = vpop.f32.mrf.mxu0
        %v4410 = vadd.f32 %v3844, %v4409
        %4411 = vdwg.mxu0
        %4412 = vmatpush.bf16.msra.mxu0 %v4070
        %4413 = vmatpush.bf16.msra.mxu0 %v4068
        %4414 = vmatpush.bf16.msra.mxu0 %v4066
        %4415 = vmatpush.bf16.msra.mxu0 %v4064
        %4416 = vmatpush.bf16.msra.mxu0 %v4062
        %4417 = vmatpush.bf16.msra.mxu0 %v4060
        %4418 = vmatpush.bf16.msra.mxu0 %v4058
        %4419 = vmatpush.bf16.msra.mxu0 %v4056
        %4420 = vmatmul.bf16.gmra.mxu0 %v3746
        %v4421 = vpop.f32.mrf.mxu0
        %v4422 = vadd.f32 %v4373, %v4421
        %v4423 = vpop.f32.mrf.mxu0
        %v4424 = vadd.f32 %v4375, %v4423
        %4425 = vmatmul.bf16.gmra.mxu0 %v3750
        %v4426 = vpop.f32.mrf.mxu0
        %v4427 = vadd.f32 %v4378, %v4426
        %v4428 = vpop.f32.mrf.mxu0
        %v4429 = vadd.f32 %v4380, %v4428
        %4430 = vmatmul.bf16.gmra.mxu0 %v3754
        %v4431 = vpop.f32.mrf.mxu0
        %v4432 = vadd.f32 %v4383, %v4431
        %v4433 = vpop.f32.mrf.mxu0
        %v4434 = vadd.f32 %v4385, %v4433
        %4435 = vmatmul.bf16.gmra.mxu0 %v3758
        %v4436 = vpop.f32.mrf.mxu0
        %v4437 = vadd.f32 %v4388, %v4436
        %v4438 = vpop.f32.mrf.mxu0
        %v4439 = vadd.f32 %v4390, %v4438
        %4440 = vmatmul.bf16.gmra.mxu0 %v3762
        %v4441 = vpop.f32.mrf.mxu0
        %v4442 = vadd.f32 %v4393, %v4441
        %v4443 = vpop.f32.mrf.mxu0
        %v4444 = vadd.f32 %v4395, %v4443
        %4445 = vmatmul.bf16.gmra.mxu0 %v3766
        %v4446 = vpop.f32.mrf.mxu0
        %v4447 = vadd.f32 %v4398, %v4446
        %v4448 = vpop.f32.mrf.mxu0
        %v4449 = vadd.f32 %v4400, %v4448
        %4450 = vmatmul.bf16.gmra.mxu0 %v3770
        %v4451 = vpop.f32.mrf.mxu0
        %v4452 = vadd.f32 %v4403, %v4451
        %v4453 = vpop.f32.mrf.mxu0
        %v4454 = vadd.f32 %v4405, %v4453
        %4455 = vmatmul.bf16.gmra.mxu0 %v3774
        %v4456 = vpop.f32.mrf.mxu0
        %v4457 = vadd.f32 %v4408, %v4456
        %v4458 = vpop.f32.mrf.mxu0
        %v4459 = vadd.f32 %v4410, %v4458
        %4460 = vdwg.mxu0
        %4461 = vmatpush.bf16.msra.mxu0 %v4086
        %4462 = vmatpush.bf16.msra.mxu0 %v4084
        %4463 = vmatpush.bf16.msra.mxu0 %v4082
        %4464 = vmatpush.bf16.msra.mxu0 %v4080
        %4465 = vmatpush.bf16.msra.mxu0 %v4078
        %4466 = vmatpush.bf16.msra.mxu0 %v4076
        %4467 = vmatpush.bf16.msra.mxu0 %v4074
        %4468 = vmatpush.bf16.msra.mxu0 %v4072
        %4469 = vmatmul.bf16.gmra.mxu0 %v3747
        %v4470 = vpop.f32.mrf.mxu0
        %v4471 = vadd.f32 %v4422, %v4470
        %v4472 = vpop.f32.mrf.mxu0
        %v4473 = vadd.f32 %v4424, %v4472
        %4474 = vmatmul.bf16.gmra.mxu0 %v3751
        %v4475 = vpop.f32.mrf.mxu0
        %v4476 = vadd.f32 %v4427, %v4475
        %v4477 = vpop.f32.mrf.mxu0
        %v4478 = vadd.f32 %v4429, %v4477
        %4479 = vmatmul.bf16.gmra.mxu0 %v3755
        %v4480 = vpop.f32.mrf.mxu0
        %v4481 = vadd.f32 %v4432, %v4480
        %v4482 = vpop.f32.mrf.mxu0
        %v4483 = vadd.f32 %v4434, %v4482
        %4484 = vmatmul.bf16.gmra.mxu0 %v3759
        %v4485 = vpop.f32.mrf.mxu0
        %v4486 = vadd.f32 %v4437, %v4485
        %v4487 = vpop.f32.mrf.mxu0
        %v4488 = vadd.f32 %v4439, %v4487
        %4489 = vmatmul.bf16.gmra.mxu0 %v3763
        %v4490 = vpop.f32.mrf.mxu0
        %v4491 = vadd.f32 %v4442, %v4490
        %v4492 = vpop.f32.mrf.mxu0
        %v4493 = vadd.f32 %v4444, %v4492
        %4494 = vmatmul.bf16.gmra.mxu0 %v3767
        %v4495 = vpop.f32.mrf.mxu0
        %v4496 = vadd.f32 %v4447, %v4495
        %v4497 = vpop.f32.mrf.mxu0
        %v4498 = vadd.f32 %v4449, %v4497
        %4499 = vmatmul.bf16.gmra.mxu0 %v3771
        %v4500 = vpop.f32.mrf.mxu0
        %v4501 = vadd.f32 %v4452, %v4500
        %v4502 = vpop.f32.mrf.mxu0
        %v4503 = vadd.f32 %v4454, %v4502
        %4504 = vmatmul.bf16.gmra.mxu0 %v3775
        %v4505 = vpop.f32.mrf.mxu0
        %v4506 = vadd.f32 %v4457, %v4505
        %v4507 = vpop.f32.mrf.mxu0
        %v4508 = vadd.f32 %v4459, %v4507
        %4509 = vdwg.mxu0
        %4510 = vmatpush.bf16.msra.mxu0 %v4102
        %4511 = vmatpush.bf16.msra.mxu0 %v4100
        %4512 = vmatpush.bf16.msra.mxu0 %v4098
        %4513 = vmatpush.bf16.msra.mxu0 %v4096
        %4514 = vmatpush.bf16.msra.mxu0 %v4094
        %4515 = vmatpush.bf16.msra.mxu0 %v4092
        %4516 = vmatpush.bf16.msra.mxu0 %v4090
        %4517 = vmatpush.bf16.msra.mxu0 %v4088
        %4518 = vmatmul.bf16.gmra.mxu0 %v3748
        %v4519 = vpop.f32.mrf.mxu0
        %v4520 = vadd.f32 %v4471, %v4519
        %v4521 = vpop.f32.mrf.mxu0
        %v4522 = vadd.f32 %v4473, %v4521
        %4523 = vmatmul.bf16.gmra.mxu0 %v3752
        %v4524 = vpop.f32.mrf.mxu0
        %v4525 = vadd.f32 %v4476, %v4524
        %v4526 = vpop.f32.mrf.mxu0
        %v4527 = vadd.f32 %v4478, %v4526
        %4528 = vmatmul.bf16.gmra.mxu0 %v3756
        %v4529 = vpop.f32.mrf.mxu0
        %v4530 = vadd.f32 %v4481, %v4529
        %v4531 = vpop.f32.mrf.mxu0
        %v4532 = vadd.f32 %v4483, %v4531
        %4533 = vmatmul.bf16.gmra.mxu0 %v3760
        %v4534 = vpop.f32.mrf.mxu0
        %v4535 = vadd.f32 %v4486, %v4534
        %v4536 = vpop.f32.mrf.mxu0
        %v4537 = vadd.f32 %v4488, %v4536
        %4538 = vmatmul.bf16.gmra.mxu0 %v3764
        %v4539 = vpop.f32.mrf.mxu0
        %v4540 = vadd.f32 %v4491, %v4539
        %v4541 = vpop.f32.mrf.mxu0
        %v4542 = vadd.f32 %v4493, %v4541
        %4543 = vmatmul.bf16.gmra.mxu0 %v3768
        %v4544 = vpop.f32.mrf.mxu0
        %v4545 = vadd.f32 %v4496, %v4544
        %v4546 = vpop.f32.mrf.mxu0
        %v4547 = vadd.f32 %v4498, %v4546
        %4548 = vmatmul.bf16.gmra.mxu0 %v3772
        %v4549 = vpop.f32.mrf.mxu0
        %v4550 = vadd.f32 %v4501, %v4549
        %v4551 = vpop.f32.mrf.mxu0
        %v4552 = vadd.f32 %v4503, %v4551
        %4553 = vmatmul.bf16.gmra.mxu0 %v3776
        %v4554 = vpop.f32.mrf.mxu0
        %v4555 = vadd.f32 %v4506, %v4554
        %v4556 = vpop.f32.mrf.mxu0
        %v4557 = vadd.f32 %v4508, %v4556
        %4558 = vdwg.mxu0
        %v4559 = vpack.c.bf16 %v4326, %v4324
        %v4560 = vpack.c.bf16 %v4522, %v4520
        %v4561 = vpack.c.bf16 %v4331, %v4329
        %v4562 = vpack.c.bf16 %v4527, %v4525
        %v4563 = vpack.c.bf16 %v4336, %v4334
        %v4564 = vpack.c.bf16 %v4532, %v4530
        %v4565 = vpack.c.bf16 %v4341, %v4339
        %v4566 = vpack.c.bf16 %v4537, %v4535
        %v4567 = vpack.c.bf16 %v4346, %v4344
        %v4568 = vpack.c.bf16 %v4542, %v4540
        %v4569 = vpack.c.bf16 %v4351, %v4349
        %v4570 = vpack.c.bf16 %v4547, %v4545
        %v4571 = vpack.c.bf16 %v4356, %v4354
        %v4572 = vpack.c.bf16 %v4552, %v4550
        %v4573 = vpack.c.bf16 %v4361, %v4359
        %v4574 = vpack.c.bf16 %v4557, %v4555
        %v4575 = vld [vmem:[#allocation9] sm:$0xf]
        %v4576 = vld [vmem:[#allocation9 + $0x4] sm:$0xf]
        %v4577 = vld [vmem:[#allocation9 + $0x8] sm:$0xf]
        %v4578 = vld [vmem:[#allocation9 + $0xc] sm:$0xf]
        %v4579 = vld [vmem:[#allocation9 + $0x10] sm:$0xf]
        %v4580 = vld [vmem:[#allocation9 + $0x14] sm:$0xf]
        %v4581 = vld [vmem:[#allocation9 + $0x18] sm:$0xf]
        %v4582 = vld [vmem:[#allocation9 + $0x1c] sm:$0xf]
        %v4583 = vld [vmem:[#allocation9 + $0x20] sm:$0xf]
        %v4584 = vld [vmem:[#allocation9 + $0x24] sm:$0xf]
        %v4585 = vld [vmem:[#allocation9 + $0x28] sm:$0xf]
        %v4586 = vld [vmem:[#allocation9 + $0x2c] sm:$0xf]
        %v4587 = vld [vmem:[#allocation9 + $0x30] sm:$0xf]
        %v4588 = vld [vmem:[#allocation9 + $0x34] sm:$0xf]
        %v4589 = vld [vmem:[#allocation9 + $0x38] sm:$0xf]
        %v4590 = vld [vmem:[#allocation9 + $0x3c] sm:$0xf]
        %v4591 = vld [vmem:[#allocation9 + $0x40] sm:$0xf]
        %v4592 = vld [vmem:[#allocation9 + $0x44] sm:$0xf]
        %v4593 = vld [vmem:[#allocation9 + $0x48] sm:$0xf]
        %v4594 = vld [vmem:[#allocation9 + $0x4c] sm:$0xf]
        %v4595 = vld [vmem:[#allocation9 + $0x50] sm:$0xf]
        %v4596 = vld [vmem:[#allocation9 + $0x54] sm:$0xf]
        %v4597 = vld [vmem:[#allocation9 + $0x58] sm:$0xf]
        %v4598 = vld [vmem:[#allocation9 + $0x5c] sm:$0xf]
        %v4599 = vld [vmem:[#allocation9 + $0x60] sm:$0xf]
        %v4600 = vld [vmem:[#allocation9 + $0x64] sm:$0xf]
        %v4601 = vld [vmem:[#allocation9 + $0x68] sm:$0xf]
        %v4602 = vld [vmem:[#allocation9 + $0x6c] sm:$0xf]
        %v4603 = vld [vmem:[#allocation9 + $0x70] sm:$0xf]
        %v4604 = vld [vmem:[#allocation9 + $0x74] sm:$0xf]
        %v4605 = vld [vmem:[#allocation9 + $0x78] sm:$0xf]
        %v4606 = vld [vmem:[#allocation9 + $0x7c] sm:$0xf]
        %v4607 = vld [vmem:[%s6] sm:$0x1]
        %v4609 = vperm.slane %v4607, 0
        %v4643 = vunpack.c.l.b16 %v4575
        %v4644 = vunpack.c.l.b16 %v4576
        %v4645 = vunpack.c.l.b16 %v4577
        %v4646 = vunpack.c.l.b16 %v4578
        %v4647 = vunpack.c.l.b16 %v4579
        %v4648 = vunpack.c.l.b16 %v4580
        %v4649 = vunpack.c.l.b16 %v4581
        %v4650 = vunpack.c.l.b16 %v4582
        %v4651 = vunpack.c.l.b16 %v4583
        %v4652 = vunpack.c.l.b16 %v4584
        %v4653 = vunpack.c.l.b16 %v4585
        %v4654 = vunpack.c.l.b16 %v4586
        %v4655 = vunpack.c.l.b16 %v4587
        %v4656 = vunpack.c.l.b16 %v4588
        %v4657 = vunpack.c.l.b16 %v4589
        %v4658 = vunpack.c.l.b16 %v4590
        %v4659 = vunpack.c.l.b16 %v4591
        %v4660 = vunpack.c.l.b16 %v4592
        %v4661 = vunpack.c.l.b16 %v4593
        %v4662 = vunpack.c.l.b16 %v4594
        %v4663 = vunpack.c.l.b16 %v4595
        %v4664 = vunpack.c.l.b16 %v4596
        %v4665 = vunpack.c.l.b16 %v4597
        %v4666 = vunpack.c.l.b16 %v4598
        %v4667 = vunpack.c.l.b16 %v4599
        %v4668 = vunpack.c.l.b16 %v4600
        %v4669 = vunpack.c.l.b16 %v4601
        %v4670 = vunpack.c.l.b16 %v4602
        %v4671 = vunpack.c.l.b16 %v4603
        %v4672 = vunpack.c.l.b16 %v4604
        %v4673 = vunpack.c.l.b16 %v4605
        %v4674 = vunpack.c.l.b16 %v4606
        %v4675 = vpack.c.b16 %v4644, %v4643
        %v4676 = vpack.c.b16 %v4646, %v4645
        %v4677 = vpack.c.b16 %v4648, %v4647
        %v4678 = vpack.c.b16 %v4650, %v4649
        %v4679 = vpack.c.b16 %v4652, %v4651
        %v4680 = vpack.c.b16 %v4654, %v4653
        %v4681 = vpack.c.b16 %v4656, %v4655
        %v4682 = vpack.c.b16 %v4658, %v4657
        %v4683 = vpack.c.b16 %v4660, %v4659
        %v4684 = vpack.c.b16 %v4662, %v4661
        %v4685 = vpack.c.b16 %v4664, %v4663
        %v4686 = vpack.c.b16 %v4666, %v4665
        %v4687 = vpack.c.b16 %v4668, %v4667
        %v4688 = vpack.c.b16 %v4670, %v4669
        %v4689 = vpack.c.b16 %v4672, %v4671
        %v4690 = vpack.c.b16 %v4674, %v4673
        %4707 = vmatpush.bf16.msra.mxu0 %v4682
        %4708 = vmatpush.bf16.msra.mxu0 %v4681
        %4709 = vmatpush.bf16.msra.mxu0 %v4680
        %4710 = vmatpush.bf16.msra.mxu0 %v4679
        %4711 = vmatpush.bf16.msra.mxu0 %v4678
        %4712 = vmatpush.bf16.msra.mxu0 %v4677
        %4713 = vmatpush.bf16.msra.mxu0 %v4676
        %4714 = vmatpush.bf16.msra.mxu0 %v4675
        %4715 = vmatmul.bf16.gmra.mxu0 %v4559
        %v4716 = vpop.f32.mrf.mxu0
        %v4717 = vadd.f32 %v4609, %v4716
        %v4718 = vpop.f32.mrf.mxu0
        %v4719 = vadd.f32 %v4609, %v4718
        %4720 = vmatmul.bf16.gmra.mxu0 %v4561
        %v4721 = vpop.f32.mrf.mxu0
        %v4722 = vadd.f32 %v4609, %v4721
        %v4723 = vpop.f32.mrf.mxu0
        %v4724 = vadd.f32 %v4609, %v4723
        %4725 = vmatmul.bf16.gmra.mxu0 %v4563
        %v4726 = vpop.f32.mrf.mxu0
        %v4727 = vadd.f32 %v4609, %v4726
        %v4728 = vpop.f32.mrf.mxu0
        %v4729 = vadd.f32 %v4609, %v4728
        %4730 = vmatmul.bf16.gmra.mxu0 %v4565
        %v4731 = vpop.f32.mrf.mxu0
        %v4732 = vadd.f32 %v4609, %v4731
        %v4733 = vpop.f32.mrf.mxu0
        %v4734 = vadd.f32 %v4609, %v4733
        %4735 = vmatmul.bf16.gmra.mxu0 %v4567
        %v4736 = vpop.f32.mrf.mxu0
        %v4737 = vadd.f32 %v4609, %v4736
        %v4738 = vpop.f32.mrf.mxu0
        %v4739 = vadd.f32 %v4609, %v4738
        %4740 = vmatmul.bf16.gmra.mxu0 %v4569
        %v4741 = vpop.f32.mrf.mxu0
        %v4742 = vadd.f32 %v4609, %v4741
        %v4743 = vpop.f32.mrf.mxu0
        %v4744 = vadd.f32 %v4609, %v4743
        %4745 = vmatmul.bf16.gmra.mxu0 %v4571
        %v4746 = vpop.f32.mrf.mxu0
        %v4747 = vadd.f32 %v4609, %v4746
        %v4748 = vpop.f32.mrf.mxu0
        %v4749 = vadd.f32 %v4609, %v4748
        %4750 = vmatmul.bf16.gmra.mxu0 %v4573
        %v4751 = vpop.f32.mrf.mxu0
        %v4752 = vadd.f32 %v4609, %v4751
        %v4753 = vpop.f32.mrf.mxu0
        %v4754 = vadd.f32 %v4609, %v4753
        %4755 = vdwg.mxu0
        %4756 = vmatpush.bf16.msra.mxu0 %v4690
        %4757 = vmatpush.bf16.msra.mxu0 %v4689
        %4758 = vmatpush.bf16.msra.mxu0 %v4688
        %4759 = vmatpush.bf16.msra.mxu0 %v4687
        %4760 = vmatpush.bf16.msra.mxu0 %v4686
        %4761 = vmatpush.bf16.msra.mxu0 %v4685
        %4762 = vmatpush.bf16.msra.mxu0 %v4684
        %4763 = vmatpush.bf16.msra.mxu0 %v4683
        %4764 = vmatmul.bf16.gmra.mxu0 %v4560
        %v4765 = vpop.f32.mrf.mxu0
        %v4766 = vadd.f32 %v4717, %v4765
        %v4767 = vpop.f32.mrf.mxu0
        %v4768 = vadd.f32 %v4719, %v4767
        %4769 = vmatmul.bf16.gmra.mxu0 %v4562
        %v4770 = vpop.f32.mrf.mxu0
        %v4771 = vadd.f32 %v4722, %v4770
        %v4772 = vpop.f32.mrf.mxu0
        %v4773 = vadd.f32 %v4724, %v4772
        %4774 = vmatmul.bf16.gmra.mxu0 %v4564
        %v4775 = vpop.f32.mrf.mxu0
        %v4776 = vadd.f32 %v4727, %v4775
        %v4777 = vpop.f32.mrf.mxu0
        %v4778 = vadd.f32 %v4729, %v4777
        %4779 = vmatmul.bf16.gmra.mxu0 %v4566
        %v4780 = vpop.f32.mrf.mxu0
        %v4781 = vadd.f32 %v4732, %v4780
        %v4782 = vpop.f32.mrf.mxu0
        %v4783 = vadd.f32 %v4734, %v4782
        %4784 = vmatmul.bf16.gmra.mxu0 %v4568
        %v4785 = vpop.f32.mrf.mxu0
        %v4786 = vadd.f32 %v4737, %v4785
        %v4787 = vpop.f32.mrf.mxu0
        %v4788 = vadd.f32 %v4739, %v4787
        %4789 = vmatmul.bf16.gmra.mxu0 %v4570
        %v4790 = vpop.f32.mrf.mxu0
        %v4791 = vadd.f32 %v4742, %v4790
        %v4792 = vpop.f32.mrf.mxu0
        %v4793 = vadd.f32 %v4744, %v4792
        %4794 = vmatmul.bf16.gmra.mxu0 %v4572
        %v4795 = vpop.f32.mrf.mxu0
        %v4796 = vadd.f32 %v4747, %v4795
        %v4797 = vpop.f32.mrf.mxu0
        %v4798 = vadd.f32 %v4749, %v4797
        %4799 = vmatmul.bf16.gmra.mxu0 %v4574
        %v4800 = vpop.f32.mrf.mxu0
        %v4801 = vadd.f32 %v4752, %v4800
        %v4802 = vpop.f32.mrf.mxu0
        %v4803 = vadd.f32 %v4754, %v4802
        %4804 = vdwg.mxu0
        %v4805 = vpack.c.bf16 %v4768, %v4766
        %v4806 = vpack.c.bf16 %v4773, %v4771
        %v4807 = vpack.c.bf16 %v4778, %v4776
        %v4808 = vpack.c.bf16 %v4783, %v4781
        %v4809 = vpack.c.bf16 %v4788, %v4786
        %v4810 = vpack.c.bf16 %v4793, %v4791
        %v4811 = vpack.c.bf16 %v4798, %v4796
        %v4812 = vpack.c.bf16 %v4803, %v4801
        %v4813 = vld [vmem:[#allocation10] sm:$0xf]
        %v4814 = vld [vmem:[#allocation10 + $0x4] sm:$0xf]
        %v4815 = vld [vmem:[#allocation10 + $0x8] sm:$0xf]
        %v4816 = vld [vmem:[#allocation10 + $0xc] sm:$0xf]
        %v4817 = vld [vmem:[#allocation10 + $0x10] sm:$0xf]
        %v4818 = vld [vmem:[#allocation10 + $0x14] sm:$0xf]
        %v4819 = vld [vmem:[#allocation10 + $0x18] sm:$0xf]
        %v4820 = vld [vmem:[#allocation10 + $0x1c] sm:$0xf]
        %v4821 = vld [vmem:[#allocation10 + $0x20] sm:$0xf]
        %v4822 = vld [vmem:[#allocation10 + $0x24] sm:$0xf]
        %v4823 = vld [vmem:[#allocation10 + $0x28] sm:$0xf]
        %v4824 = vld [vmem:[#allocation10 + $0x2c] sm:$0xf]
        %v4825 = vld [vmem:[#allocation10 + $0x30] sm:$0xf]
        %v4826 = vld [vmem:[#allocation10 + $0x34] sm:$0xf]
        %v4827 = vld [vmem:[#allocation10 + $0x38] sm:$0xf]
        %v4828 = vld [vmem:[#allocation10 + $0x3c] sm:$0xf]
        %v4829 = vld [vmem:[%s8] sm:$0x1]
        %v4831 = vperm.slane %v4829, 0
        %v4849 = vunpack.c.l.b16 %v4813
        %v4850 = vunpack.c.l.b16 %v4814
        %v4851 = vunpack.c.l.b16 %v4815
        %v4852 = vunpack.c.l.b16 %v4816
        %v4853 = vunpack.c.l.b16 %v4817
        %v4854 = vunpack.c.l.b16 %v4818
        %v4855 = vunpack.c.l.b16 %v4819
        %v4856 = vunpack.c.l.b16 %v4820
        %v4857 = vunpack.c.l.b16 %v4821
        %v4858 = vunpack.c.l.b16 %v4822
        %v4859 = vunpack.c.l.b16 %v4823
        %v4860 = vunpack.c.l.b16 %v4824
        %v4861 = vunpack.c.l.b16 %v4825
        %v4862 = vunpack.c.l.b16 %v4826
        %v4863 = vunpack.c.l.b16 %v4827
        %v4864 = vunpack.c.l.b16 %v4828
        %v4865 = vpack.c.b16 %v4850, %v4849
        %v4866 = vpack.c.b16 %v4852, %v4851
        %v4867 = vpack.c.b16 %v4854, %v4853
        %v4868 = vpack.c.b16 %v4856, %v4855
        %v4869 = vpack.c.b16 %v4858, %v4857
        %v4870 = vpack.c.b16 %v4860, %v4859
        %v4871 = vpack.c.b16 %v4862, %v4861
        %v4872 = vpack.c.b16 %v4864, %v4863
        %4881 = vmatpush.bf16.msra.mxu0 %v4872
        %4882 = vmatpush.bf16.msra.mxu0 %v4871
        %4883 = vmatpush.bf16.msra.mxu0 %v4870
        %4884 = vmatpush.bf16.msra.mxu0 %v4869
        %4885 = vmatpush.bf16.msra.mxu0 %v4868
        %4886 = vmatpush.bf16.msra.mxu0 %v4867
        %4887 = vmatpush.bf16.msra.mxu0 %v4866
        %4888 = vmatpush.bf16.msra.mxu0 %v4865
        %4889 = vmatmul.bf16.gmra.mxu0 %v4805
        %v4890 = vpop.f32.mrf.mxu0
        %v4891 = vadd.f32 %v4831, %v4890
        %v4892 = vpop.f32.mrf.mxu0
        %v4893 = vadd.f32 %v4831, %v4892
        %4894 = vmatmul.bf16.gmra.mxu0 %v4806
        %v4895 = vpop.f32.mrf.mxu0
        %v4896 = vadd.f32 %v4831, %v4895
        %v4897 = vpop.f32.mrf.mxu0
        %v4898 = vadd.f32 %v4831, %v4897
        %4899 = vmatmul.bf16.gmra.mxu0 %v4807
        %v4900 = vpop.f32.mrf.mxu0
        %v4901 = vadd.f32 %v4831, %v4900
        %v4902 = vpop.f32.mrf.mxu0
        %v4903 = vadd.f32 %v4831, %v4902
        %4904 = vmatmul.bf16.gmra.mxu0 %v4808
        %v4905 = vpop.f32.mrf.mxu0
        %v4906 = vadd.f32 %v4831, %v4905
        %v4907 = vpop.f32.mrf.mxu0
        %v4908 = vadd.f32 %v4831, %v4907
        %4909 = vmatmul.bf16.gmra.mxu0 %v4809
        %v4910 = vpop.f32.mrf.mxu0
        %v4911 = vadd.f32 %v4831, %v4910
        %v4912 = vpop.f32.mrf.mxu0
        %v4913 = vadd.f32 %v4831, %v4912
        %4914 = vmatmul.bf16.gmra.mxu0 %v4810
        %v4915 = vpop.f32.mrf.mxu0
        %v4916 = vadd.f32 %v4831, %v4915
        %v4917 = vpop.f32.mrf.mxu0
        %v4918 = vadd.f32 %v4831, %v4917
        %4919 = vmatmul.bf16.gmra.mxu0 %v4811
        %v4920 = vpop.f32.mrf.mxu0
        %v4921 = vadd.f32 %v4831, %v4920
        %v4922 = vpop.f32.mrf.mxu0
        %v4923 = vadd.f32 %v4831, %v4922
        %4924 = vmatmul.bf16.gmra.mxu0 %v4812
        %v4925 = vpop.f32.mrf.mxu0
        %v4926 = vadd.f32 %v4831, %v4925
        %v4927 = vpop.f32.mrf.mxu0
        %v4928 = vadd.f32 %v4831, %v4927
        %4929 = vdwg.mxu0
        %4930 = vst [vmem:[%s437] sm:$0xff] %v4891
        %4931 = vst [vmem:[%s437 + $0x8] sm:$0xff] %v4893
        %4932 = vst [vmem:[%s437 + $0x10] sm:$0xff] %v4896
        %4933 = vst [vmem:[%s437 + $0x18] sm:$0xff] %v4898
        %4934 = vst [vmem:[%s437 + $0x20] sm:$0xff] %v4901
        %4935 = vst [vmem:[%s437 + $0x28] sm:$0xff] %v4903
        %4936 = vst [vmem:[%s437 + $0x30] sm:$0xff] %v4906
        %4937 = vst [vmem:[%s437 + $0x38] sm:$0xff] %v4908
        %4938 = vst [vmem:[%s437 + $0x40] sm:$0xff] %v4911
        %4939 = vst [vmem:[%s437 + $0x48] sm:$0xff] %v4913
        %4940 = vst [vmem:[%s437 + $0x50] sm:$0xff] %v4916
        %4941 = vst [vmem:[%s437 + $0x58] sm:$0xff] %v4918
        %4942 = vst [vmem:[%s437 + $0x60] sm:$0xff] %v4921
        %4943 = vst [vmem:[%s437 + $0x68] sm:$0xff] %v4923
        %4944 = vst [vmem:[%s437 + $0x70] sm:$0xff] %v4926
        %4945 = vst [vmem:[%s437 + $0x78] sm:$0xff] %v4928
        %s4946 = smul.u32 16, %s26
        %p4947 = scmp.lt.s32.totalorder %s4946, 31
        %s4948 = scalar_select %p4947, %s4946, 31
        %s4949 = smul.addr %s4948, 8
        %s4950 = scalar_lea.vmem %s9, %s4949
        // Predicated region
        $region81: #{simple_model_forward.1} parent=55 // pred_check
          %p4951 = pneg %p238
        $region82: #{simple_model_forward.1} parent=55 // pred_check_branch
          %4953 = sbr.rel (%p4951) target = $region84
        $region83: #{simple_model_forward.1} parent=55 // pred_region
          %s4954 = smul.u32 16, %s26
        $region84: #{simple_model_forward.1} parent=55 // pred_fallthru
          _
      $region56: #{simple_model_forward.1} parent=5 // pred_fallthru
        _
      %p4955 = scmp.le.s32.totalorder 2, %s21
      // Predicated region
      $region85: #{simple_model_forward.1} parent=5 // pred_check
        %p4956 = pneg %p4955
      $region86: #{simple_model_forward.1} parent=5 // pred_check_branch
        %4958 = sbr.rel (%p4956) target = $region88
      $region87: #{simple_model_forward.1} parent=5 // pred_region
        %s4959 = ssub.s32 %s21, 2
        // Predicated region
        $region89: #{simple_model_forward.1} parent=87 // pred_check
          %p4960 = pneg %p244
        $region90: #{simple_model_forward.1} parent=87 // pred_check_branch
          %4962 = sbr.rel (%p4960) target = $region92
        $region91: #{simple_model_forward.1} parent=87 // pred_region
          %s4963 = smul.u32 16, %s27
          %p4964 = scmp.lt.s32.totalorder %s4963, 31
          %s4965 = scalar_select %p4964, %s4963, 31
          %s4966 = smul.addr %s4965, 8
          %s4967 = scalar_lea.vmem %s9, %s4966
        $region92: #{simple_model_forward.1} parent=87 // pred_fallthru
          _
      $region88: #{simple_model_forward.1} parent=5 // pred_fallthru
        _
    $region6: #{simple_model_forward.1} parent=1 // loop_footer
      %s25 = sadd.s32 1, %s21
    $region7: #{simple_model_forward.1} parent=1 // loop_footer_branch
      %20 = sbr.rel target = $region3
    $region8: #{simple_model_forward.1} parent=1 // loop_exit
      _
    %4968 = vsyncpa [#allocation3], 1
    %s4969 = scalar_lea.sflag [#allocation3], 1
    %4970 = vsyncpa %s4969, 1
    %4971 = vsyncpa [#allocation5], 1
    %4972 = vsyncpa [#allocation8], 1
    %4973 = vsyncpa [#allocation11], 1

</llo_original>
